<compile_context>
chip_gen: v7x
topology: tpu7x:2x2x1
jax: 0.10.0
libtpu: 0.0.40
codegen_flags: <defaults>
</compile_context>

<pallas_src>
import functools

import jax
import jax.numpy as jnp
from jax.experimental import pallas as pl
from jax.experimental.pallas import tpu as pltpu

_BN_EPS = 1e-5
_VMEM_BUDGET_BYTES = 22 * 2**20   # conservative: fits under v7x's 32 MiB scoped default
_VMEM_LIMIT_BYTES = 32 * 2**20


def _rot_head_kernel(x_ref, w1_ref, w2_ref, s2_ref, w3_ref, s3_ref,
                     w4_ref, b4_ref, o_ref, acc_ref, *, tn, true_n, needs_mask):
    n = pl.program_id(1)

    @pl.when(n == 0)
    def _():
        # Activations entering the max are post-ReLU (>= 0), so 0 is an exact
        # identity element for the running max.
        acc_ref[...] = jnp.zeros_like(acc_ref)

    # x tile arrives in Conv1d NCW layout, already bf16, with a ones channel
    # appended so the folded BN1 shift is applied by the MXU.
    xt = x_ref[0]                                          # (f+1, TN) bf16

    # conv1 (1x1) + folded BN1 (scale in weights, shift via ones row) + ReLU.
    h = jax.lax.dot_general(
        xt, w1_ref[...],
        dimension_numbers=(((0,), (0,)), ((), ())),        # contract over channels
        preferred_element_type=jnp.float32)                # (TN, 1024)
    h = jnp.maximum(h, 0.0)

    # conv2 (1x1) + folded BN2 + ReLU -> (TN, 256)
    h = jnp.dot(h.astype(jnp.bfloat16), w2_ref[...],
                preferred_element_type=jnp.float32)
    h = jnp.maximum(h + s2_ref[...], 0.0)

    if needs_mask:
        # Padded points (global index >= true N) must not leak into the max.
        # Masking with 0 is exact because real activations are >= 0 post-ReLU.
        row = n * tn + jax.lax.broadcasted_iota(jnp.int32, (tn, 1), 0)
        h = jnp.where(row < true_n, h, 0.0)

    # torch.max(x, 2): keep (8, 256) per-sublane partial maxima via pure VPU
    # element-wise maxes; the cross-sublane reduce happens once in the epilogue.
    part = jnp.max(h.reshape(tn // 8, 8, h.shape[-1]), axis=0)
    acc_ref[...] = jnp.maximum(acc_ref[...], part)

    @pl.when(n == pl.num_programs(1) - 1)
    def _():
        pooled = jnp.max(acc_ref[...], axis=0, keepdims=True)        # (1, 256)
        # conv3 + folded BN3 + ReLU (M = 1, runs once per batch element).
        g = jnp.dot(pooled, w3_ref[...], preferred_element_type=jnp.float32)
        g = jnp.maximum(g + s3_ref[...], 0.0)
        # drop1: Dropout(0.2) -> identity at inference time.
        # TODO(synk): training-mode dropout (stochastic mask) not implemented.
        out = jnp.dot(g, w4_ref[...], preferred_element_type=jnp.float32)
        o_ref[...] = (out + b4_ref[...])[None].astype(o_ref.dtype)   # (1, 1, k)


def _vmem_bytes(tn, f_aug, c_hid, c_mid, k_out):
    """Rough per-tile working-set estimate (streamed x + intermediates + weights)."""
    stream = 2 * f_aug * tn * 2                            # double-buffered bf16 x tile
    inter = tn * c_hid * (4 + 2) + tn * c_mid * 4          # conv1 f32 + bf16 copy, conv2 f32
    weights = (f_aug * c_hid + c_hid * c_mid) * 2 \
        + (c_mid * c_mid + 2 * c_mid + c_mid * k_out + k_out) * 4
    return stream + inter + weights + 8 * c_mid * 4


def _choose_tiling(n_pts, target, f_aug, c_hid, c_mid, k_out):
    """Pick TN (multiple of 128, VMEM-capped) and the padded point extent."""
    n_up = -(-n_pts // 128) * 128
    tn = min(max(128, (target // 128) * 128), n_up)
    while tn > 128 and _vmem_bytes(tn, f_aug, c_hid, c_mid, k_out) > _VMEM_BUDGET_BYTES:
        tn -= 128
    # Prefer a tile that divides the 128-padded extent (minimises padded work),
    # but never drop below half the target tile (per-step overhead dominates).
    t = tn
    while t > 128 and n_up % t != 0:
        t -= 128
    if n_up % t == 0 and t >= max(128, tn // 2):
        tn = t
    n_pad = -(-n_pts // tn) * tn
    return tn, n_pad


def rot_head_forward(x_ncw, kp, *, tile_n=1024):
    """x_ncw: (B, f, N) float32/bf16, PyTorch Conv1d NCW layout. Returns (B, k)."""
    B, f, N = x_ncw.shape
    f_aug, c_hid = kp['w1'].shape                          # (f+1, 1024)
    c_mid = kp['w2'].shape[1]                              # 256
    k = kp['w4'].shape[1]
    assert f_aug == f + 1, "kp['w1'] must carry the folded BN1 shift as its last row"

    tn, n_pad = _choose_tiling(N, tile_n, f_aug, c_hid, c_mid, k)
    needs_mask = n_pad != N
    grid = (B, n_pad // tn)

    # Stream x in bf16 (halves HBM traffic), append the ones channel for the
    # folded BN1 shift, zero-pad N up to a tile multiple (masked in-kernel).
    xb = x_ncw.astype(jnp.bfloat16)
    xa = jnp.concatenate([xb, jnp.ones((B, 1, N), jnp.bfloat16)], axis=1)
    if needs_mask:
        xa = jnp.pad(xa, ((0, 0), (0, 0), (0, n_pad - N)))

    def resident(shape):                                   # DMA'd once, stays in VMEM
        return pl.BlockSpec(shape, lambda b, n: (0,) * len(shape))

    kernel = functools.partial(_rot_head_kernel, tn=tn, true_n=N,
                               needs_mask=needs_mask)

    out = pl.pallas_call(
        kernel,
        out_shape=jax.ShapeDtypeStruct((B, 1, k), jnp.float32),
        grid_spec=pltpu.PrefetchScalarGridSpec(
            num_scalar_prefetch=0,
            grid=grid,
            in_specs=[
                pl.BlockSpec((1, f_aug, tn), lambda b, n: (b, 0, n)),   # x streams
                resident(kp['w1'].shape), resident(kp['w2'].shape),
                resident(kp['s2'].shape), resident(kp['w3'].shape),
                resident(kp['s3'].shape), resident(kp['w4'].shape),
                resident(kp['b4'].shape),
            ],
            out_specs=pl.BlockSpec((1, 1, k), lambda b, n: (b, 0, 0)),
            scratch_shapes=[pltpu.VMEM((8, c_mid), jnp.float32)],       # sublane maxima
        ),
        # TODO(synk): for B < TensorCore count (v7x), add a parallel N-split
        # axis producing partial pooled maxima so both cores stay busy.
        compiler_params=pltpu.CompilerParams(
            dimension_semantics=("parallel", "arbitrary"),
            vmem_limit_bytes=_VMEM_LIMIT_BYTES),
    )(xa, kp['w1'], kp['w2'], kp['s2'], kp['w3'], kp['s3'], kp['w4'], kp['b4'])
    return out[:, 0, :]                                    # (B, k)


def make_params(key, in_feat_dim, out_dim):
    """Raw parameters matching RotHead.__init__ shapes.

    Conv1d(cin, cout, 1) weight (cout, cin, 1) is stored transposed as
    (cin, cout); BN gamma/beta plus eval-mode running stats per layer
    (fresh defaults mean=0, var=1 here, but fold_params handles any stats)."""
    dims = [(in_feat_dim, 1024), (1024, 256), (256, 256), (256, out_dim)]
    keys = jax.random.split(key, 4 * len(dims))
    p, ki = {}, 0
    for li, (cin, cout) in enumerate(dims, start=1):
        bound = 1.0 / (cin ** 0.5)
        p[f'w{li}'] = jax.random.uniform(keys[ki], (cin, cout), jnp.float32,
                                         minval=-bound, maxval=bound); ki += 1
        p[f'b{li}'] = jax.random.uniform(keys[ki], (cout,), jnp.float32,
                                         minval=-bound, maxval=bound); ki += 1
        if li < 4:
            p[f'gamma{li}'] = 1.0 + 0.1 * jax.random.normal(
                keys[ki], (cout,), jnp.float32); ki += 1
            p[f'beta{li}'] = 0.1 * jax.random.normal(
                keys[ki], (cout,), jnp.float32); ki += 1
            p[f'mean{li}'] = jnp.zeros((cout,), jnp.float32)
            p[f'var{li}'] = jnp.ones((cout,), jnp.float32)
    return p


def fold_params(p):
    """Fold eval-mode BatchNorm (general running_mean/var) into conv weights/bias.

    conv1's folded shift is stored as an extra weight row (picked up by the
    ones channel appended to x); conv1/conv2 weights are bf16 (f32 MXU acc)."""
    kp = {}
    for li in (1, 2, 3):
        scale = p[f'gamma{li}'] * jax.lax.rsqrt(p[f'var{li}'] + _BN_EPS)
        wf = p[f'w{li}'] * scale[None, :]
        sf = p[f'b{li}'] * scale + p[f'beta{li}'] - p[f'mean{li}'] * scale
        if li == 1:
            kp['w1'] = jnp.concatenate([wf, sf[None, :]], axis=0).astype(jnp.bfloat16)
        elif li == 2:
            kp['w2'] = wf.astype(jnp.bfloat16)
            kp['s2'] = sf[None, :].astype(jnp.float32)
        else:
            kp['w3'] = wf.astype(jnp.float32)
            kp['s3'] = sf[None, :].astype(jnp.float32)
    kp['w4'] = p['w4'].astype(jnp.float32)
    kp['b4'] = p['b4'][None, :].astype(jnp.float32)
    return kp


def rot_head_reference_f32(x_ncw, p):
    """Pure-JAX f32 reference following the PyTorch forward exactly."""
    x = jnp.transpose(x_ncw, (0, 2, 1)).astype(jnp.float32)           # (B, N, f)

    def bn(h, li):
        scale = p[f'gamma{li}'] * jax.lax.rsqrt(p[f'var{li}'] + _BN_EPS)
        return (h - p[f'mean{li}']) * scale + p[f'beta{li}']

    h = jax.nn.relu(bn(jnp.einsum('bnf,fh->bnh', x, p['w1']) + p['b1'], 1))
    h = jax.nn.relu(bn(jnp.einsum('bnh,hc->bnc', h, p['w2']) + p['b2'], 2))
    h = jnp.max(h, axis=1)                                             # (B, 256)
    h = jax.nn.relu(bn(h @ p['w3'] + p['b3'], 3))
    return h @ p['w4'] + p['b4']


def rot_head_reference_folded(x_ncw, kp):
    """Reference with the same folded/bf16 numerics the kernel uses."""
    B, f, N = x_ncw.shape
    xa = jnp.concatenate([x_ncw.astype(jnp.bfloat16),
                          jnp.ones((B, 1, N), jnp.bfloat16)], axis=1)
    xa = jnp.transpose(xa, (0, 2, 1))                                  # (B, N, f+1)
    h = jnp.einsum('bnf,fh->bnh', xa, kp['w1'],
                   preferred_element_type=jnp.float32)
    h = jnp.maximum(h, 0.0)
    h = jnp.einsum('bnh,hc->bnc', h.astype(jnp.bfloat16), kp['w2'],
                   preferred_element_type=jnp.float32)
    h = jnp.maximum(h + kp['s2'], 0.0)
    h = jnp.max(h, axis=1)                                             # (B, 256)
    h = jnp.maximum(h @ kp['w3'] + kp['s3'], 0.0)
    return h @ kp['w4'] + kp['b4']


if __name__ == "__main__":
    B, F_IN, K = 2, 32, 3
    key = jax.random.PRNGKey(0)
    kparam, kx1, kx2 = jax.random.split(key, 3)
    raw = make_params(kparam, F_IN, K)
    kp = fold_params(raw)

    # Case 1: N a multiple of 128 (no padding / masking path).
    N1 = 512
    x1 = jax.random.normal(kx1, (B, F_IN, N1), jnp.float32)   # PyTorch NCW input
    out1 = jax.block_until_ready(rot_head_forward(x1, kp))
    assert out1.shape == (B, K), out1.shape
    assert jnp.allclose(out1, rot_head_reference_folded(x1, kp), atol=2e-3, rtol=2e-3), \
        "N=512: mismatch vs bf16-matched reference"
    assert jnp.allclose(out1, rot_head_reference_f32(x1, raw), atol=5e-2, rtol=5e-2), \
        "N=512: mismatch vs f32 torch-semantics reference"

    # Case 2: ragged N (exercises wrapper padding + in-kernel point masking).
    N2 = 500
    x2 = jax.random.normal(kx2, (B, F_IN, N2), jnp.float32)
    out2 = jax.block_until_ready(rot_head_forward(x2, kp))
    assert out2.shape == (B, K), out2.shape
    assert jnp.allclose(out2, rot_head_reference_folded(x2, kp), atol=2e-3, rtol=2e-3), \
        "N=500: mismatch vs bf16-matched reference"
    assert jnp.allclose(out2, rot_head_reference_f32(x2, raw), atol=5e-2, rtol=5e-2), \
        "N=500: mismatch vs f32 torch-semantics reference"

    print("KERNEL_OK")
</pallas_src>

<mosaic_0001>
module attributes {stable_mosaic.version = 11 : i64} {
  func.func @_rot_head_kernel(%arg0: i32, %arg1: i32, %arg2: memref<1x33x512xbf16, #tpu.memory_space<vmem>>, %arg3: memref<33x1024xbf16, #tpu.memory_space<vmem>>, %arg4: memref<1024x256xbf16, #tpu.memory_space<vmem>>, %arg5: memref<1x256xf32, #tpu.memory_space<vmem>>, %arg6: memref<256x256xf32, #tpu.memory_space<vmem>>, %arg7: memref<1x256xf32, #tpu.memory_space<vmem>>, %arg8: memref<256x3xf32, #tpu.memory_space<vmem>>, %arg9: memref<1x3xf32, #tpu.memory_space<vmem>>, %arg10: memref<1x1x3xf32, #tpu.memory_space<vmem>>, %arg11: memref<8x256xf32, #tpu.memory_space<vmem>>) attributes {dimension_semantics = [#tpu.dimension_semantics<parallel>, #tpu.dimension_semantics<arbitrary>], iteration_bounds = array<i64: 2, 1>, scalar_prefetch = 0 : i64, scratch_operands = 1 : i64, tpu.core_type = #tpu.core_type<tc>, window_params = [{transform_indices = @transform_0, window_bounds = array<i64: 1, 33, 512>}, {pipeline_mode = #tpu.pipeline_mode<synchronous>, transform_indices = @transform_1, window_bounds = array<i64: 33, 1024>}, {pipeline_mode = #tpu.pipeline_mode<synchronous>, transform_indices = @transform_2, window_bounds = array<i64: 1024, 256>}, {pipeline_mode = #tpu.pipeline_mode<synchronous>, transform_indices = @transform_3, window_bounds = array<i64: 1, 256>}, {pipeline_mode = #tpu.pipeline_mode<synchronous>, transform_indices = @transform_4, window_bounds = array<i64: 256, 256>}, {pipeline_mode = #tpu.pipeline_mode<synchronous>, transform_indices = @transform_5, window_bounds = array<i64: 1, 256>}, {pipeline_mode = #tpu.pipeline_mode<synchronous>, transform_indices = @transform_6, window_bounds = array<i64: 256, 3>}, {pipeline_mode = #tpu.pipeline_mode<synchronous>, transform_indices = @transform_7, window_bounds = array<i64: 1, 3>}, {transform_indices = @transform_8, window_bounds = array<i64: 1, 1, 3>}]} {
    %c0_i32 = arith.constant 0 : i32
    %0 = arith.cmpi eq, %arg1, %c0_i32 : i32
    %1 = arith.extui %0 : i1 to i32
    %c0_i32_0 = arith.constant 0 : i32
    %2 = arith.cmpi ne, %1, %c0_i32_0 : i32
    scf.if %2 {
      %cst_19 = arith.constant 0.000000e+00 : f32
      %25 = vector.broadcast %cst_19 : f32 to vector<8x256xf32>
      %c0_20 = arith.constant 0 : index
      %c0_21 = arith.constant 0 : index
      %26 = vector.load %arg11[%c0_20, %c0_21] : memref<8x256xf32, #tpu.memory_space<vmem>>, vector<8x256xf32>
      tpu.vector_store %arg11[%c0_20, %c0_21], %25 {strides = array<i32>} : memref<8x256xf32, #tpu.memory_space<vmem>>, vector<8x256xf32>,
    } else {
    }
    %c0 = arith.constant 0 : index
    %c0_1 = arith.constant 0 : index
    %c0_2 = arith.constant 0 : index
    %3 = vector.load %arg2[%c0, %c0_1, %c0_2] : memref<1x33x512xbf16, #tpu.memory_space<vmem>>, vector<1x33x512xbf16>
    %4 = vector.shape_cast %3 : vector<1x33x512xbf16> to vector<33x512xbf16>
    %c0_3 = arith.constant 0 : index
    %c0_4 = arith.constant 0 : index
    %5 = vector.load %arg3[%c0_3, %c0_4] : memref<33x1024xbf16, #tpu.memory_space<vmem>>, vector<33x1024xbf16>
    %cst = arith.constant dense<0.000000e+00> : vector<512x1024xf32>
    %6 = tpu.matmul %4, %5, %cst {dimension_numbers = #tpu.dot_dimension_numbers<[0], [0], [1], [1], [0, 1, 1, 1], [], []>} : vector<33x512xbf16>, vector<33x1024xbf16>, vector<512x1024xf32> -> vector<512x1024xf32>
    %cst_5 = arith.constant 0.000000e+00 : f32
    %7 = vector.broadcast %cst_5 : f32 to vector<512x1024xf32>
    %8 = arith.maximumf %6, %7 : vector<512x1024xf32>
    %9 = arith.truncf %8 : vector<512x1024xf32> to vector<512x1024xbf16>
    %c0_6 = arith.constant 0 : index
    %c0_7 = arith.constant 0 : index
    %10 = vector.load %arg4[%c0_6, %c0_7] : memref<1024x256xbf16, #tpu.memory_space<vmem>>, vector<1024x256xbf16>
    %cst_8 = arith.constant dense<0.000000e+00> : vector<512x256xf32>
    %11 = tpu.matmul %9, %10, %cst_8 {dimension_numbers = #tpu.dot_dimension_numbers<[1], [0], [0], [1], [0, 0, 1, 1], [], []>} : vector<512x1024xbf16>, vector<1024x256xbf16>, vector<512x256xf32> -> vector<512x256xf32>
    %c0_9 = arith.constant 0 : index
    %c0_10 = arith.constant 0 : index
    %12 = vector.load %arg5[%c0_9, %c0_10] : memref<1x256xf32, #tpu.memory_space<vmem>>, vector<1x256xf32>
    %13 = vector.broadcast %12 : vector<1x256xf32> to vector<512x256xf32>
    %14 = arith.addf %11, %13 : vector<512x256xf32>
    %cst_11 = arith.constant 0.000000e+00 : f32
    %15 = vector.broadcast %cst_11 : f32 to vector<512x256xf32>
    %16 = arith.maximumf %14, %15 : vector<512x256xf32>
    %17 = vector.shape_cast %16 : vector<512x256xf32> to vector<64x8x256xf32>
    %cst_12 = arith.constant dense<0xFF800000> : vector<8x256xf32>
    %18 = vector.multi_reduction <maximumf>, %17, %cst_12 [0] : vector<64x8x256xf32> to vector<8x256xf32>
    %c0_13 = arith.constant 0 : index
    %c0_14 = arith.constant 0 : index
    %19 = vector.load %arg11[%c0_13, %c0_14] : memref<8x256xf32, #tpu.memory_space<vmem>>, vector<8x256xf32>
    %20 = arith.maximumf %19, %18 : vector<8x256xf32>
    %c0_15 = arith.constant 0 : index
    %c0_16 = arith.constant 0 : index
    %21 = vector.load %arg11[%c0_15, %c0_16] : memref<8x256xf32, #tpu.memory_space<vmem>>, vector<8x256xf32>
    tpu.vector_store %arg11[%c0_15, %c0_16], %20 {strides = array<i32>} : memref<8x256xf32, #tpu.memory_space<vmem>>, vector<8x256xf32>,
    %c0_i32_17 = arith.constant 0 : i32
    %22 = arith.cmpi eq, %arg1, %c0_i32_17 : i32
    %23 = arith.extui %22 : i1 to i32
    %c0_i32_18 = arith.constant 0 : i32
    %24 = arith.cmpi ne, %23, %c0_i32_18 : i32
    scf.if %24 {
      %c0_19 = arith.constant 0 : index
      %c0_20 = arith.constant 0 : index
      %25 = vector.load %arg11[%c0_19, %c0_20] : memref<8x256xf32, #tpu.memory_space<vmem>>, vector<8x256xf32>
      %cst_21 = arith.constant dense<0xFF800000> : vector<256xf32>
      %26 = vector.multi_reduction <maximumf>, %25, %cst_21 [0] : vector<8x256xf32> to vector<256xf32>
      %27 = vector.shape_cast %26 : vector<256xf32> to vector<1x256xf32>
      %c0_22 = arith.constant 0 : index
      %c0_23 = arith.constant 0 : index
      %28 = vector.load %arg6[%c0_22, %c0_23] : memref<256x256xf32, #tpu.memory_space<vmem>>, vector<256x256xf32>
      %cst_24 = arith.constant dense<0.000000e+00> : vector<1x256xf32>
      %29 = tpu.matmul %27, %28, %cst_24 {dimension_numbers = #tpu.dot_dimension_numbers<[1], [0], [0], [1], [0, 0, 1, 1], [], []>} : vector<1x256xf32>, vector<256x256xf32>, vector<1x256xf32> -> vector<1x256xf32>
      %c0_25 = arith.constant 0 : index
      %c0_26 = arith.constant 0 : index
      %30 = vector.load %arg7[%c0_25, %c0_26] : memref<1x256xf32, #tpu.memory_space<vmem>>, vector<1x256xf32>
      %31 = arith.addf %29, %30 : vector<1x256xf32>
      %cst_27 = arith.constant 0.000000e+00 : f32
      %32 = vector.broadcast %cst_27 : f32 to vector<1x256xf32>
      %33 = arith.maximumf %31, %32 : vector<1x256xf32>
      %c0_28 = arith.constant 0 : index
      %c0_29 = arith.constant 0 : index
      %34 = vector.load %arg8[%c0_28, %c0_29] : memref<256x3xf32, #tpu.memory_space<vmem>>, vector<256x3xf32>
      %cst_30 = arith.constant dense<0.000000e+00> : vector<1x3xf32>
      %35 = tpu.matmul %33, %34, %cst_30 {dimension_numbers = #tpu.dot_dimension_numbers<[1], [0], [0], [1], [0, 0, 1, 1], [], []>} : vector<1x256xf32>, vector<256x3xf32>, vector<1x3xf32> -> vector<1x3xf32>
      %c0_31 = arith.constant 0 : index
      %c0_32 = arith.constant 0 : index
      %36 = vector.load %arg9[%c0_31, %c0_32] : memref<1x3xf32, #tpu.memory_space<vmem>>, vector<1x3xf32>
      %37 = arith.addf %35, %36 : vector<1x3xf32>
      %38 = vector.shape_cast %37 : vector<1x3xf32> to vector<1x1x3xf32>
      %c0_33 = arith.constant 0 : index
      %c0_34 = arith.constant 0 : index
      %c0_35 = arith.constant 0 : index
      %39 = vector.load %arg10[%c0_33, %c0_34, %c0_35] : memref<1x1x3xf32, #tpu.memory_space<vmem>>, vector<1x1x3xf32>
      tpu.vector_store %arg10[%c0_33, %c0_34, %c0_35], %38 {strides = array<i32>} : memref<1x1x3xf32, #tpu.memory_space<vmem>>, vector<1x1x3xf32>,
    } else {
    }
    return
  }
  func.func @transform_0(%arg0: i32, %arg1: i32) -> (i32, i32, i32) {
    %c0_i32 = arith.constant 0 : i32
    %c0_i32_0 = arith.constant 0 : i32
    return %arg0, %c0_i32, %arg1 : i32, i32, i32
  }
  func.func @transform_1(%arg0: i32, %arg1: i32) -> (i32, i32) {
    %c0_i32 = arith.constant 0 : i32
    %c0_i32_0 = arith.constant 0 : i32
    %c0_i32_1 = arith.constant 0 : i32
    return %c0_i32, %c0_i32_0 : i32, i32
  }
  func.func @transform_2(%arg0: i32, %arg1: i32) -> (i32, i32) {
    %c0_i32 = arith.constant 0 : i32
    %c0_i32_0 = arith.constant 0 : i32
    %c0_i32_1 = arith.constant 0 : i32
    return %c0_i32, %c0_i32_0 : i32, i32
  }
  func.func @transform_3(%arg0: i32, %arg1: i32) -> (i32, i32) {
    %c0_i32 = arith.constant 0 : i32
    %c0_i32_0 = arith.constant 0 : i32
    %c0_i32_1 = arith.constant 0 : i32
    return %c0_i32, %c0_i32_0 : i32, i32
  }
  func.func @transform_4(%arg0: i32, %arg1: i32) -> (i32, i32) {
    %c0_i32 = arith.constant 0 : i32
    %c0_i32_0 = arith.constant 0 : i32
    %c0_i32_1 = arith.constant 0 : i32
    return %c0_i32, %c0_i32_0 : i32, i32
  }
  func.func @transform_5(%arg0: i32, %arg1: i32) -> (i32, i32) {
    %c0_i32 = arith.constant 0 : i32
    %c0_i32_0 = arith.constant 0 : i32
    %c0_i32_1 = arith.constant 0 : i32
    return %c0_i32, %c0_i32_0 : i32, i32
  }
  func.func @transform_6(%arg0: i32, %arg1: i32) -> (i32, i32) {
    %c0_i32 = arith.constant 0 : i32
    %c0_i32_0 = arith.constant 0 : i32
    %c0_i32_1 = arith.constant 0 : i32
    return %c0_i32, %c0_i32_0 : i32, i32
  }
  func.func @transform_7(%arg0: i32, %arg1: i32) -> (i32, i32) {
    %c0_i32 = arith.constant 0 : i32
    %c0_i32_0 = arith.constant 0 : i32
    %c0_i32_1 = arith.constant 0 : i32
    return %c0_i32, %c0_i32_0 : i32, i32
  }
  func.func @transform_8(%arg0: i32, %arg1: i32) -> (i32, i32, i32) {
    %c0_i32 = arith.constant 0 : i32
    %c0_i32_0 = arith.constant 0 : i32
    %c0_i32_1 = arith.constant 0 : i32
    return %arg0, %c0_i32, %c0_i32_0 : i32, i32, i32
  }
}

</mosaic_0001>

<llo_original>
// kernel: tpu_custom_call.1
$region0: #{tpu_custom_call.1}
  #allocation0 [shape = 'u32[]', space=smem, size = 0x4, offset = 0x4, fixed_abs, tag = 'smem constant byte address 0x4 - core index']
  #allocation1 [shape = 'u32[144,128]{1,0:T(1,128)}', space=vmem, size = 0x12000, scoped, tag = 'internal scratch']
  #allocation2 [shape = 'f32[8,256]{1,0:T(8,128)}', space=vmem, size = 0x2000, scoped, tag = 'scratch operand']
  %s0 = inlined_call_operand.vmem [shape: bf16[2,33,512], index: 0, kind: input, shape index: {}]
  %s1 = inlined_call_operand.hbm [shape: bf16[33,1024], index: 1, kind: input, shape index: {}]
  %s2 = inlined_call_operand.hbm [shape: bf16[1024,256], index: 2, kind: input, shape index: {}]
  %s3 = inlined_call_operand.vmem [shape: f32[1,256], index: 3, kind: input, shape index: {}]
  %s4 = inlined_call_operand.vmem [shape: f32[256,256], index: 4, kind: input, shape index: {}]
  %s5 = inlined_call_operand.vmem [shape: f32[1,256], index: 5, kind: input, shape index: {}]
  %s6 = inlined_call_operand.vmem [shape: f32[256,3], index: 6, kind: input, shape index: {}]
  %s7 = inlined_call_operand.vmem [shape: f32[1,3], index: 7, kind: input, shape index: {}]
  %s8 = inlined_call_operand.hbm [shape: f32[2,1,3], index: 8, kind: output, shape index: {}]
  %s9 = sld [smem:[#allocation0]]
  $region81: #{tpu_custom_call.1} parent=0
    _
  %s11 = ssub.s32 1, %s9
  %s12 = scalar_select 0, %s11, %s9
  $region1: #{tpu_custom_call.1} parent=0
    #allocation3 [shape = 'u8[81920]{0}', space=vmem, size = 0x14000, scoped, tag = 'input window, operand 1, single buffered']
    #allocation4 [shape = 's32[2]{0}', space=sflag, size = 0x8, scoped, tag = 'scoped memory for tpu_custom_call.1']
    #allocation5 [shape = 's32[2]{0}', space=sflag, size = 0x8, scoped, tag = 'scoped memory for tpu_custom_call.1']
    #allocation6 [shape = 'u8[524288]{0}', space=vmem, size = 0x80000, scoped, tag = 'input window, operand 2, single buffered']
    #allocation7 [shape = 's32[1]{0}', space=sflag, size = 0x4, scoped, tag = 'scoped memory for tpu_custom_call.1']
    #allocation8 [shape = 'u8[1024]{0}', space=vmem, size = 0x400, scoped, tag = 'output window, operand 0']
    %13 = vsyncpa [#allocation4], 0
    %14 = vsyncpa [#allocation7], 0
    %15 = vsyncpa [#allocation5], 0
    %s16 = scalar_lea.sflag [#allocation5], 1
    %17 = vsyncpa %s16, 0
    loop: start=0, step=1, limit=4
    $region2: #{tpu_custom_call.1} parent=1 // loop_pre_header
      _
    $region3: #{tpu_custom_call.1} parent=1 // loop_header
      %s19 = sphi 0, %s23
      %p20 = scmp.ge.s32.totalorder %s19, 4
      %s26 = sphi 0, %s38
      %s27 = sphi 0, %s34
      %s28 = sphi 0, %s26
      %s29 = sphi 0, %s27
      %s30 = sphi 0, %s28
      %s31 = sphi 0, %s29
      %s43 = sphi 0, %s45
      %s46 = sphi 0, %s43
      %s47 = sphi 0, %s46
      %s63 = sphi 0, %s47
      %s67 = sphi 0, %s67
      %s69 = sphi 0, %s67
      %s70 = sphi 0, %s69
      %s84 = sphi 0, %s70
      %s88 = sphi 0, %s88
      %s90 = sphi 0, %s88
      %s91 = sphi 0, %s90
      %s105 = sphi 0, %s91
      %s109 = sphi 0, %s109
      %s111 = sphi 0, %s109
      %s112 = sphi 0, %s111
      %s126 = sphi 0, %s112
      %s130 = sphi 0, %s130
      %s132 = sphi 0, %s130
      %s133 = sphi 0, %s132
      %s147 = sphi 0, %s133
      %s151 = sphi 0, %s151
      %s153 = sphi 0, %s151
      %s154 = sphi 0, %s153
      %s168 = sphi 0, %s154
      %s172 = sphi 0, %s172
      %s174 = sphi 0, %s172
      %s175 = sphi 0, %s174
      %s189 = sphi 0, %s175
      %s193 = sphi 0, %s193
      %s195 = sphi 0, %s193
      %s196 = sphi 0, %s195
      %s210 = sphi 0, %s196
      %s216 = sphi 0, %s218
      %s219 = sphi 0, %s216
      %s220 = sphi 0, %s219
      %s236 = sphi 0, %s220
    $region4: #{tpu_custom_call.1} parent=1 // loop_header_branch
      %22 = sbr.rel (%p20) target = $region8
    $region5: #{tpu_custom_call.1} parent=1 // loop_body
      %s24 = ssub.s32 %s19, 1
      %s25 = ssub.s32 %s19, 2
      %s32 = sadd.s32 1, %s27
      %p33 = scmp.ge.s32.totalorder %s32, 1
      %s34 = scalar_select %p33, 0, %s32
      %s35 = sadd.s32 1, %s26
      %s36 = scalar_select %p33, %s35, %s26
      %p37 = scmp.ge.s32.totalorder %s36, 2
      %s38 = scalar_select %p37, 0, %s36
      %s39 = ssub.s32 %s26, %s38
      %s40 = ssub.s32 %s27, %s34
      %s41 = sor.u32 %s39, %s40
      %p42 = scmp.eq.s32.totalorder %s41, 0
      %s44 = sadd.s32 %s43, 1
      %s45 = scalar_select %p42, %s43, %s44
      %p48 = pneg %p42
      %p49 = scmp.eq.s32.totalorder %s19, 1
      %p50 = por %p48, %p49
      %p51 = scmp.ne.s32.totalorder %s43, %s46
      %p52 = scmp.eq.s32.totalorder %s19, 0
      %p53 = por %p51, %p52
      %p54 = scmp.ne.s32.totalorder %s43, %s46
      %p55 = scmp.eq.s32.totalorder %s24, 1
      %p56 = por %p54, %p55
      %p57 = scmp.ne.s32.totalorder %s46, %s47
      %p58 = scmp.eq.s32.totalorder %s24, 0
      %p59 = por %p57, %p58
      %p60 = scmp.ne.s32.totalorder %s46, %s47
      %p61 = scmp.eq.s32.totalorder %s25, 1
      %p62 = por %p60, %p61
      %p64 = scmp.ne.s32.totalorder %s47, %s63
      %p65 = scmp.eq.s32.totalorder %s25, 0
      %p66 = por %p64, %p65
      %s68 = sadd.s32 %s67, 1
      %p71 = scmp.eq.s32.totalorder %s19, 1
      %p72 = scmp.ne.s32.totalorder %s67, %s69
      %p73 = scmp.eq.s32.totalorder %s19, 0
      %p74 = por %p72, %p73
      %p75 = scmp.ne.s32.totalorder %s67, %s69
      %p76 = scmp.eq.s32.totalorder %s24, 1
      %p77 = por %p75, %p76
      %p78 = scmp.ne.s32.totalorder %s69, %s70
      %p79 = scmp.eq.s32.totalorder %s24, 0
      %p80 = por %p78, %p79
      %p81 = scmp.ne.s32.totalorder %s69, %s70
      %p82 = scmp.eq.s32.totalorder %s25, 1
      %p83 = por %p81, %p82
      %p85 = scmp.ne.s32.totalorder %s70, %s84
      %p86 = scmp.eq.s32.totalorder %s25, 0
      %p87 = por %p85, %p86
      %s89 = sadd.s32 %s88, 1
      %p92 = scmp.eq.s32.totalorder %s19, 1
      %p93 = scmp.ne.s32.totalorder %s88, %s90
      %p94 = scmp.eq.s32.totalorder %s19, 0
      %p95 = por %p93, %p94
      %p96 = scmp.ne.s32.totalorder %s88, %s90
      %p97 = scmp.eq.s32.totalorder %s24, 1
      %p98 = por %p96, %p97
      %p99 = scmp.ne.s32.totalorder %s90, %s91
      %p100 = scmp.eq.s32.totalorder %s24, 0
      %p101 = por %p99, %p100
      %p102 = scmp.ne.s32.totalorder %s90, %s91
      %p103 = scmp.eq.s32.totalorder %s25, 1
      %p104 = por %p102, %p103
      %p106 = scmp.ne.s32.totalorder %s91, %s105
      %p107 = scmp.eq.s32.totalorder %s25, 0
      %p108 = por %p106, %p107
      %s110 = sadd.s32 %s109, 1
      %p113 = scmp.eq.s32.totalorder %s19, 1
      %p114 = scmp.ne.s32.totalorder %s109, %s111
      %p115 = scmp.eq.s32.totalorder %s19, 0
      %p116 = por %p114, %p115
      %p117 = scmp.ne.s32.totalorder %s109, %s111
      %p118 = scmp.eq.s32.totalorder %s24, 1
      %p119 = por %p117, %p118
      %p120 = scmp.ne.s32.totalorder %s111, %s112
      %p121 = scmp.eq.s32.totalorder %s24, 0
      %p122 = por %p120, %p121
      %p123 = scmp.ne.s32.totalorder %s111, %s112
      %p124 = scmp.eq.s32.totalorder %s25, 1
      %p125 = por %p123, %p124
      %p127 = scmp.ne.s32.totalorder %s112, %s126
      %p128 = scmp.eq.s32.totalorder %s25, 0
      %p129 = por %p127, %p128
      %s131 = sadd.s32 %s130, 1
      %p134 = scmp.eq.s32.totalorder %s19, 1
      %p135 = scmp.ne.s32.totalorder %s130, %s132
      %p136 = scmp.eq.s32.totalorder %s19, 0
      %p137 = por %p135, %p136
      %p138 = scmp.ne.s32.totalorder %s130, %s132
      %p139 = scmp.eq.s32.totalorder %s24, 1
      %p140 = por %p138, %p139
      %p141 = scmp.ne.s32.totalorder %s132, %s133
      %p142 = scmp.eq.s32.totalorder %s24, 0
      %p143 = por %p141, %p142
      %p144 = scmp.ne.s32.totalorder %s132, %s133
      %p145 = scmp.eq.s32.totalorder %s25, 1
      %p146 = por %p144, %p145
      %p148 = scmp.ne.s32.totalorder %s133, %s147
      %p149 = scmp.eq.s32.totalorder %s25, 0
      %p150 = por %p148, %p149
      %s152 = sadd.s32 %s151, 1
      %p155 = scmp.eq.s32.totalorder %s19, 1
      %p156 = scmp.ne.s32.totalorder %s151, %s153
      %p157 = scmp.eq.s32.totalorder %s19, 0
      %p158 = por %p156, %p157
      %p159 = scmp.ne.s32.totalorder %s151, %s153
      %p160 = scmp.eq.s32.totalorder %s24, 1
      %p161 = por %p159, %p160
      %p162 = scmp.ne.s32.totalorder %s153, %s154
      %p163 = scmp.eq.s32.totalorder %s24, 0
      %p164 = por %p162, %p163
      %p165 = scmp.ne.s32.totalorder %s153, %s154
      %p166 = scmp.eq.s32.totalorder %s25, 1
      %p167 = por %p165, %p166
      %p169 = scmp.ne.s32.totalorder %s154, %s168
      %p170 = scmp.eq.s32.totalorder %s25, 0
      %p171 = por %p169, %p170
      %s173 = sadd.s32 %s172, 1
      %p176 = scmp.eq.s32.totalorder %s19, 1
      %p177 = scmp.ne.s32.totalorder %s172, %s174
      %p178 = scmp.eq.s32.totalorder %s19, 0
      %p179 = por %p177, %p178
      %p180 = scmp.ne.s32.totalorder %s172, %s174
      %p181 = scmp.eq.s32.totalorder %s24, 1
      %p182 = por %p180, %p181
      %p183 = scmp.ne.s32.totalorder %s174, %s175
      %p184 = scmp.eq.s32.totalorder %s24, 0
      %p185 = por %p183, %p184
      %p186 = scmp.ne.s32.totalorder %s174, %s175
      %p187 = scmp.eq.s32.totalorder %s25, 1
      %p188 = por %p186, %p187
      %p190 = scmp.ne.s32.totalorder %s175, %s189
      %p191 = scmp.eq.s32.totalorder %s25, 0
      %p192 = por %p190, %p191
      %s194 = sadd.s32 %s193, 1
      %p197 = scmp.eq.s32.totalorder %s19, 1
      %p198 = scmp.ne.s32.totalorder %s193, %s195
      %p199 = scmp.eq.s32.totalorder %s19, 0
      %p200 = por %p198, %p199
      %p201 = scmp.ne.s32.totalorder %s193, %s195
      %p202 = scmp.eq.s32.totalorder %s24, 1
      %p203 = por %p201, %p202
      %p204 = scmp.ne.s32.totalorder %s195, %s196
      %p205 = scmp.eq.s32.totalorder %s24, 0
      %p206 = por %p204, %p205
      %p207 = scmp.ne.s32.totalorder %s195, %s196
      %p208 = scmp.eq.s32.totalorder %s25, 1
      %p209 = por %p207, %p208
      %p211 = scmp.ne.s32.totalorder %s196, %s210
      %p212 = scmp.eq.s32.totalorder %s25, 0
      %p213 = por %p211, %p212
      %s214 = ssub.s32 %s26, %s38
      %p215 = scmp.eq.s32.totalorder %s214, 0
      %s217 = sadd.s32 %s216, 1
      %s218 = scalar_select %p215, %s216, %s217
      %p221 = pneg %p215
      %p222 = scmp.eq.s32.totalorder %s19, 1
      %p223 = por %p221, %p222
      %p224 = scmp.ne.s32.totalorder %s216, %s219
      %p225 = scmp.eq.s32.totalorder %s19, 0
      %p226 = por %p224, %p225
      %p227 = scmp.ne.s32.totalorder %s216, %s219
      %p228 = scmp.eq.s32.totalorder %s24, 1
      %p229 = por %p227, %p228
      %p230 = scmp.ne.s32.totalorder %s219, %s220
      %p231 = scmp.eq.s32.totalorder %s24, 0
      %p232 = por %p230, %p231
      %p233 = scmp.ne.s32.totalorder %s219, %s220
      %p234 = scmp.eq.s32.totalorder %s25, 1
      %p235 = por %p233, %p234
      %p237 = scmp.ne.s32.totalorder %s220, %s236
      %p238 = scmp.eq.s32.totalorder %s25, 0
      %p239 = por %p237, %p238
      %p240 = scmp.le.s32.totalorder 1, %s19
      %p241 = scmp.lt.s32.totalorder %s19, 3
      %p242 = pnand %p240, %p241
      %p243 = pneg %p242
      // Predicated region
      $region9: #{tpu_custom_call.1} parent=5 // pred_check
        _
      $region10: #{tpu_custom_call.1} parent=5 // pred_check_branch
        %245 = sbr.rel (%p242) target = $region12
      $region11: #{tpu_custom_call.1} parent=5 // pred_region
        %s246 = ssub.s32 %s19, 1
        // Predicated region
        $region13: #{tpu_custom_call.1} parent=11 // pred_check
          %p247 = pneg %p80
        $region14: #{tpu_custom_call.1} parent=11 // pred_check_branch
          %249 = sbr.rel (%p247) target = $region16
        $region15: #{tpu_custom_call.1} parent=11 // pred_region
          %s251 = ssub.s32 2560, 2560
          %252 = vsyncadd [#allocation4], %s251
          %s253 = sshll.u32 [#allocation3], 4
          %s254 = int_to_ptr.vmem [resolvable:$true] %s253
          %259 = dma.hbm_to_vmem [thread:$0]  %s1, 2560, %s254, [#allocation4], 512, 512, 32
        $region16: #{tpu_custom_call.1} parent=11 // pred_fallthru
          _
        // Predicated region
        $region17: #{tpu_custom_call.1} parent=11 // pred_check
          %p260 = pneg %p101
        $region18: #{tpu_custom_call.1} parent=11 // pred_check_branch
          %262 = sbr.rel (%p260) target = $region20
        $region19: #{tpu_custom_call.1} parent=11 // pred_region
          %s264 = ssub.s32 16384, 16384
          %265 = vsyncadd [#allocation7], %s264
          %s266 = sshll.u32 [#allocation6], 4
          %s267 = int_to_ptr.vmem [resolvable:$true] %s266
          %272 = dma.hbm_to_vmem [thread:$0]  %s2, 16384, %s267, [#allocation7], 128, 128, 8
        $region20: #{tpu_custom_call.1} parent=11 // pred_fallthru
          _
        // Predicated region
        $region21: #{tpu_custom_call.1} parent=11 // pred_check
          %p273 = pneg %p122
        $region22: #{tpu_custom_call.1} parent=11 // pred_check_branch
          %275 = sbr.rel (%p273) target = $region24
        $region23: #{tpu_custom_call.1} parent=11 // pred_region
          _
        $region24: #{tpu_custom_call.1} parent=11 // pred_fallthru
          _
        // Predicated region
        $region25: #{tpu_custom_call.1} parent=11 // pred_check
          %p276 = pneg %p143
        $region26: #{tpu_custom_call.1} parent=11 // pred_check_branch
          %278 = sbr.rel (%p276) target = $region28
        $region27: #{tpu_custom_call.1} parent=11 // pred_region
          _
        $region28: #{tpu_custom_call.1} parent=11 // pred_fallthru
          _
        // Predicated region
        $region29: #{tpu_custom_call.1} parent=11 // pred_check
          %p279 = pneg %p164
        $region30: #{tpu_custom_call.1} parent=11 // pred_check_branch
          %281 = sbr.rel (%p279) target = $region32
        $region31: #{tpu_custom_call.1} parent=11 // pred_region
          _
        $region32: #{tpu_custom_call.1} parent=11 // pred_fallthru
          _
        // Predicated region
        $region33: #{tpu_custom_call.1} parent=11 // pred_check
          %p282 = pneg %p185
        $region34: #{tpu_custom_call.1} parent=11 // pred_check_branch
          %284 = sbr.rel (%p282) target = $region36
        $region35: #{tpu_custom_call.1} parent=11 // pred_region
          _
        $region36: #{tpu_custom_call.1} parent=11 // pred_fallthru
          _
        // Predicated region
        $region37: #{tpu_custom_call.1} parent=11 // pred_check
          %p285 = pneg %p206
        $region38: #{tpu_custom_call.1} parent=11 // pred_check_branch
          %287 = sbr.rel (%p285) target = $region40
        $region39: #{tpu_custom_call.1} parent=11 // pred_region
          _
        $region40: #{tpu_custom_call.1} parent=11 // pred_fallthru
          _
      $region12: #{tpu_custom_call.1} parent=5 // pred_fallthru
        _
      %p288 = scmp.lt.s32.totalorder %s19, 2
      // Predicated region
      $region41: #{tpu_custom_call.1} parent=5 // pred_check
        %p289 = pneg %p288
      $region42: #{tpu_custom_call.1} parent=5 // pred_check_branch
        %291 = sbr.rel (%p289) target = $region44
      $region43: #{tpu_custom_call.1} parent=5 // pred_region
        // Predicated region
        $region45: #{tpu_custom_call.1} parent=43 // pred_check
          %p292 = pneg %p53
        $region46: #{tpu_custom_call.1} parent=43 // pred_check_branch
          %294 = sbr.rel (%p292) target = $region48
        $region47: #{tpu_custom_call.1} parent=43 // pred_region
          %s295 = smul.u32 4, %s27
          %p296 = scmp.lt.s32.totalorder %s26, 1
          %s297 = scalar_select %p296, %s26, 1
          %p298 = scmp.lt.s32.totalorder %s295, 3
          %s299 = scalar_select %p298, %s295, 3
          %s300 = smul.addr %s297, 20
          %s301 = sadd.s32 %s299, %s300
          %s302 = smul.addr %s301, 4
          %s303 = scalar_lea.vmem %s0, %s302
          %s304 = smul.u32 4, %s27
        $region48: #{tpu_custom_call.1} parent=43 // pred_fallthru
          _
      $region44: #{tpu_custom_call.1} parent=5 // pred_fallthru
        _
      %p305 = scmp.le.s32.totalorder 1, %s19
      %p306 = scmp.lt.s32.totalorder %s19, 3
      %p307 = pnand %p305, %p306
      %p308 = pneg %p307
      // Predicated region
      $region49: #{tpu_custom_call.1} parent=5 // pred_check
        _
      $region50: #{tpu_custom_call.1} parent=5 // pred_check_branch
        %310 = sbr.rel (%p307) target = $region52
      $region51: #{tpu_custom_call.1} parent=5 // pred_region
        %s311 = ssub.s32 %s19, 1
        // Predicated region
        $region53: #{tpu_custom_call.1} parent=51 // pred_check
          %p312 = pneg %p80
        $region54: #{tpu_custom_call.1} parent=51 // pred_check_branch
          %314 = sbr.rel (%p312) target = $region56
        $region55: #{tpu_custom_call.1} parent=51 // pred_region
          %315 = dma.done [#allocation4], 2560
        $region56: #{tpu_custom_call.1} parent=51 // pred_fallthru
          _
        // Predicated region
        $region57: #{tpu_custom_call.1} parent=51 // pred_check
          %p316 = pneg %p101
        $region58: #{tpu_custom_call.1} parent=51 // pred_check_branch
          %318 = sbr.rel (%p316) target = $region60
        $region59: #{tpu_custom_call.1} parent=51 // pred_region
          %319 = dma.done [#allocation7], 16384
        $region60: #{tpu_custom_call.1} parent=51 // pred_fallthru
          _
        %s320 = smul.u32 4, %s29
        %p321 = scmp.lt.s32.totalorder %s28, 1
        %s322 = scalar_select %p321, %s28, 1
        %p323 = scmp.lt.s32.totalorder %s320, 3
        %s324 = scalar_select %p323, %s320, 3
        %s325 = smul.addr %s322, 20
        %s326 = sadd.s32 %s324, %s325
        %s327 = smul.addr %s326, 4
        %s328 = scalar_lea.vmem %s0, %s327
        %p329 = pneg %p59
        %p330 = pneg %p56
        %p331 = pneg %p80
        %p332 = pneg %p77
        %p333 = pneg %p101
        %p334 = pneg %p98
        %p335 = pneg %p122
        %p336 = pneg %p119
        %p337 = pneg %p143
        %p338 = pneg %p140
        %p339 = pneg %p164
        %p340 = pneg %p161
        %p341 = pneg %p185
        %p342 = pneg %p182
        %p343 = pneg %p206
        %p344 = pneg %p203
        %p345 = pneg %p232
        %p346 = pneg %p229
        %s347 = sand.u32 %s219, 1
        %s348 = scalar_lea.sflag [#allocation5], %s347
        %s349 = sand.u32 %s219, 1
        %s350 = scalar_lea.vmem [#allocation8], %s349
        %s351 = smul.u32 4, %s29
        %p352 = scmp.lt.s32.totalorder %s28, 1
        %s353 = scalar_select %p352, %s28, 1
        %p354 = scmp.lt.s32.totalorder %s351, 3
        %s355 = scalar_select %p354, %s351, 3
        %s356 = smul.addr %s353, 20
        %s357 = sadd.s32 %s355, %s356
        %s358 = smul.addr %s357, 4
        %s359 = scalar_lea.vmem %s0, %s358
        %s360 = smul.u32 4, %s29
        %p362 = scmp.eq.s32.totalorder %s29, 0
        // Predicated region
        $region61: #{tpu_custom_call.1} parent=51 // pred_check
          %p363 = pneg %p362
        $region62: #{tpu_custom_call.1} parent=51 // pred_check_branch
          %365 = sbr.rel (%p363) target = $region64
        $region63: #{tpu_custom_call.1} parent=51 // pred_region
          %366 = vst [vmem:[#allocation2] sm:$0xff] 0.0
          %367 = vst [vmem:[#allocation2 + $0x8] sm:$0xff] 0.0
        $region64: #{tpu_custom_call.1} parent=51 // pred_fallthru
          _
        %v368 = vld [vmem:[%s359] sm:$0xff]
        %v369 = vld [vmem:[%s359 + $0x8] sm:$0xff]
        %v370 = vld [vmem:[%s359 + $0x10] sm:$0xff]
        %v371 = vld [vmem:[%s359 + $0x18] sm:$0xff]
        %v372 = vld [vmem:[%s359 + $0x20] sm:$0xff]
        %v373 = vld [vmem:[%s359 + $0x28] sm:$0xff]
        %v374 = vld [vmem:[%s359 + $0x30] sm:$0xff]
        %v375 = vld [vmem:[%s359 + $0x38] sm:$0xff]
        %v376 = vld [vmem:[%s359 + $0x40] sm:$0x11]
        %v377 = vld [vmem:[%s359 + $0x48] sm:$0x11]
        %v378 = vld [vmem:[#allocation3] sm:$0xff]
        %v379 = vld [vmem:[#allocation3 + $0x8] sm:$0xff]
        %v380 = vld [vmem:[#allocation3 + $0x10] sm:$0xff]
        %v381 = vld [vmem:[#allocation3 + $0x18] sm:$0xff]
        %v382 = vld [vmem:[#allocation3 + $0x20] sm:$0xff]
        %v383 = vld [vmem:[#allocation3 + $0x28] sm:$0xff]
        %v384 = vld [vmem:[#allocation3 + $0x30] sm:$0xff]
        %v385 = vld [vmem:[#allocation3 + $0x38] sm:$0xff]
        %v386 = vld [vmem:[#allocation3 + $0x40] sm:$0xff]
        %v387 = vld [vmem:[#allocation3 + $0x48] sm:$0xff]
        %v388 = vld [vmem:[#allocation3 + $0x50] sm:$0xff]
        %v389 = vld [vmem:[#allocation3 + $0x58] sm:$0xff]
        %v390 = vld [vmem:[#allocation3 + $0x60] sm:$0xff]
        %v391 = vld [vmem:[#allocation3 + $0x68] sm:$0xff]
        %v392 = vld [vmem:[#allocation3 + $0x70] sm:$0xff]
        %v393 = vld [vmem:[#allocation3 + $0x78] sm:$0xff]
        %v394 = vld [vmem:[#allocation3 + $0x80] sm:$0x11]
        %v395 = vld [vmem:[#allocation3 + $0x88] sm:$0x11]
        %v396 = vld [vmem:[#allocation3 + $0x90] sm:$0x11]
        %v397 = vld [vmem:[#allocation3 + $0x98] sm:$0x11]
        %v408 = vunpack.c.l.b16 %v368
        %v409 = vunpack.c.h.b16 %v368
        %v410 = vunpack.c.l.b16 %v369
        %v411 = vunpack.c.h.b16 %v369
        %v412 = vunpack.c.l.b16 %v370
        %v413 = vunpack.c.h.b16 %v370
        %v414 = vunpack.c.l.b16 %v371
        %v415 = vunpack.c.h.b16 %v371
        %v416 = vunpack.c.l.b16 %v372
        %v417 = vunpack.c.h.b16 %v372
        %v418 = vunpack.c.l.b16 %v373
        %v419 = vunpack.c.h.b16 %v373
        %v420 = vunpack.c.l.b16 %v374
        %v421 = vunpack.c.h.b16 %v374
        %v422 = vunpack.c.l.b16 %v375
        %v423 = vunpack.c.h.b16 %v375
        %v424 = vunpack.c.l.b16 %v376
        %v425 = vunpack.c.h.b16 %v376
        %v426 = vunpack.c.l.b16 %v377
        %v427 = vunpack.c.h.b16 %v377
        %v428 = vpack.c.b16 %v412, %v408
        %v429 = vpack.c.b16 %v413, %v409
        %v430 = vpack.c.b16 %v414, %v410
        %v431 = vpack.c.b16 %v415, %v411
        %v432 = vpack.c.b16 %v420, %v416
        %v433 = vpack.c.b16 %v421, %v417
        %v434 = vpack.c.b16 %v422, %v418
        %v435 = vpack.c.b16 %v423, %v419
        %v436 = vpack.c.b16 %v424, %v424
        %v437 = vpack.c.b16 %v425, %v425
        %v438 = vpack.c.b16 %v426, %v426
        %v439 = vpack.c.b16 %v427, %v427
        %452 = vxpose.xlu0.c.b16.start [1/8] %v428, 128
        %453 = vxpose.xlu0.c.b16.cont [2/8] %v432, 128
        %454 = vxpose.xlu0.c.b16.cont [3/8] %v436, 128
        %455 = vxpose.xlu0.c.b16.cont [4/8] 0, 128
        %456 = vxpose.xlu0.c.b16.cont [5/8] 0, 128
        %457 = vxpose.xlu0.c.b16.cont [6/8] 0, 128
        %458 = vxpose.xlu0.c.b16.cont [7/8] 0, 128
        %459 = vxpose.xlu0.c.b16.end [8/8] 0, 128
        %v460 = vpop.trf.xlu0
        %v461 = vpop.trf.xlu0
        %v462 = vpop.trf.xlu0
        %v463 = vpop.trf.xlu0
        %v464 = vpop.trf.xlu0
        %v465 = vpop.trf.xlu0
        %v466 = vpop.trf.xlu0
        %v467 = vpop.trf.xlu0
        %468 = vxpose.xlu0.c.b16.start [1/8] %v429, 128
        %469 = vxpose.xlu0.c.b16.cont [2/8] %v433, 128
        %470 = vxpose.xlu0.c.b16.cont [3/8] %v437, 128
        %471 = vxpose.xlu0.c.b16.cont [4/8] 0, 128
        %472 = vxpose.xlu0.c.b16.cont [5/8] 0, 128
        %473 = vxpose.xlu0.c.b16.cont [6/8] 0, 128
        %474 = vxpose.xlu0.c.b16.cont [7/8] 0, 128
        %475 = vxpose.xlu0.c.b16.end [8/8] 0, 128
        %v476 = vpop.trf.xlu0
        %v477 = vpop.trf.xlu0
        %v478 = vpop.trf.xlu0
        %v479 = vpop.trf.xlu0
        %v480 = vpop.trf.xlu0
        %v481 = vpop.trf.xlu0
        %v482 = vpop.trf.xlu0
        %v483 = vpop.trf.xlu0
        %484 = vxpose.xlu0.c.b16.start [1/8] %v430, 128
        %485 = vxpose.xlu0.c.b16.cont [2/8] %v434, 128
        %486 = vxpose.xlu0.c.b16.cont [3/8] %v438, 128
        %487 = vxpose.xlu0.c.b16.cont [4/8] 0, 128
        %488 = vxpose.xlu0.c.b16.cont [5/8] 0, 128
        %489 = vxpose.xlu0.c.b16.cont [6/8] 0, 128
        %490 = vxpose.xlu0.c.b16.cont [7/8] 0, 128
        %491 = vxpose.xlu0.c.b16.end [8/8] 0, 128
        %v492 = vpop.trf.xlu0
        %v493 = vpop.trf.xlu0
        %v494 = vpop.trf.xlu0
        %v495 = vpop.trf.xlu0
        %v496 = vpop.trf.xlu0
        %v497 = vpop.trf.xlu0
        %v498 = vpop.trf.xlu0
        %v499 = vpop.trf.xlu0
        %500 = vxpose.xlu0.c.b16.start [1/8] %v431, 128
        %501 = vxpose.xlu0.c.b16.cont [2/8] %v435, 128
        %502 = vxpose.xlu0.c.b16.cont [3/8] %v439, 128
        %503 = vxpose.xlu0.c.b16.cont [4/8] 0, 128
        %504 = vxpose.xlu0.c.b16.cont [5/8] 0, 128
        %505 = vxpose.xlu0.c.b16.cont [6/8] 0, 128
        %506 = vxpose.xlu0.c.b16.cont [7/8] 0, 128
        %507 = vxpose.xlu0.c.b16.end [8/8] 0, 128
        %v508 = vpop.trf.xlu0
        %v509 = vpop.trf.xlu0
        %v510 = vpop.trf.xlu0
        %v511 = vpop.trf.xlu0
        %v512 = vpop.trf.xlu0
        %v513 = vpop.trf.xlu0
        %v514 = vpop.trf.xlu0
        %v515 = vpop.trf.xlu0
        %v536 = vunpack.c.l.b16 %v378
        %v537 = vunpack.c.h.b16 %v378
        %v538 = vunpack.c.l.b16 %v379
        %v539 = vunpack.c.h.b16 %v379
        %v540 = vunpack.c.l.b16 %v380
        %v541 = vunpack.c.h.b16 %v380
        %v542 = vunpack.c.l.b16 %v381
        %v543 = vunpack.c.h.b16 %v381
        %v544 = vunpack.c.l.b16 %v382
        %v545 = vunpack.c.h.b16 %v382
        %v546 = vunpack.c.l.b16 %v383
        %v547 = vunpack.c.h.b16 %v383
        %v548 = vunpack.c.l.b16 %v384
        %v549 = vunpack.c.h.b16 %v384
        %v550 = vunpack.c.l.b16 %v385
        %v551 = vunpack.c.h.b16 %v385
        %v552 = vunpack.c.l.b16 %v386
        %v553 = vunpack.c.h.b16 %v386
        %v554 = vunpack.c.l.b16 %v387
        %v555 = vunpack.c.h.b16 %v387
        %v556 = vunpack.c.l.b16 %v388
        %v557 = vunpack.c.h.b16 %v388
        %v558 = vunpack.c.l.b16 %v389
        %v559 = vunpack.c.h.b16 %v389
        %v560 = vunpack.c.l.b16 %v390
        %v561 = vunpack.c.h.b16 %v390
        %v562 = vunpack.c.l.b16 %v391
        %v563 = vunpack.c.h.b16 %v391
        %v564 = vunpack.c.l.b16 %v392
        %v565 = vunpack.c.h.b16 %v392
        %v566 = vunpack.c.l.b16 %v393
        %v567 = vunpack.c.h.b16 %v393
        %v568 = vunpack.c.l.b16 %v394
        %v569 = vunpack.c.h.b16 %v394
        %v570 = vunpack.c.l.b16 %v395
        %v571 = vunpack.c.h.b16 %v395
        %v572 = vunpack.c.l.b16 %v396
        %v573 = vunpack.c.h.b16 %v396
        %v574 = vunpack.c.l.b16 %v397
        %v575 = vunpack.c.h.b16 %v397
        %v576 = vpack.c.b16 %v544, %v536
        %v577 = vpack.c.b16 %v545, %v537
        %v578 = vpack.c.b16 %v546, %v538
        %v579 = vpack.c.b16 %v547, %v539
        %v580 = vpack.c.b16 %v548, %v540
        %v581 = vpack.c.b16 %v549, %v541
        %v582 = vpack.c.b16 %v550, %v542
        %v583 = vpack.c.b16 %v551, %v543
        %v584 = vpack.c.b16 %v560, %v552
        %v585 = vpack.c.b16 %v561, %v553
        %v586 = vpack.c.b16 %v562, %v554
        %v587 = vpack.c.b16 %v563, %v555
        %v588 = vpack.c.b16 %v564, %v556
        %v589 = vpack.c.b16 %v565, %v557
        %v590 = vpack.c.b16 %v566, %v558
        %v591 = vpack.c.b16 %v567, %v559
        %v592 = vpack.c.b16 %v568, %v568
        %v593 = vpack.c.b16 %v569, %v569
        %v594 = vpack.c.b16 %v570, %v570
        %v595 = vpack.c.b16 %v571, %v571
        %v596 = vpack.c.b16 %v572, %v572
        %v597 = vpack.c.b16 %v573, %v573
        %v598 = vpack.c.b16 %v574, %v574
        %v599 = vpack.c.b16 %v575, %v575
        %vm616 = vcmask 269312
        %v618 = vsel %vm616, %v460, 0
        %v621 = vsel %vm616, %v461, 0
        %v624 = vsel %vm616, %v462, 0
        %v627 = vsel %vm616, %v463, 0
        %v630 = vsel %vm616, %v464, 0
        %v633 = vsel %vm616, %v465, 0
        %v636 = vsel %vm616, %v466, 0
        %v639 = vsel %vm616, %v467, 0
        %v642 = vsel %vm616, %v476, 0
        %v645 = vsel %vm616, %v477, 0
        %v648 = vsel %vm616, %v478, 0
        %v651 = vsel %vm616, %v479, 0
        %v654 = vsel %vm616, %v480, 0
        %v657 = vsel %vm616, %v481, 0
        %v660 = vsel %vm616, %v482, 0
        %v663 = vsel %vm616, %v483, 0
        %v666 = vsel %vm616, %v492, 0
        %v669 = vsel %vm616, %v493, 0
        %v672 = vsel %vm616, %v494, 0
        %v675 = vsel %vm616, %v495, 0
        %v678 = vsel %vm616, %v496, 0
        %v681 = vsel %vm616, %v497, 0
        %v684 = vsel %vm616, %v498, 0
        %v687 = vsel %vm616, %v499, 0
        %v690 = vsel %vm616, %v508, 0
        %v693 = vsel %vm616, %v509, 0
        %v696 = vsel %vm616, %v510, 0
        %v699 = vsel %vm616, %v511, 0
        %v702 = vsel %vm616, %v512, 0
        %v705 = vsel %vm616, %v513, 0
        %v708 = vsel %vm616, %v514, 0
        %v711 = vsel %vm616, %v515, 0
        %vm713 = vcmask 1040384
        %v714 = vsel 0, 4294967295, 65535
        %v715 = vsel %vm713, %v714, 0
        %v717 = vand.u32 %v592, %v715
        %v720 = vand.u32 %v593, %v715
        %v723 = vand.u32 %v594, %v715
        %v726 = vand.u32 %v595, %v715
        %v729 = vand.u32 %v596, %v715
        %v732 = vand.u32 %v597, %v715
        %v735 = vand.u32 %v598, %v715
        %v738 = vand.u32 %v599, %v715
        %740 = vmatprep.subr.bf16.mxu0 %v577
        %741 = vmatpush1.bf16.msra.mxu0 %v576
        %742 = vmatprep.subr.bf16.mxu0 %v585
        %743 = vmatpush1.bf16.msra.mxu0 %v584
        %744 = vmatprep.subr.bf16.mxu0 %v720
        %745 = vmatpush1.bf16.msra.mxu0 %v717
        %746 = vmatprep.subr.bf16.mxu0 0
        %747 = vmatpush1.bf16.msra.mxu0 0
        %748 = vmatprep.subr.bf16.mxu0 0
        %749 = vmatpush1.bf16.msra.mxu0 0
        %750 = vmatprep.subr.bf16.mxu0 0
        %751 = vmatpush1.bf16.msra.mxu0 0
        %752 = vmatprep.subr.bf16.mxu0 0
        %753 = vmatpush1.bf16.msra.mxu0 0
        %754 = vmatprep.subr.bf16.mxu0 0
        %755 = vmatpush1.bf16.msra.mxu0 0
        %756 = vmatprep.subr.bf16.mxu0 0
        %757 = vmatpush1.bf16.msra.mxu0 0
        %758 = vmatprep.subr.bf16.mxu0 0
        %759 = vmatpush1.bf16.msra.mxu0 0
        %760 = vmatprep.subr.bf16.mxu0 0
        %761 = vmatpush1.bf16.msra.mxu0 0
        %762 = vmatprep.subr.bf16.mxu0 0
        %763 = vmatpush1.bf16.msra.mxu0 0
        %764 = vmatprep.subr.bf16.mxu0 0
        %765 = vmatpush1.bf16.msra.mxu0 0
        %766 = vmatprep.subr.bf16.mxu0 0
        %767 = vmatpush1.bf16.msra.mxu0 0
        %768 = vmatprep.subr.bf16.mxu0 0
        %769 = vmatpush1.bf16.msra.mxu0 0
        %770 = vmatprep.subr.bf16.mxu0 0
        %771 = vmatpush1.bf16.msra.mxu0 0
        %772 = vmatprep.mubr.bf16.mxu0 0
        %773 = vmatmul.mubr.bf16.gmra.mrb[0].mxu0 %v618
        %v774 = vpop.f32.mrb[0].mxu0
        %v775 = vadd.f32 0.0, %v774
        %v776 = vpop.f32.mrb[0].mxu0
        %v777 = vadd.f32 0.0, %v776
        %v778 = vpop.f32.mrb[0].mxu0
        %v779 = vadd.f32 0.0, %v778
        %v780 = vpop.f32.mrb[0].mxu0
        %v781 = vadd.f32 0.0, %v780
        %782 = vmatprep.mubr.bf16.mxu0 0
        %783 = vmatmul.mubr.bf16.gmra.mrb[0].mxu0 %v621
        %v784 = vpop.f32.mrb[0].mxu0
        %v785 = vadd.f32 0.0, %v784
        %v786 = vpop.f32.mrb[0].mxu0
        %v787 = vadd.f32 0.0, %v786
        %v788 = vpop.f32.mrb[0].mxu0
        %v789 = vadd.f32 0.0, %v788
        %v790 = vpop.f32.mrb[0].mxu0
        %v791 = vadd.f32 0.0, %v790
        %792 = vmatprep.mubr.bf16.mxu0 0
        %793 = vmatmul.mubr.bf16.gmra.mrb[0].mxu0 %v624
        %v794 = vpop.f32.mrb[0].mxu0
        %v795 = vadd.f32 0.0, %v794
        %v796 = vpop.f32.mrb[0].mxu0
        %v797 = vadd.f32 0.0, %v796
        %v798 = vpop.f32.mrb[0].mxu0
        %v799 = vadd.f32 0.0, %v798
        %v800 = vpop.f32.mrb[0].mxu0
        %v801 = vadd.f32 0.0, %v800
        %802 = vmatprep.mubr.bf16.mxu0 0
        %803 = vmatmul.mubr.bf16.gmra.mrb[0].mxu0 %v627
        %v804 = vpop.f32.mrb[0].mxu0
        %v805 = vadd.f32 0.0, %v804
        %v806 = vpop.f32.mrb[0].mxu0
        %v807 = vadd.f32 0.0, %v806
        %v808 = vpop.f32.mrb[0].mxu0
        %v809 = vadd.f32 0.0, %v808
        %v810 = vpop.f32.mrb[0].mxu0
        %v811 = vadd.f32 0.0, %v810
        %812 = vmatprep.mubr.bf16.mxu0 0
        %813 = vmatmul.mubr.bf16.gmra.mrb[0].mxu0 %v630
        %v814 = vpop.f32.mrb[0].mxu0
        %v815 = vadd.f32 0.0, %v814
        %v816 = vpop.f32.mrb[0].mxu0
        %v817 = vadd.f32 0.0, %v816
        %v818 = vpop.f32.mrb[0].mxu0
        %v819 = vadd.f32 0.0, %v818
        %v820 = vpop.f32.mrb[0].mxu0
        %v821 = vadd.f32 0.0, %v820
        %822 = vmatprep.mubr.bf16.mxu0 0
        %823 = vmatmul.mubr.bf16.gmra.mrb[0].mxu0 %v633
        %v824 = vpop.f32.mrb[0].mxu0
        %v825 = vadd.f32 0.0, %v824
        %v826 = vpop.f32.mrb[0].mxu0
        %v827 = vadd.f32 0.0, %v826
        %v828 = vpop.f32.mrb[0].mxu0
        %v829 = vadd.f32 0.0, %v828
        %v830 = vpop.f32.mrb[0].mxu0
        %v831 = vadd.f32 0.0, %v830
        %832 = vmatprep.mubr.bf16.mxu0 0
        %833 = vmatmul.mubr.bf16.gmra.mrb[0].mxu0 %v636
        %v834 = vpop.f32.mrb[0].mxu0
        %v835 = vadd.f32 0.0, %v834
        %v836 = vpop.f32.mrb[0].mxu0
        %v837 = vadd.f32 0.0, %v836
        %v838 = vpop.f32.mrb[0].mxu0
        %v839 = vadd.f32 0.0, %v838
        %v840 = vpop.f32.mrb[0].mxu0
        %v841 = vadd.f32 0.0, %v840
        %842 = vmatprep.mubr.bf16.mxu0 0
        %843 = vmatmul.mubr.bf16.gmra.mrb[0].mxu0 %v639
        %v844 = vpop.f32.mrb[0].mxu0
        %v845 = vadd.f32 0.0, %v844
        %v846 = vpop.f32.mrb[0].mxu0
        %v847 = vadd.f32 0.0, %v846
        %v848 = vpop.f32.mrb[0].mxu0
        %v849 = vadd.f32 0.0, %v848
        %v850 = vpop.f32.mrb[0].mxu0
        %v851 = vadd.f32 0.0, %v850
        %852 = vmatprep.mubr.bf16.mxu0 0
        %853 = vmatmul.mubr.bf16.gmra.mrb[0].mxu0 %v642
        %v854 = vpop.f32.mrb[0].mxu0
        %v855 = vadd.f32 0.0, %v854
        %v856 = vpop.f32.mrb[0].mxu0
        %v857 = vadd.f32 0.0, %v856
        %v858 = vpop.f32.mrb[0].mxu0
        %v859 = vadd.f32 0.0, %v858
        %v860 = vpop.f32.mrb[0].mxu0
        %v861 = vadd.f32 0.0, %v860
        %862 = vmatprep.mubr.bf16.mxu0 0
        %863 = vmatmul.mubr.bf16.gmra.mrb[0].mxu0 %v645
        %v864 = vpop.f32.mrb[0].mxu0
        %v865 = vadd.f32 0.0, %v864
        %v866 = vpop.f32.mrb[0].mxu0
        %v867 = vadd.f32 0.0, %v866
        %v868 = vpop.f32.mrb[0].mxu0
        %v869 = vadd.f32 0.0, %v868
        %v870 = vpop.f32.mrb[0].mxu0
        %v871 = vadd.f32 0.0, %v870
        %872 = vmatprep.mubr.bf16.mxu0 0
        %873 = vmatmul.mubr.bf16.gmra.mrb[0].mxu0 %v648
        %v874 = vpop.f32.mrb[0].mxu0
        %v875 = vadd.f32 0.0, %v874
        %v876 = vpop.f32.mrb[0].mxu0
        %v877 = vadd.f32 0.0, %v876
        %v878 = vpop.f32.mrb[0].mxu0
        %v879 = vadd.f32 0.0, %v878
        %v880 = vpop.f32.mrb[0].mxu0
        %v881 = vadd.f32 0.0, %v880
        %882 = vmatprep.mubr.bf16.mxu0 0
        %883 = vmatmul.mubr.bf16.gmra.mrb[0].mxu0 %v651
        %v884 = vpop.f32.mrb[0].mxu0
        %v885 = vadd.f32 0.0, %v884
        %v886 = vpop.f32.mrb[0].mxu0
        %v887 = vadd.f32 0.0, %v886
        %v888 = vpop.f32.mrb[0].mxu0
        %v889 = vadd.f32 0.0, %v888
        %v890 = vpop.f32.mrb[0].mxu0
        %v891 = vadd.f32 0.0, %v890
        %892 = vmatprep.mubr.bf16.mxu0 0
        %893 = vmatmul.mubr.bf16.gmra.mrb[0].mxu0 %v654
        %v894 = vpop.f32.mrb[0].mxu0
        %v895 = vadd.f32 0.0, %v894
        %v896 = vpop.f32.mrb[0].mxu0
        %v897 = vadd.f32 0.0, %v896
        %v898 = vpop.f32.mrb[0].mxu0
        %v899 = vadd.f32 0.0, %v898
        %v900 = vpop.f32.mrb[0].mxu0
        %v901 = vadd.f32 0.0, %v900
        %902 = vmatprep.mubr.bf16.mxu0 0
        %903 = vmatmul.mubr.bf16.gmra.mrb[0].mxu0 %v657
        %v904 = vpop.f32.mrb[0].mxu0
        %v905 = vadd.f32 0.0, %v904
        %v906 = vpop.f32.mrb[0].mxu0
        %v907 = vadd.f32 0.0, %v906
        %v908 = vpop.f32.mrb[0].mxu0
        %v909 = vadd.f32 0.0, %v908
        %v910 = vpop.f32.mrb[0].mxu0
        %v911 = vadd.f32 0.0, %v910
        %912 = vmatprep.mubr.bf16.mxu0 0
        %913 = vmatmul.mubr.bf16.gmra.mrb[0].mxu0 %v660
        %v914 = vpop.f32.mrb[0].mxu0
        %v915 = vadd.f32 0.0, %v914
        %v916 = vpop.f32.mrb[0].mxu0
        %v917 = vadd.f32 0.0, %v916
        %v918 = vpop.f32.mrb[0].mxu0
        %v919 = vadd.f32 0.0, %v918
        %v920 = vpop.f32.mrb[0].mxu0
        %v921 = vadd.f32 0.0, %v920
        %922 = vmatprep.mubr.bf16.mxu0 0
        %923 = vmatmul.mubr.bf16.gmra.mrb[0].mxu0 %v663
        %v924 = vpop.f32.mrb[0].mxu0
        %v925 = vadd.f32 0.0, %v924
        %v926 = vpop.f32.mrb[0].mxu0
        %v927 = vadd.f32 0.0, %v926
        %v928 = vpop.f32.mrb[0].mxu0
        %v929 = vadd.f32 0.0, %v928
        %v930 = vpop.f32.mrb[0].mxu0
        %v931 = vadd.f32 0.0, %v930
        %932 = vmatprep.mubr.bf16.mxu0 0
        %933 = vmatmul.mubr.bf16.gmra.mrb[0].mxu0 %v666
        %v934 = vpop.f32.mrb[0].mxu0
        %v935 = vadd.f32 0.0, %v934
        %v936 = vpop.f32.mrb[0].mxu0
        %v937 = vadd.f32 0.0, %v936
        %v938 = vpop.f32.mrb[0].mxu0
        %v939 = vadd.f32 0.0, %v938
        %v940 = vpop.f32.mrb[0].mxu0
        %v941 = vadd.f32 0.0, %v940
        %942 = vmatprep.mubr.bf16.mxu0 0
        %943 = vmatmul.mubr.bf16.gmra.mrb[0].mxu0 %v669
        %v944 = vpop.f32.mrb[0].mxu0
        %v945 = vadd.f32 0.0, %v944
        %v946 = vpop.f32.mrb[0].mxu0
        %v947 = vadd.f32 0.0, %v946
        %v948 = vpop.f32.mrb[0].mxu0
        %v949 = vadd.f32 0.0, %v948
        %v950 = vpop.f32.mrb[0].mxu0
        %v951 = vadd.f32 0.0, %v950
        %952 = vmatprep.mubr.bf16.mxu0 0
        %953 = vmatmul.mubr.bf16.gmra.mrb[0].mxu0 %v672
        %v954 = vpop.f32.mrb[0].mxu0
        %v955 = vadd.f32 0.0, %v954
        %v956 = vpop.f32.mrb[0].mxu0
        %v957 = vadd.f32 0.0, %v956
        %v958 = vpop.f32.mrb[0].mxu0
        %v959 = vadd.f32 0.0, %v958
        %v960 = vpop.f32.mrb[0].mxu0
        %v961 = vadd.f32 0.0, %v960
        %962 = vmatprep.mubr.bf16.mxu0 0
        %963 = vmatmul.mubr.bf16.gmra.mrb[0].mxu0 %v675
        %v964 = vpop.f32.mrb[0].mxu0
        %v965 = vadd.f32 0.0, %v964
        %v966 = vpop.f32.mrb[0].mxu0
        %v967 = vadd.f32 0.0, %v966
        %v968 = vpop.f32.mrb[0].mxu0
        %v969 = vadd.f32 0.0, %v968
        %v970 = vpop.f32.mrb[0].mxu0
        %v971 = vadd.f32 0.0, %v970
        %972 = vmatprep.mubr.bf16.mxu0 0
        %973 = vmatmul.mubr.bf16.gmra.mrb[0].mxu0 %v678
        %v974 = vpop.f32.mrb[0].mxu0
        %v975 = vadd.f32 0.0, %v974
        %v976 = vpop.f32.mrb[0].mxu0
        %v977 = vadd.f32 0.0, %v976
        %v978 = vpop.f32.mrb[0].mxu0
        %v979 = vadd.f32 0.0, %v978
        %v980 = vpop.f32.mrb[0].mxu0
        %v981 = vadd.f32 0.0, %v980
        %982 = vmatprep.mubr.bf16.mxu0 0
        %983 = vmatmul.mubr.bf16.gmra.mrb[0].mxu0 %v681
        %v984 = vpop.f32.mrb[0].mxu0
        %v985 = vadd.f32 0.0, %v984
        %v986 = vpop.f32.mrb[0].mxu0
        %v987 = vadd.f32 0.0, %v986
        %v988 = vpop.f32.mrb[0].mxu0
        %v989 = vadd.f32 0.0, %v988
        %v990 = vpop.f32.mrb[0].mxu0
        %v991 = vadd.f32 0.0, %v990
        %992 = vmatprep.mubr.bf16.mxu0 0
        %993 = vmatmul.mubr.bf16.gmra.mrb[0].mxu0 %v684
        %v994 = vpop.f32.mrb[0].mxu0
        %v995 = vadd.f32 0.0, %v994
        %v996 = vpop.f32.mrb[0].mxu0
        %v997 = vadd.f32 0.0, %v996
        %v998 = vpop.f32.mrb[0].mxu0
        %v999 = vadd.f32 0.0, %v998
        %v1000 = vpop.f32.mrb[0].mxu0
        %v1001 = vadd.f32 0.0, %v1000
        %1002 = vmatprep.mubr.bf16.mxu0 0
        %1003 = vmatmul.mubr.bf16.gmra.mrb[0].mxu0 %v687
        %v1004 = vpop.f32.mrb[0].mxu0
        %v1005 = vadd.f32 0.0, %v1004
        %v1006 = vpop.f32.mrb[0].mxu0
        %v1007 = vadd.f32 0.0, %v1006
        %v1008 = vpop.f32.mrb[0].mxu0
        %v1009 = vadd.f32 0.0, %v1008
        %v1010 = vpop.f32.mrb[0].mxu0
        %v1011 = vadd.f32 0.0, %v1010
        %1012 = vmatprep.mubr.bf16.mxu0 0
        %1013 = vmatmul.mubr.bf16.gmra.mrb[0].mxu0 %v690
        %v1014 = vpop.f32.mrb[0].mxu0
        %v1015 = vadd.f32 0.0, %v1014
        %v1016 = vpop.f32.mrb[0].mxu0
        %v1017 = vadd.f32 0.0, %v1016
        %v1018 = vpop.f32.mrb[0].mxu0
        %v1019 = vadd.f32 0.0, %v1018
        %v1020 = vpop.f32.mrb[0].mxu0
        %v1021 = vadd.f32 0.0, %v1020
        %1022 = vmatprep.mubr.bf16.mxu0 0
        %1023 = vmatmul.mubr.bf16.gmra.mrb[0].mxu0 %v693
        %v1024 = vpop.f32.mrb[0].mxu0
        %v1025 = vadd.f32 0.0, %v1024
        %v1026 = vpop.f32.mrb[0].mxu0
        %v1027 = vadd.f32 0.0, %v1026
        %v1028 = vpop.f32.mrb[0].mxu0
        %v1029 = vadd.f32 0.0, %v1028
        %v1030 = vpop.f32.mrb[0].mxu0
        %v1031 = vadd.f32 0.0, %v1030
        %1032 = vmatprep.mubr.bf16.mxu0 0
        %1033 = vmatmul.mubr.bf16.gmra.mrb[0].mxu0 %v696
        %v1034 = vpop.f32.mrb[0].mxu0
        %v1035 = vadd.f32 0.0, %v1034
        %v1036 = vpop.f32.mrb[0].mxu0
        %v1037 = vadd.f32 0.0, %v1036
        %v1038 = vpop.f32.mrb[0].mxu0
        %v1039 = vadd.f32 0.0, %v1038
        %v1040 = vpop.f32.mrb[0].mxu0
        %v1041 = vadd.f32 0.0, %v1040
        %1042 = vmatprep.mubr.bf16.mxu0 0
        %1043 = vmatmul.mubr.bf16.gmra.mrb[0].mxu0 %v699
        %v1044 = vpop.f32.mrb[0].mxu0
        %v1045 = vadd.f32 0.0, %v1044
        %v1046 = vpop.f32.mrb[0].mxu0
        %v1047 = vadd.f32 0.0, %v1046
        %v1048 = vpop.f32.mrb[0].mxu0
        %v1049 = vadd.f32 0.0, %v1048
        %v1050 = vpop.f32.mrb[0].mxu0
        %v1051 = vadd.f32 0.0, %v1050
        %1052 = vmatprep.mubr.bf16.mxu0 0
        %1053 = vmatmul.mubr.bf16.gmra.mrb[0].mxu0 %v702
        %v1054 = vpop.f32.mrb[0].mxu0
        %v1055 = vadd.f32 0.0, %v1054
        %v1056 = vpop.f32.mrb[0].mxu0
        %v1057 = vadd.f32 0.0, %v1056
        %v1058 = vpop.f32.mrb[0].mxu0
        %v1059 = vadd.f32 0.0, %v1058
        %v1060 = vpop.f32.mrb[0].mxu0
        %v1061 = vadd.f32 0.0, %v1060
        %1062 = vmatprep.mubr.bf16.mxu0 0
        %1063 = vmatmul.mubr.bf16.gmra.mrb[0].mxu0 %v705
        %v1064 = vpop.f32.mrb[0].mxu0
        %v1065 = vadd.f32 0.0, %v1064
        %v1066 = vpop.f32.mrb[0].mxu0
        %v1067 = vadd.f32 0.0, %v1066
        %v1068 = vpop.f32.mrb[0].mxu0
        %v1069 = vadd.f32 0.0, %v1068
        %v1070 = vpop.f32.mrb[0].mxu0
        %v1071 = vadd.f32 0.0, %v1070
        %1072 = vmatprep.mubr.bf16.mxu0 0
        %1073 = vmatmul.mubr.bf16.gmra.mrb[0].mxu0 %v708
        %v1074 = vpop.f32.mrb[0].mxu0
        %v1075 = vadd.f32 0.0, %v1074
        %v1076 = vpop.f32.mrb[0].mxu0
        %v1077 = vadd.f32 0.0, %v1076
        %v1078 = vpop.f32.mrb[0].mxu0
        %v1079 = vadd.f32 0.0, %v1078
        %v1080 = vpop.f32.mrb[0].mxu0
        %v1081 = vadd.f32 0.0, %v1080
        %1082 = vmatprep.mubr.bf16.mxu0 0
        %1083 = vmatmul.mubr.bf16.gmra.mrb[0].mxu0 %v711
        %v1084 = vpop.f32.mrb[0].mxu0
        %v1085 = vadd.f32 0.0, %v1084
        %v1086 = vpop.f32.mrb[0].mxu0
        %v1087 = vadd.f32 0.0, %v1086
        %v1088 = vpop.f32.mrb[0].mxu0
        %v1089 = vadd.f32 0.0, %v1088
        %v1090 = vpop.f32.mrb[0].mxu0
        %v1091 = vadd.f32 0.0, %v1090
        %1092 = vdwg.mxu0
        %1093 = vmatprep.subr.bf16.mxu0 %v579
        %1094 = vmatpush1.bf16.msra.mxu0 %v578
        %1095 = vmatprep.subr.bf16.mxu0 %v587
        %1096 = vmatpush1.bf16.msra.mxu0 %v586
        %1097 = vmatprep.subr.bf16.mxu0 %v726
        %1098 = vmatpush1.bf16.msra.mxu0 %v723
        %1099 = vmatprep.subr.bf16.mxu0 0
        %1100 = vmatpush1.bf16.msra.mxu0 0
        %1101 = vmatprep.subr.bf16.mxu0 0
        %1102 = vmatpush1.bf16.msra.mxu0 0
        %1103 = vmatprep.subr.bf16.mxu0 0
        %1104 = vmatpush1.bf16.msra.mxu0 0
        %1105 = vmatprep.subr.bf16.mxu0 0
        %1106 = vmatpush1.bf16.msra.mxu0 0
        %1107 = vmatprep.subr.bf16.mxu0 0
        %1108 = vmatpush1.bf16.msra.mxu0 0
        %1109 = vmatprep.subr.bf16.mxu0 0
        %1110 = vmatpush1.bf16.msra.mxu0 0
        %1111 = vmatprep.subr.bf16.mxu0 0
        %1112 = vmatpush1.bf16.msra.mxu0 0
        %1113 = vmatprep.subr.bf16.mxu0 0
        %1114 = vmatpush1.bf16.msra.mxu0 0
        %1115 = vmatprep.subr.bf16.mxu0 0
        %1116 = vmatpush1.bf16.msra.mxu0 0
        %1117 = vmatprep.subr.bf16.mxu0 0
        %1118 = vmatpush1.bf16.msra.mxu0 0
        %1119 = vmatprep.subr.bf16.mxu0 0
        %1120 = vmatpush1.bf16.msra.mxu0 0
        %1121 = vmatprep.subr.bf16.mxu0 0
        %1122 = vmatpush1.bf16.msra.mxu0 0
        %1123 = vmatprep.subr.bf16.mxu0 0
        %1124 = vmatpush1.bf16.msra.mxu0 0
        %1125 = vmatprep.mubr.bf16.mxu0 0
        %1126 = vmatmul.mubr.bf16.gmra.mrb[0].mxu0 %v618
        %v1127 = vpop.f32.mrb[0].mxu0
        %v1128 = vadd.f32 0.0, %v1127
        %v1129 = vpop.f32.mrb[0].mxu0
        %v1130 = vadd.f32 0.0, %v1129
        %v1131 = vpop.f32.mrb[0].mxu0
        %v1132 = vadd.f32 0.0, %v1131
        %v1133 = vpop.f32.mrb[0].mxu0
        %v1134 = vadd.f32 0.0, %v1133
        %1135 = vmatprep.mubr.bf16.mxu0 0
        %1136 = vmatmul.mubr.bf16.gmra.mrb[0].mxu0 %v621
        %v1137 = vpop.f32.mrb[0].mxu0
        %v1138 = vadd.f32 0.0, %v1137
        %v1139 = vpop.f32.mrb[0].mxu0
        %v1140 = vadd.f32 0.0, %v1139
        %v1141 = vpop.f32.mrb[0].mxu0
        %v1142 = vadd.f32 0.0, %v1141
        %v1143 = vpop.f32.mrb[0].mxu0
        %v1144 = vadd.f32 0.0, %v1143
        %1145 = vmatprep.mubr.bf16.mxu0 0
        %1146 = vmatmul.mubr.bf16.gmra.mrb[0].mxu0 %v624
        %v1147 = vpop.f32.mrb[0].mxu0
        %v1148 = vadd.f32 0.0, %v1147
        %v1149 = vpop.f32.mrb[0].mxu0
        %v1150 = vadd.f32 0.0, %v1149
        %v1151 = vpop.f32.mrb[0].mxu0
        %v1152 = vadd.f32 0.0, %v1151
        %v1153 = vpop.f32.mrb[0].mxu0
        %v1154 = vadd.f32 0.0, %v1153
        %1155 = vmatprep.mubr.bf16.mxu0 0
        %1156 = vmatmul.mubr.bf16.gmra.mrb[0].mxu0 %v627
        %v1157 = vpop.f32.mrb[0].mxu0
        %v1158 = vadd.f32 0.0, %v1157
        %v1159 = vpop.f32.mrb[0].mxu0
        %v1160 = vadd.f32 0.0, %v1159
        %v1161 = vpop.f32.mrb[0].mxu0
        %v1162 = vadd.f32 0.0, %v1161
        %v1163 = vpop.f32.mrb[0].mxu0
        %v1164 = vadd.f32 0.0, %v1163
        %1165 = vmatprep.mubr.bf16.mxu0 0
        %1166 = vmatmul.mubr.bf16.gmra.mrb[0].mxu0 %v630
        %v1167 = vpop.f32.mrb[0].mxu0
        %v1168 = vadd.f32 0.0, %v1167
        %v1169 = vpop.f32.mrb[0].mxu0
        %v1170 = vadd.f32 0.0, %v1169
        %v1171 = vpop.f32.mrb[0].mxu0
        %v1172 = vadd.f32 0.0, %v1171
        %v1173 = vpop.f32.mrb[0].mxu0
        %v1174 = vadd.f32 0.0, %v1173
        %1175 = vmatprep.mubr.bf16.mxu0 0
        %1176 = vmatmul.mubr.bf16.gmra.mrb[0].mxu0 %v633
        %v1177 = vpop.f32.mrb[0].mxu0
        %v1178 = vadd.f32 0.0, %v1177
        %v1179 = vpop.f32.mrb[0].mxu0
        %v1180 = vadd.f32 0.0, %v1179
        %v1181 = vpop.f32.mrb[0].mxu0
        %v1182 = vadd.f32 0.0, %v1181
        %v1183 = vpop.f32.mrb[0].mxu0
        %v1184 = vadd.f32 0.0, %v1183
        %1185 = vmatprep.mubr.bf16.mxu0 0
        %1186 = vmatmul.mubr.bf16.gmra.mrb[0].mxu0 %v636
        %v1187 = vpop.f32.mrb[0].mxu0
        %v1188 = vadd.f32 0.0, %v1187
        %v1189 = vpop.f32.mrb[0].mxu0
        %v1190 = vadd.f32 0.0, %v1189
        %v1191 = vpop.f32.mrb[0].mxu0
        %v1192 = vadd.f32 0.0, %v1191
        %v1193 = vpop.f32.mrb[0].mxu0
        %v1194 = vadd.f32 0.0, %v1193
        %1195 = vmatprep.mubr.bf16.mxu0 0
        %1196 = vmatmul.mubr.bf16.gmra.mrb[0].mxu0 %v639
        %v1197 = vpop.f32.mrb[0].mxu0
        %v1198 = vadd.f32 0.0, %v1197
        %v1199 = vpop.f32.mrb[0].mxu0
        %v1200 = vadd.f32 0.0, %v1199
        %v1201 = vpop.f32.mrb[0].mxu0
        %v1202 = vadd.f32 0.0, %v1201
        %v1203 = vpop.f32.mrb[0].mxu0
        %v1204 = vadd.f32 0.0, %v1203
        %1205 = vmatprep.mubr.bf16.mxu0 0
        %1206 = vmatmul.mubr.bf16.gmra.mrb[0].mxu0 %v642
        %v1207 = vpop.f32.mrb[0].mxu0
        %v1208 = vadd.f32 0.0, %v1207
        %v1209 = vpop.f32.mrb[0].mxu0
        %v1210 = vadd.f32 0.0, %v1209
        %v1211 = vpop.f32.mrb[0].mxu0
        %v1212 = vadd.f32 0.0, %v1211
        %v1213 = vpop.f32.mrb[0].mxu0
        %v1214 = vadd.f32 0.0, %v1213
        %1215 = vmatprep.mubr.bf16.mxu0 0
        %1216 = vmatmul.mubr.bf16.gmra.mrb[0].mxu0 %v645
        %v1217 = vpop.f32.mrb[0].mxu0
        %v1218 = vadd.f32 0.0, %v1217
        %v1219 = vpop.f32.mrb[0].mxu0
        %v1220 = vadd.f32 0.0, %v1219
        %v1221 = vpop.f32.mrb[0].mxu0
        %v1222 = vadd.f32 0.0, %v1221
        %v1223 = vpop.f32.mrb[0].mxu0
        %v1224 = vadd.f32 0.0, %v1223
        %1225 = vmatprep.mubr.bf16.mxu0 0
        %1226 = vmatmul.mubr.bf16.gmra.mrb[0].mxu0 %v648
        %v1227 = vpop.f32.mrb[0].mxu0
        %v1228 = vadd.f32 0.0, %v1227
        %v1229 = vpop.f32.mrb[0].mxu0
        %v1230 = vadd.f32 0.0, %v1229
        %v1231 = vpop.f32.mrb[0].mxu0
        %v1232 = vadd.f32 0.0, %v1231
        %v1233 = vpop.f32.mrb[0].mxu0
        %v1234 = vadd.f32 0.0, %v1233
        %1235 = vmatprep.mubr.bf16.mxu0 0
        %1236 = vmatmul.mubr.bf16.gmra.mrb[0].mxu0 %v651
        %v1237 = vpop.f32.mrb[0].mxu0
        %v1238 = vadd.f32 0.0, %v1237
        %v1239 = vpop.f32.mrb[0].mxu0
        %v1240 = vadd.f32 0.0, %v1239
        %v1241 = vpop.f32.mrb[0].mxu0
        %v1242 = vadd.f32 0.0, %v1241
        %v1243 = vpop.f32.mrb[0].mxu0
        %v1244 = vadd.f32 0.0, %v1243
        %1245 = vmatprep.mubr.bf16.mxu0 0
        %1246 = vmatmul.mubr.bf16.gmra.mrb[0].mxu0 %v654
        %v1247 = vpop.f32.mrb[0].mxu0
        %v1248 = vadd.f32 0.0, %v1247
        %v1249 = vpop.f32.mrb[0].mxu0
        %v1250 = vadd.f32 0.0, %v1249
        %v1251 = vpop.f32.mrb[0].mxu0
        %v1252 = vadd.f32 0.0, %v1251
        %v1253 = vpop.f32.mrb[0].mxu0
        %v1254 = vadd.f32 0.0, %v1253
        %1255 = vmatprep.mubr.bf16.mxu0 0
        %1256 = vmatmul.mubr.bf16.gmra.mrb[0].mxu0 %v657
        %v1257 = vpop.f32.mrb[0].mxu0
        %v1258 = vadd.f32 0.0, %v1257
        %v1259 = vpop.f32.mrb[0].mxu0
        %v1260 = vadd.f32 0.0, %v1259
        %v1261 = vpop.f32.mrb[0].mxu0
        %v1262 = vadd.f32 0.0, %v1261
        %v1263 = vpop.f32.mrb[0].mxu0
        %v1264 = vadd.f32 0.0, %v1263
        %1265 = vmatprep.mubr.bf16.mxu0 0
        %1266 = vmatmul.mubr.bf16.gmra.mrb[0].mxu0 %v660
        %v1267 = vpop.f32.mrb[0].mxu0
        %v1268 = vadd.f32 0.0, %v1267
        %v1269 = vpop.f32.mrb[0].mxu0
        %v1270 = vadd.f32 0.0, %v1269
        %v1271 = vpop.f32.mrb[0].mxu0
        %v1272 = vadd.f32 0.0, %v1271
        %v1273 = vpop.f32.mrb[0].mxu0
        %v1274 = vadd.f32 0.0, %v1273
        %1275 = vmatprep.mubr.bf16.mxu0 0
        %1276 = vmatmul.mubr.bf16.gmra.mrb[0].mxu0 %v663
        %v1277 = vpop.f32.mrb[0].mxu0
        %v1278 = vadd.f32 0.0, %v1277
        %v1279 = vpop.f32.mrb[0].mxu0
        %v1280 = vadd.f32 0.0, %v1279
        %v1281 = vpop.f32.mrb[0].mxu0
        %v1282 = vadd.f32 0.0, %v1281
        %v1283 = vpop.f32.mrb[0].mxu0
        %v1284 = vadd.f32 0.0, %v1283
        %1285 = vmatprep.mubr.bf16.mxu0 0
        %1286 = vmatmul.mubr.bf16.gmra.mrb[0].mxu0 %v666
        %v1287 = vpop.f32.mrb[0].mxu0
        %v1288 = vadd.f32 0.0, %v1287
        %v1289 = vpop.f32.mrb[0].mxu0
        %v1290 = vadd.f32 0.0, %v1289
        %v1291 = vpop.f32.mrb[0].mxu0
        %v1292 = vadd.f32 0.0, %v1291
        %v1293 = vpop.f32.mrb[0].mxu0
        %v1294 = vadd.f32 0.0, %v1293
        %1295 = vmatprep.mubr.bf16.mxu0 0
        %1296 = vmatmul.mubr.bf16.gmra.mrb[0].mxu0 %v669
        %v1297 = vpop.f32.mrb[0].mxu0
        %v1298 = vadd.f32 0.0, %v1297
        %v1299 = vpop.f32.mrb[0].mxu0
        %v1300 = vadd.f32 0.0, %v1299
        %v1301 = vpop.f32.mrb[0].mxu0
        %v1302 = vadd.f32 0.0, %v1301
        %v1303 = vpop.f32.mrb[0].mxu0
        %v1304 = vadd.f32 0.0, %v1303
        %1305 = vmatprep.mubr.bf16.mxu0 0
        %1306 = vmatmul.mubr.bf16.gmra.mrb[0].mxu0 %v672
        %v1307 = vpop.f32.mrb[0].mxu0
        %v1308 = vadd.f32 0.0, %v1307
        %v1309 = vpop.f32.mrb[0].mxu0
        %v1310 = vadd.f32 0.0, %v1309
        %v1311 = vpop.f32.mrb[0].mxu0
        %v1312 = vadd.f32 0.0, %v1311
        %v1313 = vpop.f32.mrb[0].mxu0
        %v1314 = vadd.f32 0.0, %v1313
        %1315 = vmatprep.mubr.bf16.mxu0 0
        %1316 = vmatmul.mubr.bf16.gmra.mrb[0].mxu0 %v675
        %v1317 = vpop.f32.mrb[0].mxu0
        %v1318 = vadd.f32 0.0, %v1317
        %v1319 = vpop.f32.mrb[0].mxu0
        %v1320 = vadd.f32 0.0, %v1319
        %v1321 = vpop.f32.mrb[0].mxu0
        %v1322 = vadd.f32 0.0, %v1321
        %v1323 = vpop.f32.mrb[0].mxu0
        %v1324 = vadd.f32 0.0, %v1323
        %1325 = vmatprep.mubr.bf16.mxu0 0
        %1326 = vmatmul.mubr.bf16.gmra.mrb[0].mxu0 %v678
        %v1327 = vpop.f32.mrb[0].mxu0
        %v1328 = vadd.f32 0.0, %v1327
        %v1329 = vpop.f32.mrb[0].mxu0
        %v1330 = vadd.f32 0.0, %v1329
        %v1331 = vpop.f32.mrb[0].mxu0
        %v1332 = vadd.f32 0.0, %v1331
        %v1333 = vpop.f32.mrb[0].mxu0
        %v1334 = vadd.f32 0.0, %v1333
        %1335 = vmatprep.mubr.bf16.mxu0 0
        %1336 = vmatmul.mubr.bf16.gmra.mrb[0].mxu0 %v681
        %v1337 = vpop.f32.mrb[0].mxu0
        %v1338 = vadd.f32 0.0, %v1337
        %v1339 = vpop.f32.mrb[0].mxu0
        %v1340 = vadd.f32 0.0, %v1339
        %v1341 = vpop.f32.mrb[0].mxu0
        %v1342 = vadd.f32 0.0, %v1341
        %v1343 = vpop.f32.mrb[0].mxu0
        %v1344 = vadd.f32 0.0, %v1343
        %1345 = vmatprep.mubr.bf16.mxu0 0
        %1346 = vmatmul.mubr.bf16.gmra.mrb[0].mxu0 %v684
        %v1347 = vpop.f32.mrb[0].mxu0
        %v1348 = vadd.f32 0.0, %v1347
        %v1349 = vpop.f32.mrb[0].mxu0
        %v1350 = vadd.f32 0.0, %v1349
        %v1351 = vpop.f32.mrb[0].mxu0
        %v1352 = vadd.f32 0.0, %v1351
        %v1353 = vpop.f32.mrb[0].mxu0
        %v1354 = vadd.f32 0.0, %v1353
        %1355 = vmatprep.mubr.bf16.mxu0 0
        %1356 = vmatmul.mubr.bf16.gmra.mrb[0].mxu0 %v687
        %v1357 = vpop.f32.mrb[0].mxu0
        %v1358 = vadd.f32 0.0, %v1357
        %v1359 = vpop.f32.mrb[0].mxu0
        %v1360 = vadd.f32 0.0, %v1359
        %v1361 = vpop.f32.mrb[0].mxu0
        %v1362 = vadd.f32 0.0, %v1361
        %v1363 = vpop.f32.mrb[0].mxu0
        %v1364 = vadd.f32 0.0, %v1363
        %1365 = vmatprep.mubr.bf16.mxu0 0
        %1366 = vmatmul.mubr.bf16.gmra.mrb[0].mxu0 %v690
        %v1367 = vpop.f32.mrb[0].mxu0
        %v1368 = vadd.f32 0.0, %v1367
        %v1369 = vpop.f32.mrb[0].mxu0
        %v1370 = vadd.f32 0.0, %v1369
        %v1371 = vpop.f32.mrb[0].mxu0
        %v1372 = vadd.f32 0.0, %v1371
        %v1373 = vpop.f32.mrb[0].mxu0
        %v1374 = vadd.f32 0.0, %v1373
        %1375 = vmatprep.mubr.bf16.mxu0 0
        %1376 = vmatmul.mubr.bf16.gmra.mrb[0].mxu0 %v693
        %v1377 = vpop.f32.mrb[0].mxu0
        %v1378 = vadd.f32 0.0, %v1377
        %v1379 = vpop.f32.mrb[0].mxu0
        %v1380 = vadd.f32 0.0, %v1379
        %v1381 = vpop.f32.mrb[0].mxu0
        %v1382 = vadd.f32 0.0, %v1381
        %v1383 = vpop.f32.mrb[0].mxu0
        %v1384 = vadd.f32 0.0, %v1383
        %1385 = vmatprep.mubr.bf16.mxu0 0
        %1386 = vmatmul.mubr.bf16.gmra.mrb[0].mxu0 %v696
        %v1387 = vpop.f32.mrb[0].mxu0
        %v1388 = vadd.f32 0.0, %v1387
        %v1389 = vpop.f32.mrb[0].mxu0
        %v1390 = vadd.f32 0.0, %v1389
        %v1391 = vpop.f32.mrb[0].mxu0
        %v1392 = vadd.f32 0.0, %v1391
        %v1393 = vpop.f32.mrb[0].mxu0
        %v1394 = vadd.f32 0.0, %v1393
        %1395 = vmatprep.mubr.bf16.mxu0 0
        %1396 = vmatmul.mubr.bf16.gmra.mrb[0].mxu0 %v699
        %v1397 = vpop.f32.mrb[0].mxu0
        %v1398 = vadd.f32 0.0, %v1397
        %v1399 = vpop.f32.mrb[0].mxu0
        %v1400 = vadd.f32 0.0, %v1399
        %v1401 = vpop.f32.mrb[0].mxu0
        %v1402 = vadd.f32 0.0, %v1401
        %v1403 = vpop.f32.mrb[0].mxu0
        %v1404 = vadd.f32 0.0, %v1403
        %1405 = vmatprep.mubr.bf16.mxu0 0
        %1406 = vmatmul.mubr.bf16.gmra.mrb[0].mxu0 %v702
        %v1407 = vpop.f32.mrb[0].mxu0
        %v1408 = vadd.f32 0.0, %v1407
        %v1409 = vpop.f32.mrb[0].mxu0
        %v1410 = vadd.f32 0.0, %v1409
        %v1411 = vpop.f32.mrb[0].mxu0
        %v1412 = vadd.f32 0.0, %v1411
        %v1413 = vpop.f32.mrb[0].mxu0
        %v1414 = vadd.f32 0.0, %v1413
        %1415 = vmatprep.mubr.bf16.mxu0 0
        %1416 = vmatmul.mubr.bf16.gmra.mrb[0].mxu0 %v705
        %v1417 = vpop.f32.mrb[0].mxu0
        %v1418 = vadd.f32 0.0, %v1417
        %v1419 = vpop.f32.mrb[0].mxu0
        %v1420 = vadd.f32 0.0, %v1419
        %v1421 = vpop.f32.mrb[0].mxu0
        %v1422 = vadd.f32 0.0, %v1421
        %v1423 = vpop.f32.mrb[0].mxu0
        %v1424 = vadd.f32 0.0, %v1423
        %1425 = vmatprep.mubr.bf16.mxu0 0
        %1426 = vmatmul.mubr.bf16.gmra.mrb[0].mxu0 %v708
        %v1427 = vpop.f32.mrb[0].mxu0
        %v1428 = vadd.f32 0.0, %v1427
        %v1429 = vpop.f32.mrb[0].mxu0
        %v1430 = vadd.f32 0.0, %v1429
        %v1431 = vpop.f32.mrb[0].mxu0
        %v1432 = vadd.f32 0.0, %v1431
        %v1433 = vpop.f32.mrb[0].mxu0
        %v1434 = vadd.f32 0.0, %v1433
        %1435 = vmatprep.mubr.bf16.mxu0 0
        %1436 = vmatmul.mubr.bf16.gmra.mrb[0].mxu0 %v711
        %v1437 = vpop.f32.mrb[0].mxu0
        %v1438 = vadd.f32 0.0, %v1437
        %v1439 = vpop.f32.mrb[0].mxu0
        %v1440 = vadd.f32 0.0, %v1439
        %v1441 = vpop.f32.mrb[0].mxu0
        %v1442 = vadd.f32 0.0, %v1441
        %v1443 = vpop.f32.mrb[0].mxu0
        %v1444 = vadd.f32 0.0, %v1443
        %1445 = vdwg.mxu0
        %1446 = vmatprep.subr.bf16.mxu0 %v581
        %1447 = vmatpush1.bf16.msra.mxu0 %v580
        %1448 = vmatprep.subr.bf16.mxu0 %v589
        %1449 = vmatpush1.bf16.msra.mxu0 %v588
        %1450 = vmatprep.subr.bf16.mxu0 %v732
        %1451 = vmatpush1.bf16.msra.mxu0 %v729
        %1452 = vmatprep.subr.bf16.mxu0 0
        %1453 = vmatpush1.bf16.msra.mxu0 0
        %1454 = vmatprep.subr.bf16.mxu0 0
        %1455 = vmatpush1.bf16.msra.mxu0 0
        %1456 = vmatprep.subr.bf16.mxu0 0
        %1457 = vmatpush1.bf16.msra.mxu0 0
        %1458 = vmatprep.subr.bf16.mxu0 0
        %1459 = vmatpush1.bf16.msra.mxu0 0
        %1460 = vmatprep.subr.bf16.mxu0 0
        %1461 = vmatpush1.bf16.msra.mxu0 0
        %1462 = vmatprep.subr.bf16.mxu0 0
        %1463 = vmatpush1.bf16.msra.mxu0 0
        %1464 = vmatprep.subr.bf16.mxu0 0
        %1465 = vmatpush1.bf16.msra.mxu0 0
        %1466 = vmatprep.subr.bf16.mxu0 0
        %1467 = vmatpush1.bf16.msra.mxu0 0
        %1468 = vmatprep.subr.bf16.mxu0 0
        %1469 = vmatpush1.bf16.msra.mxu0 0
        %1470 = vmatprep.subr.bf16.mxu0 0
        %1471 = vmatpush1.bf16.msra.mxu0 0
        %1472 = vmatprep.subr.bf16.mxu0 0
        %1473 = vmatpush1.bf16.msra.mxu0 0
        %1474 = vmatprep.subr.bf16.mxu0 0
        %1475 = vmatpush1.bf16.msra.mxu0 0
        %1476 = vmatprep.subr.bf16.mxu0 0
        %1477 = vmatpush1.bf16.msra.mxu0 0
        %1478 = vmatprep.mubr.bf16.mxu0 0
        %1479 = vmatmul.mubr.bf16.gmra.mrb[0].mxu0 %v618
        %v1480 = vpop.f32.mrb[0].mxu0
        %v1481 = vadd.f32 0.0, %v1480
        %v1482 = vpop.f32.mrb[0].mxu0
        %v1483 = vadd.f32 0.0, %v1482
        %v1484 = vpop.f32.mrb[0].mxu0
        %v1485 = vadd.f32 0.0, %v1484
        %v1486 = vpop.f32.mrb[0].mxu0
        %v1487 = vadd.f32 0.0, %v1486
        %1488 = vmatprep.mubr.bf16.mxu0 0
        %1489 = vmatmul.mubr.bf16.gmra.mrb[0].mxu0 %v621
        %v1490 = vpop.f32.mrb[0].mxu0
        %v1491 = vadd.f32 0.0, %v1490
        %v1492 = vpop.f32.mrb[0].mxu0
        %v1493 = vadd.f32 0.0, %v1492
        %v1494 = vpop.f32.mrb[0].mxu0
        %v1495 = vadd.f32 0.0, %v1494
        %v1496 = vpop.f32.mrb[0].mxu0
        %v1497 = vadd.f32 0.0, %v1496
        %1498 = vmatprep.mubr.bf16.mxu0 0
        %1499 = vmatmul.mubr.bf16.gmra.mrb[0].mxu0 %v624
        %v1500 = vpop.f32.mrb[0].mxu0
        %v1501 = vadd.f32 0.0, %v1500
        %v1502 = vpop.f32.mrb[0].mxu0
        %v1503 = vadd.f32 0.0, %v1502
        %v1504 = vpop.f32.mrb[0].mxu0
        %v1505 = vadd.f32 0.0, %v1504
        %v1506 = vpop.f32.mrb[0].mxu0
        %v1507 = vadd.f32 0.0, %v1506
        %1508 = vmatprep.mubr.bf16.mxu0 0
        %1509 = vmatmul.mubr.bf16.gmra.mrb[0].mxu0 %v627
        %v1510 = vpop.f32.mrb[0].mxu0
        %v1511 = vadd.f32 0.0, %v1510
        %v1512 = vpop.f32.mrb[0].mxu0
        %v1513 = vadd.f32 0.0, %v1512
        %v1514 = vpop.f32.mrb[0].mxu0
        %v1515 = vadd.f32 0.0, %v1514
        %v1516 = vpop.f32.mrb[0].mxu0
        %v1517 = vadd.f32 0.0, %v1516
        %1518 = vmatprep.mubr.bf16.mxu0 0
        %1519 = vmatmul.mubr.bf16.gmra.mrb[0].mxu0 %v630
        %v1520 = vpop.f32.mrb[0].mxu0
        %v1521 = vadd.f32 0.0, %v1520
        %v1522 = vpop.f32.mrb[0].mxu0
        %v1523 = vadd.f32 0.0, %v1522
        %v1524 = vpop.f32.mrb[0].mxu0
        %v1525 = vadd.f32 0.0, %v1524
        %v1526 = vpop.f32.mrb[0].mxu0
        %v1527 = vadd.f32 0.0, %v1526
        %1528 = vmatprep.mubr.bf16.mxu0 0
        %1529 = vmatmul.mubr.bf16.gmra.mrb[0].mxu0 %v633
        %v1530 = vpop.f32.mrb[0].mxu0
        %v1531 = vadd.f32 0.0, %v1530
        %v1532 = vpop.f32.mrb[0].mxu0
        %v1533 = vadd.f32 0.0, %v1532
        %v1534 = vpop.f32.mrb[0].mxu0
        %v1535 = vadd.f32 0.0, %v1534
        %v1536 = vpop.f32.mrb[0].mxu0
        %v1537 = vadd.f32 0.0, %v1536
        %1538 = vmatprep.mubr.bf16.mxu0 0
        %1539 = vmatmul.mubr.bf16.gmra.mrb[0].mxu0 %v636
        %v1540 = vpop.f32.mrb[0].mxu0
        %v1541 = vadd.f32 0.0, %v1540
        %v1542 = vpop.f32.mrb[0].mxu0
        %v1543 = vadd.f32 0.0, %v1542
        %v1544 = vpop.f32.mrb[0].mxu0
        %v1545 = vadd.f32 0.0, %v1544
        %v1546 = vpop.f32.mrb[0].mxu0
        %v1547 = vadd.f32 0.0, %v1546
        %1548 = vmatprep.mubr.bf16.mxu0 0
        %1549 = vmatmul.mubr.bf16.gmra.mrb[0].mxu0 %v639
        %v1550 = vpop.f32.mrb[0].mxu0
        %v1551 = vadd.f32 0.0, %v1550
        %v1552 = vpop.f32.mrb[0].mxu0
        %v1553 = vadd.f32 0.0, %v1552
        %v1554 = vpop.f32.mrb[0].mxu0
        %v1555 = vadd.f32 0.0, %v1554
        %v1556 = vpop.f32.mrb[0].mxu0
        %v1557 = vadd.f32 0.0, %v1556
        %1558 = vmatprep.mubr.bf16.mxu0 0
        %1559 = vmatmul.mubr.bf16.gmra.mrb[0].mxu0 %v642
        %v1560 = vpop.f32.mrb[0].mxu0
        %v1561 = vadd.f32 0.0, %v1560
        %v1562 = vpop.f32.mrb[0].mxu0
        %v1563 = vadd.f32 0.0, %v1562
        %v1564 = vpop.f32.mrb[0].mxu0
        %v1565 = vadd.f32 0.0, %v1564
        %v1566 = vpop.f32.mrb[0].mxu0
        %v1567 = vadd.f32 0.0, %v1566
        %1568 = vmatprep.mubr.bf16.mxu0 0
        %1569 = vmatmul.mubr.bf16.gmra.mrb[0].mxu0 %v645
        %v1570 = vpop.f32.mrb[0].mxu0
        %v1571 = vadd.f32 0.0, %v1570
        %v1572 = vpop.f32.mrb[0].mxu0
        %v1573 = vadd.f32 0.0, %v1572
        %v1574 = vpop.f32.mrb[0].mxu0
        %v1575 = vadd.f32 0.0, %v1574
        %v1576 = vpop.f32.mrb[0].mxu0
        %v1577 = vadd.f32 0.0, %v1576
        %1578 = vmatprep.mubr.bf16.mxu0 0
        %1579 = vmatmul.mubr.bf16.gmra.mrb[0].mxu0 %v648
        %v1580 = vpop.f32.mrb[0].mxu0
        %v1581 = vadd.f32 0.0, %v1580
        %v1582 = vpop.f32.mrb[0].mxu0
        %v1583 = vadd.f32 0.0, %v1582
        %v1584 = vpop.f32.mrb[0].mxu0
        %v1585 = vadd.f32 0.0, %v1584
        %v1586 = vpop.f32.mrb[0].mxu0
        %v1587 = vadd.f32 0.0, %v1586
        %1588 = vmatprep.mubr.bf16.mxu0 0
        %1589 = vmatmul.mubr.bf16.gmra.mrb[0].mxu0 %v651
        %v1590 = vpop.f32.mrb[0].mxu0
        %v1591 = vadd.f32 0.0, %v1590
        %v1592 = vpop.f32.mrb[0].mxu0
        %v1593 = vadd.f32 0.0, %v1592
        %v1594 = vpop.f32.mrb[0].mxu0
        %v1595 = vadd.f32 0.0, %v1594
        %v1596 = vpop.f32.mrb[0].mxu0
        %v1597 = vadd.f32 0.0, %v1596
        %1598 = vmatprep.mubr.bf16.mxu0 0
        %1599 = vmatmul.mubr.bf16.gmra.mrb[0].mxu0 %v654
        %v1600 = vpop.f32.mrb[0].mxu0
        %v1601 = vadd.f32 0.0, %v1600
        %v1602 = vpop.f32.mrb[0].mxu0
        %v1603 = vadd.f32 0.0, %v1602
        %v1604 = vpop.f32.mrb[0].mxu0
        %v1605 = vadd.f32 0.0, %v1604
        %v1606 = vpop.f32.mrb[0].mxu0
        %v1607 = vadd.f32 0.0, %v1606
        %1608 = vmatprep.mubr.bf16.mxu0 0
        %1609 = vmatmul.mubr.bf16.gmra.mrb[0].mxu0 %v657
        %v1610 = vpop.f32.mrb[0].mxu0
        %v1611 = vadd.f32 0.0, %v1610
        %v1612 = vpop.f32.mrb[0].mxu0
        %v1613 = vadd.f32 0.0, %v1612
        %v1614 = vpop.f32.mrb[0].mxu0
        %v1615 = vadd.f32 0.0, %v1614
        %v1616 = vpop.f32.mrb[0].mxu0
        %v1617 = vadd.f32 0.0, %v1616
        %1618 = vmatprep.mubr.bf16.mxu0 0
        %1619 = vmatmul.mubr.bf16.gmra.mrb[0].mxu0 %v660
        %v1620 = vpop.f32.mrb[0].mxu0
        %v1621 = vadd.f32 0.0, %v1620
        %v1622 = vpop.f32.mrb[0].mxu0
        %v1623 = vadd.f32 0.0, %v1622
        %v1624 = vpop.f32.mrb[0].mxu0
        %v1625 = vadd.f32 0.0, %v1624
        %v1626 = vpop.f32.mrb[0].mxu0
        %v1627 = vadd.f32 0.0, %v1626
        %1628 = vmatprep.mubr.bf16.mxu0 0
        %1629 = vmatmul.mubr.bf16.gmra.mrb[0].mxu0 %v663
        %v1630 = vpop.f32.mrb[0].mxu0
        %v1631 = vadd.f32 0.0, %v1630
        %v1632 = vpop.f32.mrb[0].mxu0
        %v1633 = vadd.f32 0.0, %v1632
        %v1634 = vpop.f32.mrb[0].mxu0
        %v1635 = vadd.f32 0.0, %v1634
        %v1636 = vpop.f32.mrb[0].mxu0
        %v1637 = vadd.f32 0.0, %v1636
        %1638 = vmatprep.mubr.bf16.mxu0 0
        %1639 = vmatmul.mubr.bf16.gmra.mrb[0].mxu0 %v666
        %v1640 = vpop.f32.mrb[0].mxu0
        %v1641 = vadd.f32 0.0, %v1640
        %v1642 = vpop.f32.mrb[0].mxu0
        %v1643 = vadd.f32 0.0, %v1642
        %v1644 = vpop.f32.mrb[0].mxu0
        %v1645 = vadd.f32 0.0, %v1644
        %v1646 = vpop.f32.mrb[0].mxu0
        %v1647 = vadd.f32 0.0, %v1646
        %1648 = vmatprep.mubr.bf16.mxu0 0
        %1649 = vmatmul.mubr.bf16.gmra.mrb[0].mxu0 %v669
        %v1650 = vpop.f32.mrb[0].mxu0
        %v1651 = vadd.f32 0.0, %v1650
        %v1652 = vpop.f32.mrb[0].mxu0
        %v1653 = vadd.f32 0.0, %v1652
        %v1654 = vpop.f32.mrb[0].mxu0
        %v1655 = vadd.f32 0.0, %v1654
        %v1656 = vpop.f32.mrb[0].mxu0
        %v1657 = vadd.f32 0.0, %v1656
        %1658 = vmatprep.mubr.bf16.mxu0 0
        %1659 = vmatmul.mubr.bf16.gmra.mrb[0].mxu0 %v672
        %v1660 = vpop.f32.mrb[0].mxu0
        %v1661 = vadd.f32 0.0, %v1660
        %v1662 = vpop.f32.mrb[0].mxu0
        %v1663 = vadd.f32 0.0, %v1662
        %v1664 = vpop.f32.mrb[0].mxu0
        %v1665 = vadd.f32 0.0, %v1664
        %v1666 = vpop.f32.mrb[0].mxu0
        %v1667 = vadd.f32 0.0, %v1666
        %1668 = vmatprep.mubr.bf16.mxu0 0
        %1669 = vmatmul.mubr.bf16.gmra.mrb[0].mxu0 %v675
        %v1670 = vpop.f32.mrb[0].mxu0
        %v1671 = vadd.f32 0.0, %v1670
        %v1672 = vpop.f32.mrb[0].mxu0
        %v1673 = vadd.f32 0.0, %v1672
        %v1674 = vpop.f32.mrb[0].mxu0
        %v1675 = vadd.f32 0.0, %v1674
        %v1676 = vpop.f32.mrb[0].mxu0
        %v1677 = vadd.f32 0.0, %v1676
        %1678 = vmatprep.mubr.bf16.mxu0 0
        %1679 = vmatmul.mubr.bf16.gmra.mrb[0].mxu0 %v678
        %v1680 = vpop.f32.mrb[0].mxu0
        %v1681 = vadd.f32 0.0, %v1680
        %v1682 = vpop.f32.mrb[0].mxu0
        %v1683 = vadd.f32 0.0, %v1682
        %v1684 = vpop.f32.mrb[0].mxu0
        %v1685 = vadd.f32 0.0, %v1684
        %v1686 = vpop.f32.mrb[0].mxu0
        %v1687 = vadd.f32 0.0, %v1686
        %1688 = vmatprep.mubr.bf16.mxu0 0
        %1689 = vmatmul.mubr.bf16.gmra.mrb[0].mxu0 %v681
        %v1690 = vpop.f32.mrb[0].mxu0
        %v1691 = vadd.f32 0.0, %v1690
        %v1692 = vpop.f32.mrb[0].mxu0
        %v1693 = vadd.f32 0.0, %v1692
        %v1694 = vpop.f32.mrb[0].mxu0
        %v1695 = vadd.f32 0.0, %v1694
        %v1696 = vpop.f32.mrb[0].mxu0
        %v1697 = vadd.f32 0.0, %v1696
        %1698 = vmatprep.mubr.bf16.mxu0 0
        %1699 = vmatmul.mubr.bf16.gmra.mrb[0].mxu0 %v684
        %v1700 = vpop.f32.mrb[0].mxu0
        %v1701 = vadd.f32 0.0, %v1700
        %v1702 = vpop.f32.mrb[0].mxu0
        %v1703 = vadd.f32 0.0, %v1702
        %v1704 = vpop.f32.mrb[0].mxu0
        %v1705 = vadd.f32 0.0, %v1704
        %v1706 = vpop.f32.mrb[0].mxu0
        %v1707 = vadd.f32 0.0, %v1706
        %1708 = vmatprep.mubr.bf16.mxu0 0
        %1709 = vmatmul.mubr.bf16.gmra.mrb[0].mxu0 %v687
        %v1710 = vpop.f32.mrb[0].mxu0
        %v1711 = vadd.f32 0.0, %v1710
        %v1712 = vpop.f32.mrb[0].mxu0
        %v1713 = vadd.f32 0.0, %v1712
        %v1714 = vpop.f32.mrb[0].mxu0
        %v1715 = vadd.f32 0.0, %v1714
        %v1716 = vpop.f32.mrb[0].mxu0
        %v1717 = vadd.f32 0.0, %v1716
        %1718 = vmatprep.mubr.bf16.mxu0 0
        %1719 = vmatmul.mubr.bf16.gmra.mrb[0].mxu0 %v690
        %v1720 = vpop.f32.mrb[0].mxu0
        %v1721 = vadd.f32 0.0, %v1720
        %v1722 = vpop.f32.mrb[0].mxu0
        %v1723 = vadd.f32 0.0, %v1722
        %v1724 = vpop.f32.mrb[0].mxu0
        %v1725 = vadd.f32 0.0, %v1724
        %v1726 = vpop.f32.mrb[0].mxu0
        %v1727 = vadd.f32 0.0, %v1726
        %1728 = vmatprep.mubr.bf16.mxu0 0
        %1729 = vmatmul.mubr.bf16.gmra.mrb[0].mxu0 %v693
        %v1730 = vpop.f32.mrb[0].mxu0
        %v1731 = vadd.f32 0.0, %v1730
        %v1732 = vpop.f32.mrb[0].mxu0
        %v1733 = vadd.f32 0.0, %v1732
        %v1734 = vpop.f32.mrb[0].mxu0
        %v1735 = vadd.f32 0.0, %v1734
        %v1736 = vpop.f32.mrb[0].mxu0
        %v1737 = vadd.f32 0.0, %v1736
        %1738 = vmatprep.mubr.bf16.mxu0 0
        %1739 = vmatmul.mubr.bf16.gmra.mrb[0].mxu0 %v696
        %v1740 = vpop.f32.mrb[0].mxu0
        %v1741 = vadd.f32 0.0, %v1740
        %v1742 = vpop.f32.mrb[0].mxu0
        %v1743 = vadd.f32 0.0, %v1742
        %v1744 = vpop.f32.mrb[0].mxu0
        %v1745 = vadd.f32 0.0, %v1744
        %v1746 = vpop.f32.mrb[0].mxu0
        %v1747 = vadd.f32 0.0, %v1746
        %1748 = vmatprep.mubr.bf16.mxu0 0
        %1749 = vmatmul.mubr.bf16.gmra.mrb[0].mxu0 %v699
        %v1750 = vpop.f32.mrb[0].mxu0
        %v1751 = vadd.f32 0.0, %v1750
        %v1752 = vpop.f32.mrb[0].mxu0
        %v1753 = vadd.f32 0.0, %v1752
        %v1754 = vpop.f32.mrb[0].mxu0
        %v1755 = vadd.f32 0.0, %v1754
        %v1756 = vpop.f32.mrb[0].mxu0
        %v1757 = vadd.f32 0.0, %v1756
        %1758 = vmatprep.mubr.bf16.mxu0 0
        %1759 = vmatmul.mubr.bf16.gmra.mrb[0].mxu0 %v702
        %v1760 = vpop.f32.mrb[0].mxu0
        %v1761 = vadd.f32 0.0, %v1760
        %v1762 = vpop.f32.mrb[0].mxu0
        %v1763 = vadd.f32 0.0, %v1762
        %v1764 = vpop.f32.mrb[0].mxu0
        %v1765 = vadd.f32 0.0, %v1764
        %v1766 = vpop.f32.mrb[0].mxu0
        %v1767 = vadd.f32 0.0, %v1766
        %1768 = vmatprep.mubr.bf16.mxu0 0
        %1769 = vmatmul.mubr.bf16.gmra.mrb[0].mxu0 %v705
        %v1770 = vpop.f32.mrb[0].mxu0
        %v1771 = vadd.f32 0.0, %v1770
        %v1772 = vpop.f32.mrb[0].mxu0
        %v1773 = vadd.f32 0.0, %v1772
        %v1774 = vpop.f32.mrb[0].mxu0
        %v1775 = vadd.f32 0.0, %v1774
        %v1776 = vpop.f32.mrb[0].mxu0
        %v1777 = vadd.f32 0.0, %v1776
        %1778 = vmatprep.mubr.bf16.mxu0 0
        %1779 = vmatmul.mubr.bf16.gmra.mrb[0].mxu0 %v708
        %v1780 = vpop.f32.mrb[0].mxu0
        %v1781 = vadd.f32 0.0, %v1780
        %v1782 = vpop.f32.mrb[0].mxu0
        %v1783 = vadd.f32 0.0, %v1782
        %v1784 = vpop.f32.mrb[0].mxu0
        %v1785 = vadd.f32 0.0, %v1784
        %v1786 = vpop.f32.mrb[0].mxu0
        %v1787 = vadd.f32 0.0, %v1786
        %1788 = vmatprep.mubr.bf16.mxu0 0
        %1789 = vmatmul.mubr.bf16.gmra.mrb[0].mxu0 %v711
        %v1790 = vpop.f32.mrb[0].mxu0
        %v1791 = vadd.f32 0.0, %v1790
        %v1792 = vpop.f32.mrb[0].mxu0
        %v1793 = vadd.f32 0.0, %v1792
        %v1794 = vpop.f32.mrb[0].mxu0
        %v1795 = vadd.f32 0.0, %v1794
        %v1796 = vpop.f32.mrb[0].mxu0
        %v1797 = vadd.f32 0.0, %v1796
        %1798 = vdwg.mxu0
        %1799 = vmatprep.subr.bf16.mxu0 %v583
        %1800 = vmatpush1.bf16.msra.mxu0 %v582
        %1801 = vmatprep.subr.bf16.mxu0 %v591
        %1802 = vmatpush1.bf16.msra.mxu0 %v590
        %1803 = vmatprep.subr.bf16.mxu0 %v738
        %1804 = vmatpush1.bf16.msra.mxu0 %v735
        %1805 = vmatprep.subr.bf16.mxu0 0
        %1806 = vmatpush1.bf16.msra.mxu0 0
        %1807 = vmatprep.subr.bf16.mxu0 0
        %1808 = vmatpush1.bf16.msra.mxu0 0
        %1809 = vmatprep.subr.bf16.mxu0 0
        %1810 = vmatpush1.bf16.msra.mxu0 0
        %1811 = vmatprep.subr.bf16.mxu0 0
        %1812 = vmatpush1.bf16.msra.mxu0 0
        %1813 = vmatprep.subr.bf16.mxu0 0
        %1814 = vmatpush1.bf16.msra.mxu0 0
        %1815 = vmatprep.subr.bf16.mxu0 0
        %1816 = vmatpush1.bf16.msra.mxu0 0
        %1817 = vmatprep.subr.bf16.mxu0 0
        %1818 = vmatpush1.bf16.msra.mxu0 0
        %1819 = vmatprep.subr.bf16.mxu0 0
        %1820 = vmatpush1.bf16.msra.mxu0 0
        %1821 = vmatprep.subr.bf16.mxu0 0
        %1822 = vmatpush1.bf16.msra.mxu0 0
        %1823 = vmatprep.subr.bf16.mxu0 0
        %1824 = vmatpush1.bf16.msra.mxu0 0
        %1825 = vmatprep.subr.bf16.mxu0 0
        %1826 = vmatpush1.bf16.msra.mxu0 0
        %1827 = vmatprep.subr.bf16.mxu0 0
        %1828 = vmatpush1.bf16.msra.mxu0 0
        %1829 = vmatprep.subr.bf16.mxu0 0
        %1830 = vmatpush1.bf16.msra.mxu0 0
        %1831 = vmatprep.mubr.bf16.mxu0 0
        %1832 = vmatmul.mubr.bf16.gmra.mrb[0].mxu0 %v618
        %v1833 = vpop.f32.mrb[0].mxu0
        %v1834 = vadd.f32 0.0, %v1833
        %v1835 = vpop.f32.mrb[0].mxu0
        %v1836 = vadd.f32 0.0, %v1835
        %v1837 = vpop.f32.mrb[0].mxu0
        %v1838 = vadd.f32 0.0, %v1837
        %v1839 = vpop.f32.mrb[0].mxu0
        %v1840 = vadd.f32 0.0, %v1839
        %1841 = vmatprep.mubr.bf16.mxu0 0
        %1842 = vmatmul.mubr.bf16.gmra.mrb[0].mxu0 %v621
        %v1843 = vpop.f32.mrb[0].mxu0
        %v1844 = vadd.f32 0.0, %v1843
        %v1845 = vpop.f32.mrb[0].mxu0
        %v1846 = vadd.f32 0.0, %v1845
        %v1847 = vpop.f32.mrb[0].mxu0
        %v1848 = vadd.f32 0.0, %v1847
        %v1849 = vpop.f32.mrb[0].mxu0
        %v1850 = vadd.f32 0.0, %v1849
        %1851 = vmatprep.mubr.bf16.mxu0 0
        %1852 = vmatmul.mubr.bf16.gmra.mrb[0].mxu0 %v624
        %v1853 = vpop.f32.mrb[0].mxu0
        %v1854 = vadd.f32 0.0, %v1853
        %v1855 = vpop.f32.mrb[0].mxu0
        %v1856 = vadd.f32 0.0, %v1855
        %v1857 = vpop.f32.mrb[0].mxu0
        %v1858 = vadd.f32 0.0, %v1857
        %v1859 = vpop.f32.mrb[0].mxu0
        %v1860 = vadd.f32 0.0, %v1859
        %1861 = vmatprep.mubr.bf16.mxu0 0
        %1862 = vmatmul.mubr.bf16.gmra.mrb[0].mxu0 %v627
        %v1863 = vpop.f32.mrb[0].mxu0
        %v1864 = vadd.f32 0.0, %v1863
        %v1865 = vpop.f32.mrb[0].mxu0
        %v1866 = vadd.f32 0.0, %v1865
        %v1867 = vpop.f32.mrb[0].mxu0
        %v1868 = vadd.f32 0.0, %v1867
        %v1869 = vpop.f32.mrb[0].mxu0
        %v1870 = vadd.f32 0.0, %v1869
        %1871 = vmatprep.mubr.bf16.mxu0 0
        %1872 = vmatmul.mubr.bf16.gmra.mrb[0].mxu0 %v630
        %v1873 = vpop.f32.mrb[0].mxu0
        %v1874 = vadd.f32 0.0, %v1873
        %v1875 = vpop.f32.mrb[0].mxu0
        %v1876 = vadd.f32 0.0, %v1875
        %v1877 = vpop.f32.mrb[0].mxu0
        %v1878 = vadd.f32 0.0, %v1877
        %v1879 = vpop.f32.mrb[0].mxu0
        %v1880 = vadd.f32 0.0, %v1879
        %1881 = vmatprep.mubr.bf16.mxu0 0
        %1882 = vmatmul.mubr.bf16.gmra.mrb[0].mxu0 %v633
        %v1883 = vpop.f32.mrb[0].mxu0
        %v1884 = vadd.f32 0.0, %v1883
        %v1885 = vpop.f32.mrb[0].mxu0
        %v1886 = vadd.f32 0.0, %v1885
        %v1887 = vpop.f32.mrb[0].mxu0
        %v1888 = vadd.f32 0.0, %v1887
        %v1889 = vpop.f32.mrb[0].mxu0
        %v1890 = vadd.f32 0.0, %v1889
        %1891 = vmatprep.mubr.bf16.mxu0 0
        %1892 = vmatmul.mubr.bf16.gmra.mrb[0].mxu0 %v636
        %v1893 = vpop.f32.mrb[0].mxu0
        %v1894 = vadd.f32 0.0, %v1893
        %v1895 = vpop.f32.mrb[0].mxu0
        %v1896 = vadd.f32 0.0, %v1895
        %v1897 = vpop.f32.mrb[0].mxu0
        %v1898 = vadd.f32 0.0, %v1897
        %v1899 = vpop.f32.mrb[0].mxu0
        %v1900 = vadd.f32 0.0, %v1899
        %1901 = vmatprep.mubr.bf16.mxu0 0
        %1902 = vmatmul.mubr.bf16.gmra.mrb[0].mxu0 %v639
        %v1903 = vpop.f32.mrb[0].mxu0
        %v1904 = vadd.f32 0.0, %v1903
        %v1905 = vpop.f32.mrb[0].mxu0
        %v1906 = vadd.f32 0.0, %v1905
        %v1907 = vpop.f32.mrb[0].mxu0
        %v1908 = vadd.f32 0.0, %v1907
        %v1909 = vpop.f32.mrb[0].mxu0
        %v1910 = vadd.f32 0.0, %v1909
        %1911 = vmatprep.mubr.bf16.mxu0 0
        %1912 = vmatmul.mubr.bf16.gmra.mrb[0].mxu0 %v642
        %v1913 = vpop.f32.mrb[0].mxu0
        %v1914 = vadd.f32 0.0, %v1913
        %v1915 = vpop.f32.mrb[0].mxu0
        %v1916 = vadd.f32 0.0, %v1915
        %v1917 = vpop.f32.mrb[0].mxu0
        %v1918 = vadd.f32 0.0, %v1917
        %v1919 = vpop.f32.mrb[0].mxu0
        %v1920 = vadd.f32 0.0, %v1919
        %1921 = vmatprep.mubr.bf16.mxu0 0
        %1922 = vmatmul.mubr.bf16.gmra.mrb[0].mxu0 %v645
        %v1923 = vpop.f32.mrb[0].mxu0
        %v1924 = vadd.f32 0.0, %v1923
        %v1925 = vpop.f32.mrb[0].mxu0
        %v1926 = vadd.f32 0.0, %v1925
        %v1927 = vpop.f32.mrb[0].mxu0
        %v1928 = vadd.f32 0.0, %v1927
        %v1929 = vpop.f32.mrb[0].mxu0
        %v1930 = vadd.f32 0.0, %v1929
        %1931 = vmatprep.mubr.bf16.mxu0 0
        %1932 = vmatmul.mubr.bf16.gmra.mrb[0].mxu0 %v648
        %v1933 = vpop.f32.mrb[0].mxu0
        %v1934 = vadd.f32 0.0, %v1933
        %v1935 = vpop.f32.mrb[0].mxu0
        %v1936 = vadd.f32 0.0, %v1935
        %v1937 = vpop.f32.mrb[0].mxu0
        %v1938 = vadd.f32 0.0, %v1937
        %v1939 = vpop.f32.mrb[0].mxu0
        %v1940 = vadd.f32 0.0, %v1939
        %1941 = vmatprep.mubr.bf16.mxu0 0
        %1942 = vmatmul.mubr.bf16.gmra.mrb[0].mxu0 %v651
        %v1943 = vpop.f32.mrb[0].mxu0
        %v1944 = vadd.f32 0.0, %v1943
        %v1945 = vpop.f32.mrb[0].mxu0
        %v1946 = vadd.f32 0.0, %v1945
        %v1947 = vpop.f32.mrb[0].mxu0
        %v1948 = vadd.f32 0.0, %v1947
        %v1949 = vpop.f32.mrb[0].mxu0
        %v1950 = vadd.f32 0.0, %v1949
        %1951 = vmatprep.mubr.bf16.mxu0 0
        %1952 = vmatmul.mubr.bf16.gmra.mrb[0].mxu0 %v654
        %v1953 = vpop.f32.mrb[0].mxu0
        %v1954 = vadd.f32 0.0, %v1953
        %v1955 = vpop.f32.mrb[0].mxu0
        %v1956 = vadd.f32 0.0, %v1955
        %v1957 = vpop.f32.mrb[0].mxu0
        %v1958 = vadd.f32 0.0, %v1957
        %v1959 = vpop.f32.mrb[0].mxu0
        %v1960 = vadd.f32 0.0, %v1959
        %1961 = vmatprep.mubr.bf16.mxu0 0
        %1962 = vmatmul.mubr.bf16.gmra.mrb[0].mxu0 %v657
        %v1963 = vpop.f32.mrb[0].mxu0
        %v1964 = vadd.f32 0.0, %v1963
        %v1965 = vpop.f32.mrb[0].mxu0
        %v1966 = vadd.f32 0.0, %v1965
        %v1967 = vpop.f32.mrb[0].mxu0
        %v1968 = vadd.f32 0.0, %v1967
        %v1969 = vpop.f32.mrb[0].mxu0
        %v1970 = vadd.f32 0.0, %v1969
        %1971 = vmatprep.mubr.bf16.mxu0 0
        %1972 = vmatmul.mubr.bf16.gmra.mrb[0].mxu0 %v660
        %v1973 = vpop.f32.mrb[0].mxu0
        %v1974 = vadd.f32 0.0, %v1973
        %v1975 = vpop.f32.mrb[0].mxu0
        %v1976 = vadd.f32 0.0, %v1975
        %v1977 = vpop.f32.mrb[0].mxu0
        %v1978 = vadd.f32 0.0, %v1977
        %v1979 = vpop.f32.mrb[0].mxu0
        %v1980 = vadd.f32 0.0, %v1979
        %1981 = vmatprep.mubr.bf16.mxu0 0
        %1982 = vmatmul.mubr.bf16.gmra.mrb[0].mxu0 %v663
        %v1983 = vpop.f32.mrb[0].mxu0
        %v1984 = vadd.f32 0.0, %v1983
        %v1985 = vpop.f32.mrb[0].mxu0
        %v1986 = vadd.f32 0.0, %v1985
        %v1987 = vpop.f32.mrb[0].mxu0
        %v1988 = vadd.f32 0.0, %v1987
        %v1989 = vpop.f32.mrb[0].mxu0
        %v1990 = vadd.f32 0.0, %v1989
        %1991 = vmatprep.mubr.bf16.mxu0 0
        %1992 = vmatmul.mubr.bf16.gmra.mrb[0].mxu0 %v666
        %v1993 = vpop.f32.mrb[0].mxu0
        %v1994 = vadd.f32 0.0, %v1993
        %v1995 = vpop.f32.mrb[0].mxu0
        %v1996 = vadd.f32 0.0, %v1995
        %v1997 = vpop.f32.mrb[0].mxu0
        %v1998 = vadd.f32 0.0, %v1997
        %v1999 = vpop.f32.mrb[0].mxu0
        %v2000 = vadd.f32 0.0, %v1999
        %2001 = vmatprep.mubr.bf16.mxu0 0
        %2002 = vmatmul.mubr.bf16.gmra.mrb[0].mxu0 %v669
        %v2003 = vpop.f32.mrb[0].mxu0
        %v2004 = vadd.f32 0.0, %v2003
        %v2005 = vpop.f32.mrb[0].mxu0
        %v2006 = vadd.f32 0.0, %v2005
        %v2007 = vpop.f32.mrb[0].mxu0
        %v2008 = vadd.f32 0.0, %v2007
        %v2009 = vpop.f32.mrb[0].mxu0
        %v2010 = vadd.f32 0.0, %v2009
        %2011 = vmatprep.mubr.bf16.mxu0 0
        %2012 = vmatmul.mubr.bf16.gmra.mrb[0].mxu0 %v672
        %v2013 = vpop.f32.mrb[0].mxu0
        %v2014 = vadd.f32 0.0, %v2013
        %v2015 = vpop.f32.mrb[0].mxu0
        %v2016 = vadd.f32 0.0, %v2015
        %v2017 = vpop.f32.mrb[0].mxu0
        %v2018 = vadd.f32 0.0, %v2017
        %v2019 = vpop.f32.mrb[0].mxu0
        %v2020 = vadd.f32 0.0, %v2019
        %2021 = vmatprep.mubr.bf16.mxu0 0
        %2022 = vmatmul.mubr.bf16.gmra.mrb[0].mxu0 %v675
        %v2023 = vpop.f32.mrb[0].mxu0
        %v2024 = vadd.f32 0.0, %v2023
        %v2025 = vpop.f32.mrb[0].mxu0
        %v2026 = vadd.f32 0.0, %v2025
        %v2027 = vpop.f32.mrb[0].mxu0
        %v2028 = vadd.f32 0.0, %v2027
        %v2029 = vpop.f32.mrb[0].mxu0
        %v2030 = vadd.f32 0.0, %v2029
        %2031 = vmatprep.mubr.bf16.mxu0 0
        %2032 = vmatmul.mubr.bf16.gmra.mrb[0].mxu0 %v678
        %v2033 = vpop.f32.mrb[0].mxu0
        %v2034 = vadd.f32 0.0, %v2033
        %v2035 = vpop.f32.mrb[0].mxu0
        %v2036 = vadd.f32 0.0, %v2035
        %v2037 = vpop.f32.mrb[0].mxu0
        %v2038 = vadd.f32 0.0, %v2037
        %v2039 = vpop.f32.mrb[0].mxu0
        %v2040 = vadd.f32 0.0, %v2039
        %2041 = vmatprep.mubr.bf16.mxu0 0
        %2042 = vmatmul.mubr.bf16.gmra.mrb[0].mxu0 %v681
        %v2043 = vpop.f32.mrb[0].mxu0
        %v2044 = vadd.f32 0.0, %v2043
        %v2045 = vpop.f32.mrb[0].mxu0
        %v2046 = vadd.f32 0.0, %v2045
        %v2047 = vpop.f32.mrb[0].mxu0
        %v2048 = vadd.f32 0.0, %v2047
        %v2049 = vpop.f32.mrb[0].mxu0
        %v2050 = vadd.f32 0.0, %v2049
        %2051 = vmatprep.mubr.bf16.mxu0 0
        %2052 = vmatmul.mubr.bf16.gmra.mrb[0].mxu0 %v684
        %v2053 = vpop.f32.mrb[0].mxu0
        %v2054 = vadd.f32 0.0, %v2053
        %v2055 = vpop.f32.mrb[0].mxu0
        %v2056 = vadd.f32 0.0, %v2055
        %v2057 = vpop.f32.mrb[0].mxu0
        %v2058 = vadd.f32 0.0, %v2057
        %v2059 = vpop.f32.mrb[0].mxu0
        %v2060 = vadd.f32 0.0, %v2059
        %2061 = vmatprep.mubr.bf16.mxu0 0
        %2062 = vmatmul.mubr.bf16.gmra.mrb[0].mxu0 %v687
        %v2063 = vpop.f32.mrb[0].mxu0
        %v2064 = vadd.f32 0.0, %v2063
        %v2065 = vpop.f32.mrb[0].mxu0
        %v2066 = vadd.f32 0.0, %v2065
        %v2067 = vpop.f32.mrb[0].mxu0
        %v2068 = vadd.f32 0.0, %v2067
        %v2069 = vpop.f32.mrb[0].mxu0
        %v2070 = vadd.f32 0.0, %v2069
        %2071 = vmatprep.mubr.bf16.mxu0 0
        %2072 = vmatmul.mubr.bf16.gmra.mrb[0].mxu0 %v690
        %v2073 = vpop.f32.mrb[0].mxu0
        %v2074 = vadd.f32 0.0, %v2073
        %v2075 = vpop.f32.mrb[0].mxu0
        %v2076 = vadd.f32 0.0, %v2075
        %v2077 = vpop.f32.mrb[0].mxu0
        %v2078 = vadd.f32 0.0, %v2077
        %v2079 = vpop.f32.mrb[0].mxu0
        %v2080 = vadd.f32 0.0, %v2079
        %2081 = vmatprep.mubr.bf16.mxu0 0
        %2082 = vmatmul.mubr.bf16.gmra.mrb[0].mxu0 %v693
        %v2083 = vpop.f32.mrb[0].mxu0
        %v2084 = vadd.f32 0.0, %v2083
        %v2085 = vpop.f32.mrb[0].mxu0
        %v2086 = vadd.f32 0.0, %v2085
        %v2087 = vpop.f32.mrb[0].mxu0
        %v2088 = vadd.f32 0.0, %v2087
        %v2089 = vpop.f32.mrb[0].mxu0
        %v2090 = vadd.f32 0.0, %v2089
        %2091 = vmatprep.mubr.bf16.mxu0 0
        %2092 = vmatmul.mubr.bf16.gmra.mrb[0].mxu0 %v696
        %v2093 = vpop.f32.mrb[0].mxu0
        %v2094 = vadd.f32 0.0, %v2093
        %v2095 = vpop.f32.mrb[0].mxu0
        %v2096 = vadd.f32 0.0, %v2095
        %v2097 = vpop.f32.mrb[0].mxu0
        %v2098 = vadd.f32 0.0, %v2097
        %v2099 = vpop.f32.mrb[0].mxu0
        %v2100 = vadd.f32 0.0, %v2099
        %2101 = vmatprep.mubr.bf16.mxu0 0
        %2102 = vmatmul.mubr.bf16.gmra.mrb[0].mxu0 %v699
        %v2103 = vpop.f32.mrb[0].mxu0
        %v2104 = vadd.f32 0.0, %v2103
        %v2105 = vpop.f32.mrb[0].mxu0
        %v2106 = vadd.f32 0.0, %v2105
        %v2107 = vpop.f32.mrb[0].mxu0
        %v2108 = vadd.f32 0.0, %v2107
        %v2109 = vpop.f32.mrb[0].mxu0
        %v2110 = vadd.f32 0.0, %v2109
        %2111 = vmatprep.mubr.bf16.mxu0 0
        %2112 = vmatmul.mubr.bf16.gmra.mrb[0].mxu0 %v702
        %v2113 = vpop.f32.mrb[0].mxu0
        %v2114 = vadd.f32 0.0, %v2113
        %v2115 = vpop.f32.mrb[0].mxu0
        %v2116 = vadd.f32 0.0, %v2115
        %v2117 = vpop.f32.mrb[0].mxu0
        %v2118 = vadd.f32 0.0, %v2117
        %v2119 = vpop.f32.mrb[0].mxu0
        %v2120 = vadd.f32 0.0, %v2119
        %2121 = vmatprep.mubr.bf16.mxu0 0
        %2122 = vmatmul.mubr.bf16.gmra.mrb[0].mxu0 %v705
        %v2123 = vpop.f32.mrb[0].mxu0
        %v2124 = vadd.f32 0.0, %v2123
        %v2125 = vpop.f32.mrb[0].mxu0
        %v2126 = vadd.f32 0.0, %v2125
        %v2127 = vpop.f32.mrb[0].mxu0
        %v2128 = vadd.f32 0.0, %v2127
        %v2129 = vpop.f32.mrb[0].mxu0
        %v2130 = vadd.f32 0.0, %v2129
        %2131 = vmatprep.mubr.bf16.mxu0 0
        %2132 = vmatmul.mubr.bf16.gmra.mrb[0].mxu0 %v708
        %v2133 = vpop.f32.mrb[0].mxu0
        %v2134 = vadd.f32 0.0, %v2133
        %v2135 = vpop.f32.mrb[0].mxu0
        %v2136 = vadd.f32 0.0, %v2135
        %v2137 = vpop.f32.mrb[0].mxu0
        %v2138 = vadd.f32 0.0, %v2137
        %v2139 = vpop.f32.mrb[0].mxu0
        %v2140 = vadd.f32 0.0, %v2139
        %2141 = vmatprep.mubr.bf16.mxu0 0
        %2142 = vmatmul.mubr.bf16.gmra.mrb[0].mxu0 %v711
        %v2143 = vpop.f32.mrb[0].mxu0
        %v2144 = vadd.f32 0.0, %v2143
        %v2145 = vpop.f32.mrb[0].mxu0
        %v2146 = vadd.f32 0.0, %v2145
        %v2147 = vpop.f32.mrb[0].mxu0
        %v2148 = vadd.f32 0.0, %v2147
        %v2149 = vpop.f32.mrb[0].mxu0
        %v2150 = vadd.f32 0.0, %v2149
        %2151 = vdwg.mxu0
        %v2152 = vmax.f32 %v775, 0.0
        %v2153 = vmax.f32 %v777, 0.0
        %v2154 = vmax.f32 %v1128, 0.0
        %v2155 = vmax.f32 %v1130, 0.0
        %v2156 = vmax.f32 %v1481, 0.0
        %v2157 = vmax.f32 %v1483, 0.0
        %v2158 = vmax.f32 %v1834, 0.0
        %v2159 = vmax.f32 %v1836, 0.0
        %v2160 = vmax.f32 %v779, 0.0
        %v2161 = vmax.f32 %v781, 0.0
        %v2162 = vmax.f32 %v1132, 0.0
        %v2163 = vmax.f32 %v1134, 0.0
        %v2164 = vmax.f32 %v1485, 0.0
        %v2165 = vmax.f32 %v1487, 0.0
        %v2166 = vmax.f32 %v1838, 0.0
        %v2167 = vmax.f32 %v1840, 0.0
        %v2168 = vmax.f32 %v785, 0.0
        %v2169 = vmax.f32 %v787, 0.0
        %v2170 = vmax.f32 %v1138, 0.0
        %v2171 = vmax.f32 %v1140, 0.0
        %v2172 = vmax.f32 %v1491, 0.0
        %v2173 = vmax.f32 %v1493, 0.0
        %v2174 = vmax.f32 %v1844, 0.0
        %v2175 = vmax.f32 %v1846, 0.0
        %v2176 = vmax.f32 %v789, 0.0
        %v2177 = vmax.f32 %v791, 0.0
        %v2178 = vmax.f32 %v1142, 0.0
        %v2179 = vmax.f32 %v1144, 0.0
        %v2180 = vmax.f32 %v1495, 0.0
        %v2181 = vmax.f32 %v1497, 0.0
        %v2182 = vmax.f32 %v1848, 0.0
        %v2183 = vmax.f32 %v1850, 0.0
        %v2184 = vmax.f32 %v795, 0.0
        %v2185 = vmax.f32 %v797, 0.0
        %v2186 = vmax.f32 %v1148, 0.0
        %v2187 = vmax.f32 %v1150, 0.0
        %v2188 = vmax.f32 %v1501, 0.0
        %v2189 = vmax.f32 %v1503, 0.0
        %v2190 = vmax.f32 %v1854, 0.0
        %v2191 = vmax.f32 %v1856, 0.0
        %v2192 = vmax.f32 %v799, 0.0
        %v2193 = vmax.f32 %v801, 0.0
        %v2194 = vmax.f32 %v1152, 0.0
        %v2195 = vmax.f32 %v1154, 0.0
        %v2196 = vmax.f32 %v1505, 0.0
        %v2197 = vmax.f32 %v1507, 0.0
        %v2198 = vmax.f32 %v1858, 0.0
        %v2199 = vmax.f32 %v1860, 0.0
        %v2200 = vmax.f32 %v805, 0.0
        %v2201 = vmax.f32 %v807, 0.0
        %v2202 = vmax.f32 %v1158, 0.0
        %v2203 = vmax.f32 %v1160, 0.0
        %v2204 = vmax.f32 %v1511, 0.0
        %v2205 = vmax.f32 %v1513, 0.0
        %v2206 = vmax.f32 %v1864, 0.0
        %v2207 = vmax.f32 %v1866, 0.0
        %v2208 = vmax.f32 %v809, 0.0
        %v2209 = vmax.f32 %v811, 0.0
        %v2210 = vmax.f32 %v1162, 0.0
        %v2211 = vmax.f32 %v1164, 0.0
        %v2212 = vmax.f32 %v1515, 0.0
        %v2213 = vmax.f32 %v1517, 0.0
        %v2214 = vmax.f32 %v1868, 0.0
        %v2215 = vmax.f32 %v1870, 0.0
        %v2216 = vmax.f32 %v815, 0.0
        %v2217 = vmax.f32 %v817, 0.0
        %v2218 = vmax.f32 %v1168, 0.0
        %v2219 = vmax.f32 %v1170, 0.0
        %v2220 = vmax.f32 %v1521, 0.0
        %v2221 = vmax.f32 %v1523, 0.0
        %v2222 = vmax.f32 %v1874, 0.0
        %v2223 = vmax.f32 %v1876, 0.0
        %v2224 = vmax.f32 %v819, 0.0
        %v2225 = vmax.f32 %v821, 0.0
        %v2226 = vmax.f32 %v1172, 0.0
        %v2227 = vmax.f32 %v1174, 0.0
        %v2228 = vmax.f32 %v1525, 0.0
        %v2229 = vmax.f32 %v1527, 0.0
        %v2230 = vmax.f32 %v1878, 0.0
        %v2231 = vmax.f32 %v1880, 0.0
        %v2232 = vmax.f32 %v825, 0.0
        %v2233 = vmax.f32 %v827, 0.0
        %v2234 = vmax.f32 %v1178, 0.0
        %v2235 = vmax.f32 %v1180, 0.0
        %v2236 = vmax.f32 %v1531, 0.0
        %v2237 = vmax.f32 %v1533, 0.0
        %v2238 = vmax.f32 %v1884, 0.0
        %v2239 = vmax.f32 %v1886, 0.0
        %v2240 = vmax.f32 %v829, 0.0
        %v2241 = vmax.f32 %v831, 0.0
        %v2242 = vmax.f32 %v1182, 0.0
        %v2243 = vmax.f32 %v1184, 0.0
        %v2244 = vmax.f32 %v1535, 0.0
        %v2245 = vmax.f32 %v1537, 0.0
        %v2246 = vmax.f32 %v1888, 0.0
        %v2247 = vmax.f32 %v1890, 0.0
        %v2248 = vmax.f32 %v835, 0.0
        %v2249 = vmax.f32 %v837, 0.0
        %v2250 = vmax.f32 %v1188, 0.0
        %v2251 = vmax.f32 %v1190, 0.0
        %v2252 = vmax.f32 %v1541, 0.0
        %v2253 = vmax.f32 %v1543, 0.0
        %v2254 = vmax.f32 %v1894, 0.0
        %v2255 = vmax.f32 %v1896, 0.0
        %v2256 = vmax.f32 %v839, 0.0
        %v2257 = vmax.f32 %v841, 0.0
        %v2258 = vmax.f32 %v1192, 0.0
        %v2259 = vmax.f32 %v1194, 0.0
        %v2260 = vmax.f32 %v1545, 0.0
        %v2261 = vmax.f32 %v1547, 0.0
        %v2262 = vmax.f32 %v1898, 0.0
        %v2263 = vmax.f32 %v1900, 0.0
        %v2264 = vmax.f32 %v845, 0.0
        %v2265 = vmax.f32 %v847, 0.0
        %v2266 = vmax.f32 %v1198, 0.0
        %v2267 = vmax.f32 %v1200, 0.0
        %v2268 = vmax.f32 %v1551, 0.0
        %v2269 = vmax.f32 %v1553, 0.0
        %v2270 = vmax.f32 %v1904, 0.0
        %v2271 = vmax.f32 %v1906, 0.0
        %v2272 = vmax.f32 %v849, 0.0
        %v2273 = vmax.f32 %v851, 0.0
        %v2274 = vmax.f32 %v1202, 0.0
        %v2275 = vmax.f32 %v1204, 0.0
        %v2276 = vmax.f32 %v1555, 0.0
        %v2277 = vmax.f32 %v1557, 0.0
        %v2278 = vmax.f32 %v1908, 0.0
        %v2279 = vmax.f32 %v1910, 0.0
        %v2280 = vmax.f32 %v855, 0.0
        %v2281 = vmax.f32 %v857, 0.0
        %v2282 = vmax.f32 %v1208, 0.0
        %v2283 = vmax.f32 %v1210, 0.0
        %v2284 = vmax.f32 %v1561, 0.0
        %v2285 = vmax.f32 %v1563, 0.0
        %v2286 = vmax.f32 %v1914, 0.0
        %v2287 = vmax.f32 %v1916, 0.0
        %v2288 = vmax.f32 %v859, 0.0
        %v2289 = vmax.f32 %v861, 0.0
        %v2290 = vmax.f32 %v1212, 0.0
        %v2291 = vmax.f32 %v1214, 0.0
        %v2292 = vmax.f32 %v1565, 0.0
        %v2293 = vmax.f32 %v1567, 0.0
        %v2294 = vmax.f32 %v1918, 0.0
        %v2295 = vmax.f32 %v1920, 0.0
        %v2296 = vmax.f32 %v865, 0.0
        %v2297 = vmax.f32 %v867, 0.0
        %v2298 = vmax.f32 %v1218, 0.0
        %v2299 = vmax.f32 %v1220, 0.0
        %v2300 = vmax.f32 %v1571, 0.0
        %v2301 = vmax.f32 %v1573, 0.0
        %v2302 = vmax.f32 %v1924, 0.0
        %v2303 = vmax.f32 %v1926, 0.0
        %v2304 = vmax.f32 %v869, 0.0
        %v2305 = vmax.f32 %v871, 0.0
        %v2306 = vmax.f32 %v1222, 0.0
        %v2307 = vmax.f32 %v1224, 0.0
        %v2308 = vmax.f32 %v1575, 0.0
        %v2309 = vmax.f32 %v1577, 0.0
        %v2310 = vmax.f32 %v1928, 0.0
        %v2311 = vmax.f32 %v1930, 0.0
        %v2312 = vmax.f32 %v875, 0.0
        %v2313 = vmax.f32 %v877, 0.0
        %v2314 = vmax.f32 %v1228, 0.0
        %v2315 = vmax.f32 %v1230, 0.0
        %v2316 = vmax.f32 %v1581, 0.0
        %v2317 = vmax.f32 %v1583, 0.0
        %v2318 = vmax.f32 %v1934, 0.0
        %v2319 = vmax.f32 %v1936, 0.0
        %v2320 = vmax.f32 %v879, 0.0
        %v2321 = vmax.f32 %v881, 0.0
        %v2322 = vmax.f32 %v1232, 0.0
        %v2323 = vmax.f32 %v1234, 0.0
        %v2324 = vmax.f32 %v1585, 0.0
        %v2325 = vmax.f32 %v1587, 0.0
        %v2326 = vmax.f32 %v1938, 0.0
        %v2327 = vmax.f32 %v1940, 0.0
        %v2328 = vmax.f32 %v885, 0.0
        %v2329 = vmax.f32 %v887, 0.0
        %v2330 = vmax.f32 %v1238, 0.0
        %v2331 = vmax.f32 %v1240, 0.0
        %v2332 = vmax.f32 %v1591, 0.0
        %v2333 = vmax.f32 %v1593, 0.0
        %v2334 = vmax.f32 %v1944, 0.0
        %v2335 = vmax.f32 %v1946, 0.0
        %v2336 = vmax.f32 %v889, 0.0
        %v2337 = vmax.f32 %v891, 0.0
        %v2338 = vmax.f32 %v1242, 0.0
        %v2339 = vmax.f32 %v1244, 0.0
        %v2340 = vmax.f32 %v1595, 0.0
        %v2341 = vmax.f32 %v1597, 0.0
        %v2342 = vmax.f32 %v1948, 0.0
        %v2343 = vmax.f32 %v1950, 0.0
        %v2344 = vmax.f32 %v895, 0.0
        %v2345 = vmax.f32 %v897, 0.0
        %v2346 = vmax.f32 %v1248, 0.0
        %v2347 = vmax.f32 %v1250, 0.0
        %v2348 = vmax.f32 %v1601, 0.0
        %v2349 = vmax.f32 %v1603, 0.0
        %v2350 = vmax.f32 %v1954, 0.0
        %v2351 = vmax.f32 %v1956, 0.0
        %v2352 = vmax.f32 %v899, 0.0
        %v2353 = vmax.f32 %v901, 0.0
        %v2354 = vmax.f32 %v1252, 0.0
        %v2355 = vmax.f32 %v1254, 0.0
        %v2356 = vmax.f32 %v1605, 0.0
        %v2357 = vmax.f32 %v1607, 0.0
        %v2358 = vmax.f32 %v1958, 0.0
        %v2359 = vmax.f32 %v1960, 0.0
        %v2360 = vmax.f32 %v905, 0.0
        %v2361 = vmax.f32 %v907, 0.0
        %v2362 = vmax.f32 %v1258, 0.0
        %v2363 = vmax.f32 %v1260, 0.0
        %v2364 = vmax.f32 %v1611, 0.0
        %v2365 = vmax.f32 %v1613, 0.0
        %v2366 = vmax.f32 %v1964, 0.0
        %v2367 = vmax.f32 %v1966, 0.0
        %v2368 = vmax.f32 %v909, 0.0
        %v2369 = vmax.f32 %v911, 0.0
        %v2370 = vmax.f32 %v1262, 0.0
        %v2371 = vmax.f32 %v1264, 0.0
        %v2372 = vmax.f32 %v1615, 0.0
        %v2373 = vmax.f32 %v1617, 0.0
        %v2374 = vmax.f32 %v1968, 0.0
        %v2375 = vmax.f32 %v1970, 0.0
        %v2376 = vmax.f32 %v915, 0.0
        %v2377 = vmax.f32 %v917, 0.0
        %v2378 = vmax.f32 %v1268, 0.0
        %v2379 = vmax.f32 %v1270, 0.0
        %v2380 = vmax.f32 %v1621, 0.0
        %v2381 = vmax.f32 %v1623, 0.0
        %v2382 = vmax.f32 %v1974, 0.0
        %v2383 = vmax.f32 %v1976, 0.0
        %v2384 = vmax.f32 %v919, 0.0
        %v2385 = vmax.f32 %v921, 0.0
        %v2386 = vmax.f32 %v1272, 0.0
        %v2387 = vmax.f32 %v1274, 0.0
        %v2388 = vmax.f32 %v1625, 0.0
        %v2389 = vmax.f32 %v1627, 0.0
        %v2390 = vmax.f32 %v1978, 0.0
        %v2391 = vmax.f32 %v1980, 0.0
        %v2392 = vmax.f32 %v925, 0.0
        %v2393 = vmax.f32 %v927, 0.0
        %v2394 = vmax.f32 %v1278, 0.0
        %v2395 = vmax.f32 %v1280, 0.0
        %v2396 = vmax.f32 %v1631, 0.0
        %v2397 = vmax.f32 %v1633, 0.0
        %v2398 = vmax.f32 %v1984, 0.0
        %v2399 = vmax.f32 %v1986, 0.0
        %v2400 = vmax.f32 %v929, 0.0
        %v2401 = vmax.f32 %v931, 0.0
        %v2402 = vmax.f32 %v1282, 0.0
        %v2403 = vmax.f32 %v1284, 0.0
        %v2404 = vmax.f32 %v1635, 0.0
        %v2405 = vmax.f32 %v1637, 0.0
        %v2406 = vmax.f32 %v1988, 0.0
        %v2407 = vmax.f32 %v1990, 0.0
        %v2408 = vmax.f32 %v935, 0.0
        %v2409 = vmax.f32 %v937, 0.0
        %v2410 = vmax.f32 %v1288, 0.0
        %v2411 = vmax.f32 %v1290, 0.0
        %v2412 = vmax.f32 %v1641, 0.0
        %v2413 = vmax.f32 %v1643, 0.0
        %v2414 = vmax.f32 %v1994, 0.0
        %v2415 = vmax.f32 %v1996, 0.0
        %v2416 = vmax.f32 %v939, 0.0
        %v2417 = vmax.f32 %v941, 0.0
        %v2418 = vmax.f32 %v1292, 0.0
        %v2419 = vmax.f32 %v1294, 0.0
        %v2420 = vmax.f32 %v1645, 0.0
        %v2421 = vmax.f32 %v1647, 0.0
        %v2422 = vmax.f32 %v1998, 0.0
        %v2423 = vmax.f32 %v2000, 0.0
        %v2424 = vmax.f32 %v945, 0.0
        %v2425 = vmax.f32 %v947, 0.0
        %v2426 = vmax.f32 %v1298, 0.0
        %v2427 = vmax.f32 %v1300, 0.0
        %v2428 = vmax.f32 %v1651, 0.0
        %v2429 = vmax.f32 %v1653, 0.0
        %v2430 = vmax.f32 %v2004, 0.0
        %v2431 = vmax.f32 %v2006, 0.0
        %v2432 = vmax.f32 %v949, 0.0
        %v2433 = vmax.f32 %v951, 0.0
        %v2434 = vmax.f32 %v1302, 0.0
        %v2435 = vmax.f32 %v1304, 0.0
        %v2436 = vmax.f32 %v1655, 0.0
        %v2437 = vmax.f32 %v1657, 0.0
        %v2438 = vmax.f32 %v2008, 0.0
        %v2439 = vmax.f32 %v2010, 0.0
        %v2440 = vmax.f32 %v955, 0.0
        %v2441 = vmax.f32 %v957, 0.0
        %v2442 = vmax.f32 %v1308, 0.0
        %v2443 = vmax.f32 %v1310, 0.0
        %v2444 = vmax.f32 %v1661, 0.0
        %v2445 = vmax.f32 %v1663, 0.0
        %v2446 = vmax.f32 %v2014, 0.0
        %v2447 = vmax.f32 %v2016, 0.0
        %v2448 = vmax.f32 %v959, 0.0
        %v2449 = vmax.f32 %v961, 0.0
        %v2450 = vmax.f32 %v1312, 0.0
        %v2451 = vmax.f32 %v1314, 0.0
        %v2452 = vmax.f32 %v1665, 0.0
        %v2453 = vmax.f32 %v1667, 0.0
        %v2454 = vmax.f32 %v2018, 0.0
        %v2455 = vmax.f32 %v2020, 0.0
        %v2456 = vmax.f32 %v965, 0.0
        %v2457 = vmax.f32 %v967, 0.0
        %v2458 = vmax.f32 %v1318, 0.0
        %v2459 = vmax.f32 %v1320, 0.0
        %v2460 = vmax.f32 %v1671, 0.0
        %v2461 = vmax.f32 %v1673, 0.0
        %v2462 = vmax.f32 %v2024, 0.0
        %v2463 = vmax.f32 %v2026, 0.0
        %v2464 = vmax.f32 %v969, 0.0
        %v2465 = vmax.f32 %v971, 0.0
        %v2466 = vmax.f32 %v1322, 0.0
        %v2467 = vmax.f32 %v1324, 0.0
        %v2468 = vmax.f32 %v1675, 0.0
        %v2469 = vmax.f32 %v1677, 0.0
        %v2470 = vmax.f32 %v2028, 0.0
        %v2471 = vmax.f32 %v2030, 0.0
        %v2472 = vmax.f32 %v975, 0.0
        %v2473 = vmax.f32 %v977, 0.0
        %v2474 = vmax.f32 %v1328, 0.0
        %v2475 = vmax.f32 %v1330, 0.0
        %v2476 = vmax.f32 %v1681, 0.0
        %v2477 = vmax.f32 %v1683, 0.0
        %v2478 = vmax.f32 %v2034, 0.0
        %v2479 = vmax.f32 %v2036, 0.0
        %v2480 = vmax.f32 %v979, 0.0
        %v2481 = vmax.f32 %v981, 0.0
        %v2482 = vmax.f32 %v1332, 0.0
        %v2483 = vmax.f32 %v1334, 0.0
        %v2484 = vmax.f32 %v1685, 0.0
        %v2485 = vmax.f32 %v1687, 0.0
        %v2486 = vmax.f32 %v2038, 0.0
        %v2487 = vmax.f32 %v2040, 0.0
        %v2488 = vmax.f32 %v985, 0.0
        %v2489 = vmax.f32 %v987, 0.0
        %v2490 = vmax.f32 %v1338, 0.0
        %v2491 = vmax.f32 %v1340, 0.0
        %v2492 = vmax.f32 %v1691, 0.0
        %v2493 = vmax.f32 %v1693, 0.0
        %v2494 = vmax.f32 %v2044, 0.0
        %v2495 = vmax.f32 %v2046, 0.0
        %v2496 = vmax.f32 %v989, 0.0
        %v2497 = vmax.f32 %v991, 0.0
        %v2498 = vmax.f32 %v1342, 0.0
        %v2499 = vmax.f32 %v1344, 0.0
        %v2500 = vmax.f32 %v1695, 0.0
        %v2501 = vmax.f32 %v1697, 0.0
        %v2502 = vmax.f32 %v2048, 0.0
        %v2503 = vmax.f32 %v2050, 0.0
        %v2504 = vmax.f32 %v995, 0.0
        %v2505 = vmax.f32 %v997, 0.0
        %v2506 = vmax.f32 %v1348, 0.0
        %v2507 = vmax.f32 %v1350, 0.0
        %v2508 = vmax.f32 %v1701, 0.0
        %v2509 = vmax.f32 %v1703, 0.0
        %v2510 = vmax.f32 %v2054, 0.0
        %v2511 = vmax.f32 %v2056, 0.0
        %v2512 = vmax.f32 %v999, 0.0
        %v2513 = vmax.f32 %v1001, 0.0
        %v2514 = vmax.f32 %v1352, 0.0
        %v2515 = vmax.f32 %v1354, 0.0
        %v2516 = vmax.f32 %v1705, 0.0
        %v2517 = vmax.f32 %v1707, 0.0
        %v2518 = vmax.f32 %v2058, 0.0
        %v2519 = vmax.f32 %v2060, 0.0
        %v2520 = vmax.f32 %v1005, 0.0
        %v2521 = vmax.f32 %v1007, 0.0
        %v2522 = vmax.f32 %v1358, 0.0
        %v2523 = vmax.f32 %v1360, 0.0
        %v2524 = vmax.f32 %v1711, 0.0
        %v2525 = vmax.f32 %v1713, 0.0
        %v2526 = vmax.f32 %v2064, 0.0
        %v2527 = vmax.f32 %v2066, 0.0
        %v2528 = vmax.f32 %v1009, 0.0
        %v2529 = vmax.f32 %v1011, 0.0
        %v2530 = vmax.f32 %v1362, 0.0
        %v2531 = vmax.f32 %v1364, 0.0
        %v2532 = vmax.f32 %v1715, 0.0
        %v2533 = vmax.f32 %v1717, 0.0
        %v2534 = vmax.f32 %v2068, 0.0
        %v2535 = vmax.f32 %v2070, 0.0
        %v2536 = vmax.f32 %v1015, 0.0
        %v2537 = vmax.f32 %v1017, 0.0
        %v2538 = vmax.f32 %v1368, 0.0
        %v2539 = vmax.f32 %v1370, 0.0
        %v2540 = vmax.f32 %v1721, 0.0
        %v2541 = vmax.f32 %v1723, 0.0
        %v2542 = vmax.f32 %v2074, 0.0
        %v2543 = vmax.f32 %v2076, 0.0
        %v2544 = vmax.f32 %v1019, 0.0
        %v2545 = vmax.f32 %v1021, 0.0
        %v2546 = vmax.f32 %v1372, 0.0
        %v2547 = vmax.f32 %v1374, 0.0
        %v2548 = vmax.f32 %v1725, 0.0
        %v2549 = vmax.f32 %v1727, 0.0
        %v2550 = vmax.f32 %v2078, 0.0
        %v2551 = vmax.f32 %v2080, 0.0
        %v2552 = vmax.f32 %v1025, 0.0
        %v2553 = vmax.f32 %v1027, 0.0
        %v2554 = vmax.f32 %v1378, 0.0
        %v2555 = vmax.f32 %v1380, 0.0
        %v2556 = vmax.f32 %v1731, 0.0
        %v2557 = vmax.f32 %v1733, 0.0
        %v2558 = vmax.f32 %v2084, 0.0
        %v2559 = vmax.f32 %v2086, 0.0
        %v2560 = vmax.f32 %v1029, 0.0
        %v2561 = vmax.f32 %v1031, 0.0
        %v2562 = vmax.f32 %v1382, 0.0
        %v2563 = vmax.f32 %v1384, 0.0
        %v2564 = vmax.f32 %v1735, 0.0
        %v2565 = vmax.f32 %v1737, 0.0
        %v2566 = vmax.f32 %v2088, 0.0
        %v2567 = vmax.f32 %v2090, 0.0
        %v2568 = vmax.f32 %v1035, 0.0
        %v2569 = vmax.f32 %v1037, 0.0
        %v2570 = vmax.f32 %v1388, 0.0
        %v2571 = vmax.f32 %v1390, 0.0
        %v2572 = vmax.f32 %v1741, 0.0
        %v2573 = vmax.f32 %v1743, 0.0
        %v2574 = vmax.f32 %v2094, 0.0
        %v2575 = vmax.f32 %v2096, 0.0
        %v2576 = vmax.f32 %v1039, 0.0
        %v2577 = vmax.f32 %v1041, 0.0
        %v2578 = vmax.f32 %v1392, 0.0
        %v2579 = vmax.f32 %v1394, 0.0
        %v2580 = vmax.f32 %v1745, 0.0
        %v2581 = vmax.f32 %v1747, 0.0
        %v2582 = vmax.f32 %v2098, 0.0
        %v2583 = vmax.f32 %v2100, 0.0
        %v2584 = vmax.f32 %v1045, 0.0
        %v2585 = vmax.f32 %v1047, 0.0
        %v2586 = vmax.f32 %v1398, 0.0
        %v2587 = vmax.f32 %v1400, 0.0
        %v2588 = vmax.f32 %v1751, 0.0
        %v2589 = vmax.f32 %v1753, 0.0
        %v2590 = vmax.f32 %v2104, 0.0
        %v2591 = vmax.f32 %v2106, 0.0
        %v2592 = vmax.f32 %v1049, 0.0
        %v2593 = vmax.f32 %v1051, 0.0
        %v2594 = vmax.f32 %v1402, 0.0
        %v2595 = vmax.f32 %v1404, 0.0
        %v2596 = vmax.f32 %v1755, 0.0
        %v2597 = vmax.f32 %v1757, 0.0
        %v2598 = vmax.f32 %v2108, 0.0
        %v2599 = vmax.f32 %v2110, 0.0
        %v2600 = vmax.f32 %v1055, 0.0
        %v2601 = vmax.f32 %v1057, 0.0
        %v2602 = vmax.f32 %v1408, 0.0
        %v2603 = vmax.f32 %v1410, 0.0
        %v2604 = vmax.f32 %v1761, 0.0
        %v2605 = vmax.f32 %v1763, 0.0
        %v2606 = vmax.f32 %v2114, 0.0
        %v2607 = vmax.f32 %v2116, 0.0
        %v2608 = vmax.f32 %v1059, 0.0
        %v2609 = vmax.f32 %v1061, 0.0
        %v2610 = vmax.f32 %v1412, 0.0
        %v2611 = vmax.f32 %v1414, 0.0
        %v2612 = vmax.f32 %v1765, 0.0
        %v2613 = vmax.f32 %v1767, 0.0
        %v2614 = vmax.f32 %v2118, 0.0
        %v2615 = vmax.f32 %v2120, 0.0
        %v2616 = vmax.f32 %v1065, 0.0
        %v2617 = vmax.f32 %v1067, 0.0
        %v2618 = vmax.f32 %v1418, 0.0
        %v2619 = vmax.f32 %v1420, 0.0
        %v2620 = vmax.f32 %v1771, 0.0
        %v2621 = vmax.f32 %v1773, 0.0
        %v2622 = vmax.f32 %v2124, 0.0
        %v2623 = vmax.f32 %v2126, 0.0
        %v2624 = vmax.f32 %v1069, 0.0
        %v2625 = vmax.f32 %v1071, 0.0
        %v2626 = vmax.f32 %v1422, 0.0
        %v2627 = vmax.f32 %v1424, 0.0
        %v2628 = vmax.f32 %v1775, 0.0
        %v2629 = vmax.f32 %v1777, 0.0
        %v2630 = vmax.f32 %v2128, 0.0
        %v2631 = vmax.f32 %v2130, 0.0
        %v2632 = vmax.f32 %v1075, 0.0
        %v2633 = vmax.f32 %v1077, 0.0
        %v2634 = vmax.f32 %v1428, 0.0
        %v2635 = vmax.f32 %v1430, 0.0
        %v2636 = vmax.f32 %v1781, 0.0
        %v2637 = vmax.f32 %v1783, 0.0
        %v2638 = vmax.f32 %v2134, 0.0
        %v2639 = vmax.f32 %v2136, 0.0
        %v2640 = vmax.f32 %v1079, 0.0
        %v2641 = vmax.f32 %v1081, 0.0
        %v2642 = vmax.f32 %v1432, 0.0
        %v2643 = vmax.f32 %v1434, 0.0
        %v2644 = vmax.f32 %v1785, 0.0
        %v2645 = vmax.f32 %v1787, 0.0
        %v2646 = vmax.f32 %v2138, 0.0
        %v2647 = vmax.f32 %v2140, 0.0
        %v2648 = vmax.f32 %v1085, 0.0
        %v2649 = vmax.f32 %v1087, 0.0
        %v2650 = vmax.f32 %v1438, 0.0
        %v2651 = vmax.f32 %v1440, 0.0
        %v2652 = vmax.f32 %v1791, 0.0
        %v2653 = vmax.f32 %v1793, 0.0
        %v2654 = vmax.f32 %v2144, 0.0
        %v2655 = vmax.f32 %v2146, 0.0
        %v2656 = vmax.f32 %v1089, 0.0
        %v2657 = vmax.f32 %v1091, 0.0
        %v2658 = vmax.f32 %v1442, 0.0
        %v2659 = vmax.f32 %v1444, 0.0
        %v2660 = vmax.f32 %v1795, 0.0
        %v2661 = vmax.f32 %v1797, 0.0
        %v2662 = vmax.f32 %v2148, 0.0
        %v2663 = vmax.f32 %v2150, 0.0
        %v2664 = vpack.c.bf16 %v2160, %v2152
        %v2665 = vpack.c.bf16 %v2161, %v2153
        %v2666 = vpack.c.bf16 %v2162, %v2154
        %v2667 = vpack.c.bf16 %v2163, %v2155
        %v2668 = vpack.c.bf16 %v2164, %v2156
        %v2669 = vpack.c.bf16 %v2165, %v2157
        %v2670 = vpack.c.bf16 %v2166, %v2158
        %v2671 = vpack.c.bf16 %v2167, %v2159
        %v2672 = vpack.c.bf16 %v2176, %v2168
        %v2673 = vpack.c.bf16 %v2177, %v2169
        %v2674 = vpack.c.bf16 %v2178, %v2170
        %v2675 = vpack.c.bf16 %v2179, %v2171
        %v2676 = vpack.c.bf16 %v2180, %v2172
        %v2677 = vpack.c.bf16 %v2181, %v2173
        %v2678 = vpack.c.bf16 %v2182, %v2174
        %v2679 = vpack.c.bf16 %v2183, %v2175
        %v2680 = vpack.c.bf16 %v2192, %v2184
        %v2681 = vpack.c.bf16 %v2193, %v2185
        %v2682 = vpack.c.bf16 %v2194, %v2186
        %v2683 = vpack.c.bf16 %v2195, %v2187
        %v2684 = vpack.c.bf16 %v2196, %v2188
        %v2685 = vpack.c.bf16 %v2197, %v2189
        %v2686 = vpack.c.bf16 %v2198, %v2190
        %v2687 = vpack.c.bf16 %v2199, %v2191
        %v2688 = vpack.c.bf16 %v2208, %v2200
        %v2689 = vpack.c.bf16 %v2209, %v2201
        %v2690 = vpack.c.bf16 %v2210, %v2202
        %v2691 = vpack.c.bf16 %v2211, %v2203
        %v2692 = vpack.c.bf16 %v2212, %v2204
        %v2693 = vpack.c.bf16 %v2213, %v2205
        %v2694 = vpack.c.bf16 %v2214, %v2206
        %v2695 = vpack.c.bf16 %v2215, %v2207
        %v2696 = vpack.c.bf16 %v2224, %v2216
        %v2697 = vpack.c.bf16 %v2225, %v2217
        %v2698 = vpack.c.bf16 %v2226, %v2218
        %v2699 = vpack.c.bf16 %v2227, %v2219
        %v2700 = vpack.c.bf16 %v2228, %v2220
        %v2701 = vpack.c.bf16 %v2229, %v2221
        %v2702 = vpack.c.bf16 %v2230, %v2222
        %v2703 = vpack.c.bf16 %v2231, %v2223
        %v2704 = vpack.c.bf16 %v2240, %v2232
        %v2705 = vpack.c.bf16 %v2241, %v2233
        %v2706 = vpack.c.bf16 %v2242, %v2234
        %v2707 = vpack.c.bf16 %v2243, %v2235
        %v2708 = vpack.c.bf16 %v2244, %v2236
        %v2709 = vpack.c.bf16 %v2245, %v2237
        %v2710 = vpack.c.bf16 %v2246, %v2238
        %v2711 = vpack.c.bf16 %v2247, %v2239
        %v2712 = vpack.c.bf16 %v2256, %v2248
        %v2713 = vpack.c.bf16 %v2257, %v2249
        %v2714 = vpack.c.bf16 %v2258, %v2250
        %v2715 = vpack.c.bf16 %v2259, %v2251
        %v2716 = vpack.c.bf16 %v2260, %v2252
        %v2717 = vpack.c.bf16 %v2261, %v2253
        %v2718 = vpack.c.bf16 %v2262, %v2254
        %v2719 = vpack.c.bf16 %v2263, %v2255
        %v2720 = vpack.c.bf16 %v2272, %v2264
        %v2721 = vpack.c.bf16 %v2273, %v2265
        %v2722 = vpack.c.bf16 %v2274, %v2266
        %v2723 = vpack.c.bf16 %v2275, %v2267
        %v2724 = vpack.c.bf16 %v2276, %v2268
        %v2725 = vpack.c.bf16 %v2277, %v2269
        %v2726 = vpack.c.bf16 %v2278, %v2270
        %v2727 = vpack.c.bf16 %v2279, %v2271
        %v2728 = vpack.c.bf16 %v2288, %v2280
        %v2729 = vpack.c.bf16 %v2289, %v2281
        %v2730 = vpack.c.bf16 %v2290, %v2282
        %v2731 = vpack.c.bf16 %v2291, %v2283
        %v2732 = vpack.c.bf16 %v2292, %v2284
        %v2733 = vpack.c.bf16 %v2293, %v2285
        %v2734 = vpack.c.bf16 %v2294, %v2286
        %v2735 = vpack.c.bf16 %v2295, %v2287
        %v2736 = vpack.c.bf16 %v2304, %v2296
        %v2737 = vpack.c.bf16 %v2305, %v2297
        %v2738 = vpack.c.bf16 %v2306, %v2298
        %v2739 = vpack.c.bf16 %v2307, %v2299
        %v2740 = vpack.c.bf16 %v2308, %v2300
        %v2741 = vpack.c.bf16 %v2309, %v2301
        %v2742 = vpack.c.bf16 %v2310, %v2302
        %v2743 = vpack.c.bf16 %v2311, %v2303
        %v2744 = vpack.c.bf16 %v2320, %v2312
        %v2745 = vpack.c.bf16 %v2321, %v2313
        %v2746 = vpack.c.bf16 %v2322, %v2314
        %v2747 = vpack.c.bf16 %v2323, %v2315
        %v2748 = vpack.c.bf16 %v2324, %v2316
        %v2749 = vpack.c.bf16 %v2325, %v2317
        %v2750 = vpack.c.bf16 %v2326, %v2318
        %v2751 = vpack.c.bf16 %v2327, %v2319
        %v2752 = vpack.c.bf16 %v2336, %v2328
        %v2753 = vpack.c.bf16 %v2337, %v2329
        %v2754 = vpack.c.bf16 %v2338, %v2330
        %v2755 = vpack.c.bf16 %v2339, %v2331
        %v2756 = vpack.c.bf16 %v2340, %v2332
        %v2757 = vpack.c.bf16 %v2341, %v2333
        %v2758 = vpack.c.bf16 %v2342, %v2334
        %v2759 = vpack.c.bf16 %v2343, %v2335
        %v2760 = vpack.c.bf16 %v2352, %v2344
        %v2761 = vpack.c.bf16 %v2353, %v2345
        %v2762 = vpack.c.bf16 %v2354, %v2346
        %v2763 = vpack.c.bf16 %v2355, %v2347
        %v2764 = vpack.c.bf16 %v2356, %v2348
        %v2765 = vpack.c.bf16 %v2357, %v2349
        %v2766 = vpack.c.bf16 %v2358, %v2350
        %v2767 = vpack.c.bf16 %v2359, %v2351
        %v2768 = vpack.c.bf16 %v2368, %v2360
        %v2769 = vpack.c.bf16 %v2369, %v2361
        %v2770 = vpack.c.bf16 %v2370, %v2362
        %v2771 = vpack.c.bf16 %v2371, %v2363
        %v2772 = vpack.c.bf16 %v2372, %v2364
        %v2773 = vpack.c.bf16 %v2373, %v2365
        %v2774 = vpack.c.bf16 %v2374, %v2366
        %v2775 = vpack.c.bf16 %v2375, %v2367
        %v2776 = vpack.c.bf16 %v2384, %v2376
        %v2777 = vpack.c.bf16 %v2385, %v2377
        %v2778 = vpack.c.bf16 %v2386, %v2378
        %v2779 = vpack.c.bf16 %v2387, %v2379
        %v2780 = vpack.c.bf16 %v2388, %v2380
        %v2781 = vpack.c.bf16 %v2389, %v2381
        %v2782 = vpack.c.bf16 %v2390, %v2382
        %v2783 = vpack.c.bf16 %v2391, %v2383
        %v2784 = vpack.c.bf16 %v2400, %v2392
        %v2785 = vpack.c.bf16 %v2401, %v2393
        %v2786 = vpack.c.bf16 %v2402, %v2394
        %v2787 = vpack.c.bf16 %v2403, %v2395
        %v2788 = vpack.c.bf16 %v2404, %v2396
        %v2789 = vpack.c.bf16 %v2405, %v2397
        %v2790 = vpack.c.bf16 %v2406, %v2398
        %v2791 = vpack.c.bf16 %v2407, %v2399
        %v2792 = vpack.c.bf16 %v2416, %v2408
        %v2793 = vpack.c.bf16 %v2417, %v2409
        %v2794 = vpack.c.bf16 %v2418, %v2410
        %v2795 = vpack.c.bf16 %v2419, %v2411
        %v2796 = vpack.c.bf16 %v2420, %v2412
        %v2797 = vpack.c.bf16 %v2421, %v2413
        %v2798 = vpack.c.bf16 %v2422, %v2414
        %v2799 = vpack.c.bf16 %v2423, %v2415
        %v2800 = vpack.c.bf16 %v2432, %v2424
        %v2801 = vpack.c.bf16 %v2433, %v2425
        %v2802 = vpack.c.bf16 %v2434, %v2426
        %v2803 = vpack.c.bf16 %v2435, %v2427
        %v2804 = vpack.c.bf16 %v2436, %v2428
        %v2805 = vpack.c.bf16 %v2437, %v2429
        %v2806 = vpack.c.bf16 %v2438, %v2430
        %v2807 = vpack.c.bf16 %v2439, %v2431
        %v2808 = vpack.c.bf16 %v2448, %v2440
        %v2809 = vpack.c.bf16 %v2449, %v2441
        %v2810 = vpack.c.bf16 %v2450, %v2442
        %v2811 = vpack.c.bf16 %v2451, %v2443
        %v2812 = vpack.c.bf16 %v2452, %v2444
        %v2813 = vpack.c.bf16 %v2453, %v2445
        %v2814 = vpack.c.bf16 %v2454, %v2446
        %v2815 = vpack.c.bf16 %v2455, %v2447
        %v2816 = vpack.c.bf16 %v2464, %v2456
        %v2817 = vpack.c.bf16 %v2465, %v2457
        %v2818 = vpack.c.bf16 %v2466, %v2458
        %v2819 = vpack.c.bf16 %v2467, %v2459
        %v2820 = vpack.c.bf16 %v2468, %v2460
        %v2821 = vpack.c.bf16 %v2469, %v2461
        %v2822 = vpack.c.bf16 %v2470, %v2462
        %v2823 = vpack.c.bf16 %v2471, %v2463
        %v2824 = vpack.c.bf16 %v2480, %v2472
        %v2825 = vpack.c.bf16 %v2481, %v2473
        %v2826 = vpack.c.bf16 %v2482, %v2474
        %v2827 = vpack.c.bf16 %v2483, %v2475
        %v2828 = vpack.c.bf16 %v2484, %v2476
        %v2829 = vpack.c.bf16 %v2485, %v2477
        %v2830 = vpack.c.bf16 %v2486, %v2478
        %v2831 = vpack.c.bf16 %v2487, %v2479
        %v2832 = vpack.c.bf16 %v2496, %v2488
        %v2833 = vpack.c.bf16 %v2497, %v2489
        %v2834 = vpack.c.bf16 %v2498, %v2490
        %v2835 = vpack.c.bf16 %v2499, %v2491
        %v2836 = vpack.c.bf16 %v2500, %v2492
        %v2837 = vpack.c.bf16 %v2501, %v2493
        %v2838 = vpack.c.bf16 %v2502, %v2494
        %v2839 = vpack.c.bf16 %v2503, %v2495
        %v2840 = vpack.c.bf16 %v2512, %v2504
        %v2841 = vpack.c.bf16 %v2513, %v2505
        %v2842 = vpack.c.bf16 %v2514, %v2506
        %v2843 = vpack.c.bf16 %v2515, %v2507
        %v2844 = vpack.c.bf16 %v2516, %v2508
        %v2845 = vpack.c.bf16 %v2517, %v2509
        %v2846 = vpack.c.bf16 %v2518, %v2510
        %v2847 = vpack.c.bf16 %v2519, %v2511
        %v2848 = vpack.c.bf16 %v2528, %v2520
        %v2849 = vpack.c.bf16 %v2529, %v2521
        %v2850 = vpack.c.bf16 %v2530, %v2522
        %v2851 = vpack.c.bf16 %v2531, %v2523
        %v2852 = vpack.c.bf16 %v2532, %v2524
        %v2853 = vpack.c.bf16 %v2533, %v2525
        %v2854 = vpack.c.bf16 %v2534, %v2526
        %v2855 = vpack.c.bf16 %v2535, %v2527
        %v2856 = vpack.c.bf16 %v2544, %v2536
        %v2857 = vpack.c.bf16 %v2545, %v2537
        %v2858 = vpack.c.bf16 %v2546, %v2538
        %v2859 = vpack.c.bf16 %v2547, %v2539
        %v2860 = vpack.c.bf16 %v2548, %v2540
        %v2861 = vpack.c.bf16 %v2549, %v2541
        %v2862 = vpack.c.bf16 %v2550, %v2542
        %v2863 = vpack.c.bf16 %v2551, %v2543
        %v2864 = vpack.c.bf16 %v2560, %v2552
        %v2865 = vpack.c.bf16 %v2561, %v2553
        %v2866 = vpack.c.bf16 %v2562, %v2554
        %v2867 = vpack.c.bf16 %v2563, %v2555
        %v2868 = vpack.c.bf16 %v2564, %v2556
        %v2869 = vpack.c.bf16 %v2565, %v2557
        %v2870 = vpack.c.bf16 %v2566, %v2558
        %v2871 = vpack.c.bf16 %v2567, %v2559
        %v2872 = vpack.c.bf16 %v2576, %v2568
        %v2873 = vpack.c.bf16 %v2577, %v2569
        %v2874 = vpack.c.bf16 %v2578, %v2570
        %v2875 = vpack.c.bf16 %v2579, %v2571
        %v2876 = vpack.c.bf16 %v2580, %v2572
        %v2877 = vpack.c.bf16 %v2581, %v2573
        %v2878 = vpack.c.bf16 %v2582, %v2574
        %v2879 = vpack.c.bf16 %v2583, %v2575
        %v2880 = vpack.c.bf16 %v2592, %v2584
        %v2881 = vpack.c.bf16 %v2593, %v2585
        %v2882 = vpack.c.bf16 %v2594, %v2586
        %v2883 = vpack.c.bf16 %v2595, %v2587
        %v2884 = vpack.c.bf16 %v2596, %v2588
        %v2885 = vpack.c.bf16 %v2597, %v2589
        %v2886 = vpack.c.bf16 %v2598, %v2590
        %v2887 = vpack.c.bf16 %v2599, %v2591
        %v2888 = vpack.c.bf16 %v2608, %v2600
        %v2889 = vpack.c.bf16 %v2609, %v2601
        %v2890 = vpack.c.bf16 %v2610, %v2602
        %v2891 = vpack.c.bf16 %v2611, %v2603
        %v2892 = vpack.c.bf16 %v2612, %v2604
        %v2893 = vpack.c.bf16 %v2613, %v2605
        %v2894 = vpack.c.bf16 %v2614, %v2606
        %v2895 = vpack.c.bf16 %v2615, %v2607
        %v2896 = vpack.c.bf16 %v2624, %v2616
        %v2897 = vpack.c.bf16 %v2625, %v2617
        %v2898 = vpack.c.bf16 %v2626, %v2618
        %v2899 = vpack.c.bf16 %v2627, %v2619
        %v2900 = vpack.c.bf16 %v2628, %v2620
        %v2901 = vpack.c.bf16 %v2629, %v2621
        %v2902 = vpack.c.bf16 %v2630, %v2622
        %v2903 = vpack.c.bf16 %v2631, %v2623
        %v2904 = vpack.c.bf16 %v2640, %v2632
        %v2905 = vpack.c.bf16 %v2641, %v2633
        %v2906 = vpack.c.bf16 %v2642, %v2634
        %v2907 = vpack.c.bf16 %v2643, %v2635
        %v2908 = vpack.c.bf16 %v2644, %v2636
        %v2909 = vpack.c.bf16 %v2645, %v2637
        %v2910 = vpack.c.bf16 %v2646, %v2638
        %v2911 = vpack.c.bf16 %v2647, %v2639
        %v2912 = vpack.c.bf16 %v2656, %v2648
        %v2913 = vpack.c.bf16 %v2657, %v2649
        %v2914 = vpack.c.bf16 %v2658, %v2650
        %v2915 = vpack.c.bf16 %v2659, %v2651
        %v2916 = vpack.c.bf16 %v2660, %v2652
        %v2917 = vpack.c.bf16 %v2661, %v2653
        %v2918 = vpack.c.bf16 %v2662, %v2654
        %v2919 = vpack.c.bf16 %v2663, %v2655
        %v2920 = vld [vmem:[#allocation6] sm:$0xff]
        %v2921 = vld [vmem:[#allocation6 + $0x8] sm:$0xff]
        %v2922 = vld [vmem:[#allocation6 + $0x10] sm:$0xff]
        %v2923 = vld [vmem:[#allocation6 + $0x18] sm:$0xff]
        %v2924 = vld [vmem:[#allocation6 + $0x20] sm:$0xff]
        %v2925 = vld [vmem:[#allocation6 + $0x28] sm:$0xff]
        %v2926 = vld [vmem:[#allocation6 + $0x30] sm:$0xff]
        %v2927 = vld [vmem:[#allocation6 + $0x38] sm:$0xff]
        %v2928 = vld [vmem:[#allocation6 + $0x40] sm:$0xff]
        %v2929 = vld [vmem:[#allocation6 + $0x48] sm:$0xff]
        %v2930 = vld [vmem:[#allocation6 + $0x50] sm:$0xff]
        %v2931 = vld [vmem:[#allocation6 + $0x58] sm:$0xff]
        %v2932 = vld [vmem:[#allocation6 + $0x60] sm:$0xff]
        %v2933 = vld [vmem:[#allocation6 + $0x68] sm:$0xff]
        %v2934 = vld [vmem:[#allocation6 + $0x70] sm:$0xff]
        %v2935 = vld [vmem:[#allocation6 + $0x78] sm:$0xff]
        %v2936 = vld [vmem:[#allocation6 + $0x80] sm:$0xff]
        %v2937 = vld [vmem:[#allocation6 + $0x88] sm:$0xff]
        %v2938 = vld [vmem:[#allocation6 + $0x90] sm:$0xff]
        %v2939 = vld [vmem:[#allocation6 + $0x98] sm:$0xff]
        %v2940 = vld [vmem:[#allocation6 + $0xa0] sm:$0xff]
        %v2941 = vld [vmem:[#allocation6 + $0xa8] sm:$0xff]
        %v2942 = vld [vmem:[#allocation6 + $0xb0] sm:$0xff]
        %v2943 = vld [vmem:[#allocation6 + $0xb8] sm:$0xff]
        %v2944 = vld [vmem:[#allocation6 + $0xc0] sm:$0xff]
        %v2945 = vld [vmem:[#allocation6 + $0xc8] sm:$0xff]
        %v2946 = vld [vmem:[#allocation6 + $0xd0] sm:$0xff]
        %v2947 = vld [vmem:[#allocation6 + $0xd8] sm:$0xff]
        %v2948 = vld [vmem:[#allocation6 + $0xe0] sm:$0xff]
        %v2949 = vld [vmem:[#allocation6 + $0xe8] sm:$0xff]
        %v2950 = vld [vmem:[#allocation6 + $0xf0] sm:$0xff]
        %v2951 = vld [vmem:[#allocation6 + $0xf8] sm:$0xff]
        %v2952 = vld [vmem:[#allocation6 + $0x100] sm:$0xff]
        %v2953 = vld [vmem:[#allocation6 + $0x108] sm:$0xff]
        %v2954 = vld [vmem:[#allocation6 + $0x110] sm:$0xff]
        %v2955 = vld [vmem:[#allocation6 + $0x118] sm:$0xff]
        %v2956 = vld [vmem:[#allocation6 + $0x120] sm:$0xff]
        %v2957 = vld [vmem:[#allocation6 + $0x128] sm:$0xff]
        %v2958 = vld [vmem:[#allocation6 + $0x130] sm:$0xff]
        %v2959 = vld [vmem:[#allocation6 + $0x138] sm:$0xff]
        %v2960 = vld [vmem:[#allocation6 + $0x140] sm:$0xff]
        %v2961 = vld [vmem:[#allocation6 + $0x148] sm:$0xff]
        %v2962 = vld [vmem:[#allocation6 + $0x150] sm:$0xff]
        %v2963 = vld [vmem:[#allocation6 + $0x158] sm:$0xff]
        %v2964 = vld [vmem:[#allocation6 + $0x160] sm:$0xff]
        %v2965 = vld [vmem:[#allocation6 + $0x168] sm:$0xff]
        %v2966 = vld [vmem:[#allocation6 + $0x170] sm:$0xff]
        %v2967 = vld [vmem:[#allocation6 + $0x178] sm:$0xff]
        %v2968 = vld [vmem:[#allocation6 + $0x180] sm:$0xff]
        %v2969 = vld [vmem:[#allocation6 + $0x188] sm:$0xff]
        %v2970 = vld [vmem:[#allocation6 + $0x190] sm:$0xff]
        %v2971 = vld [vmem:[#allocation6 + $0x198] sm:$0xff]
        %v2972 = vld [vmem:[#allocation6 + $0x1a0] sm:$0xff]
        %v2973 = vld [vmem:[#allocation6 + $0x1a8] sm:$0xff]
        %v2974 = vld [vmem:[#allocation6 + $0x1b0] sm:$0xff]
        %v2975 = vld [vmem:[#allocation6 + $0x1b8] sm:$0xff]
        %v2976 = vld [vmem:[#allocation6 + $0x1c0] sm:$0xff]
        %v2977 = vld [vmem:[#allocation6 + $0x1c8] sm:$0xff]
        %v2978 = vld [vmem:[#allocation6 + $0x1d0] sm:$0xff]
        %v2979 = vld [vmem:[#allocation6 + $0x1d8] sm:$0xff]
        %v2980 = vld [vmem:[#allocation6 + $0x1e0] sm:$0xff]
        %v2981 = vld [vmem:[#allocation6 + $0x1e8] sm:$0xff]
        %v2982 = vld [vmem:[#allocation6 + $0x1f0] sm:$0xff]
        %v2983 = vld [vmem:[#allocation6 + $0x1f8] sm:$0xff]
        %v2984 = vld [vmem:[#allocation6 + $0x200] sm:$0xff]
        %v2985 = vld [vmem:[#allocation6 + $0x208] sm:$0xff]
        %v2986 = vld [vmem:[#allocation6 + $0x210] sm:$0xff]
        %v2987 = vld [vmem:[#allocation6 + $0x218] sm:$0xff]
        %v2988 = vld [vmem:[#allocation6 + $0x220] sm:$0xff]
        %v2989 = vld [vmem:[#allocation6 + $0x228] sm:$0xff]
        %v2990 = vld [vmem:[#allocation6 + $0x230] sm:$0xff]
        %v2991 = vld [vmem:[#allocation6 + $0x238] sm:$0xff]
        %v2992 = vld [vmem:[#allocation6 + $0x240] sm:$0xff]
        %v2993 = vld [vmem:[#allocation6 + $0x248] sm:$0xff]
        %v2994 = vld [vmem:[#allocation6 + $0x250] sm:$0xff]
        %v2995 = vld [vmem:[#allocation6 + $0x258] sm:$0xff]
        %v2996 = vld [vmem:[#allocation6 + $0x260] sm:$0xff]
        %v2997 = vld [vmem:[#allocation6 + $0x268] sm:$0xff]
        %v2998 = vld [vmem:[#allocation6 + $0x270] sm:$0xff]
        %v2999 = vld [vmem:[#allocation6 + $0x278] sm:$0xff]
        %v3000 = vld [vmem:[#allocation6 + $0x280] sm:$0xff]
        %v3001 = vld [vmem:[#allocation6 + $0x288] sm:$0xff]
        %v3002 = vld [vmem:[#allocation6 + $0x290] sm:$0xff]
        %v3003 = vld [vmem:[#allocation6 + $0x298] sm:$0xff]
        %v3004 = vld [vmem:[#allocation6 + $0x2a0] sm:$0xff]
        %v3005 = vld [vmem:[#allocation6 + $0x2a8] sm:$0xff]
        %v3006 = vld [vmem:[#allocation6 + $0x2b0] sm:$0xff]
        %v3007 = vld [vmem:[#allocation6 + $0x2b8] sm:$0xff]
        %v3008 = vld [vmem:[#allocation6 + $0x2c0] sm:$0xff]
        %v3009 = vld [vmem:[#allocation6 + $0x2c8] sm:$0xff]
        %v3010 = vld [vmem:[#allocation6 + $0x2d0] sm:$0xff]
        %v3011 = vld [vmem:[#allocation6 + $0x2d8] sm:$0xff]
        %v3012 = vld [vmem:[#allocation6 + $0x2e0] sm:$0xff]
        %v3013 = vld [vmem:[#allocation6 + $0x2e8] sm:$0xff]
        %v3014 = vld [vmem:[#allocation6 + $0x2f0] sm:$0xff]
        %v3015 = vld [vmem:[#allocation6 + $0x2f8] sm:$0xff]
        %v3016 = vld [vmem:[#allocation6 + $0x300] sm:$0xff]
        %v3017 = vld [vmem:[#allocation6 + $0x308] sm:$0xff]
        %v3018 = vld [vmem:[#allocation6 + $0x310] sm:$0xff]
        %v3019 = vld [vmem:[#allocation6 + $0x318] sm:$0xff]
        %v3020 = vld [vmem:[#allocation6 + $0x320] sm:$0xff]
        %v3021 = vld [vmem:[#allocation6 + $0x328] sm:$0xff]
        %v3022 = vld [vmem:[#allocation6 + $0x330] sm:$0xff]
        %v3023 = vld [vmem:[#allocation6 + $0x338] sm:$0xff]
        %v3024 = vld [vmem:[#allocation6 + $0x340] sm:$0xff]
        %v3025 = vld [vmem:[#allocation6 + $0x348] sm:$0xff]
        %v3026 = vld [vmem:[#allocation6 + $0x350] sm:$0xff]
        %v3027 = vld [vmem:[#allocation6 + $0x358] sm:$0xff]
        %v3028 = vld [vmem:[#allocation6 + $0x360] sm:$0xff]
        %v3029 = vld [vmem:[#allocation6 + $0x368] sm:$0xff]
        %v3030 = vld [vmem:[#allocation6 + $0x370] sm:$0xff]
        %v3031 = vld [vmem:[#allocation6 + $0x378] sm:$0xff]
        %v3032 = vld [vmem:[#allocation6 + $0x380] sm:$0xff]
        %v3033 = vld [vmem:[#allocation6 + $0x388] sm:$0xff]
        %v3034 = vld [vmem:[#allocation6 + $0x390] sm:$0xff]
        %v3035 = vld [vmem:[#allocation6 + $0x398] sm:$0xff]
        %v3036 = vld [vmem:[#allocation6 + $0x3a0] sm:$0xff]
        %v3037 = vld [vmem:[#allocation6 + $0x3a8] sm:$0xff]
        %v3038 = vld [vmem:[#allocation6 + $0x3b0] sm:$0xff]
        %v3039 = vld [vmem:[#allocation6 + $0x3b8] sm:$0xff]
        %v3040 = vld [vmem:[#allocation6 + $0x3c0] sm:$0xff]
        %v3041 = vld [vmem:[#allocation6 + $0x3c8] sm:$0xff]
        %v3042 = vld [vmem:[#allocation6 + $0x3d0] sm:$0xff]
        %v3043 = vld [vmem:[#allocation6 + $0x3d8] sm:$0xff]
        %v3044 = vld [vmem:[#allocation6 + $0x3e0] sm:$0xff]
        %v3045 = vld [vmem:[#allocation6 + $0x3e8] sm:$0xff]
        %v3046 = vld [vmem:[#allocation6 + $0x3f0] sm:$0xff]
        %v3047 = vld [vmem:[#allocation6 + $0x3f8] sm:$0xff]
        %v3048 = vld [vmem:[%s3] sm:$0x3]
        %v3050 = vlaneseq
        %v3051 = vshrl.u32 %v3050, 7
        %v3052 = vsub.s32 0, %v3051
        %v3053 = vrot.slane %v3048, %v3052
        %v3054 = vlaneseq
        %v3055 = vshrl.u32 %v3054, 7
        %v3056 = vsub.s32 1, %v3055
        %v3057 = vrot.slane %v3048, %v3056
        %v3188 = vunpack.c.l.b16 %v2920
        %v3189 = vunpack.c.h.b16 %v2920
        %v3190 = vunpack.c.l.b16 %v2921
        %v3191 = vunpack.c.h.b16 %v2921
        %v3192 = vunpack.c.l.b16 %v2922
        %v3193 = vunpack.c.h.b16 %v2922
        %v3194 = vunpack.c.l.b16 %v2923
        %v3195 = vunpack.c.h.b16 %v2923
        %v3196 = vunpack.c.l.b16 %v2924
        %v3197 = vunpack.c.h.b16 %v2924
        %v3198 = vunpack.c.l.b16 %v2925
        %v3199 = vunpack.c.h.b16 %v2925
        %v3200 = vunpack.c.l.b16 %v2926
        %v3201 = vunpack.c.h.b16 %v2926
        %v3202 = vunpack.c.l.b16 %v2927
        %v3203 = vunpack.c.h.b16 %v2927
        %v3204 = vunpack.c.l.b16 %v2928
        %v3205 = vunpack.c.h.b16 %v2928
        %v3206 = vunpack.c.l.b16 %v2929
        %v3207 = vunpack.c.h.b16 %v2929
        %v3208 = vunpack.c.l.b16 %v2930
        %v3209 = vunpack.c.h.b16 %v2930
        %v3210 = vunpack.c.l.b16 %v2931
        %v3211 = vunpack.c.h.b16 %v2931
        %v3212 = vunpack.c.l.b16 %v2932
        %v3213 = vunpack.c.h.b16 %v2932
        %v3214 = vunpack.c.l.b16 %v2933
        %v3215 = vunpack.c.h.b16 %v2933
        %v3216 = vunpack.c.l.b16 %v2934
        %v3217 = vunpack.c.h.b16 %v2934
        %v3218 = vunpack.c.l.b16 %v2935
        %v3219 = vunpack.c.h.b16 %v2935
        %v3220 = vunpack.c.l.b16 %v2936
        %v3221 = vunpack.c.h.b16 %v2936
        %v3222 = vunpack.c.l.b16 %v2937
        %v3223 = vunpack.c.h.b16 %v2937
        %v3224 = vunpack.c.l.b16 %v2938
        %v3225 = vunpack.c.h.b16 %v2938
        %v3226 = vunpack.c.l.b16 %v2939
        %v3227 = vunpack.c.h.b16 %v2939
        %v3228 = vunpack.c.l.b16 %v2940
        %v3229 = vunpack.c.h.b16 %v2940
        %v3230 = vunpack.c.l.b16 %v2941
        %v3231 = vunpack.c.h.b16 %v2941
        %v3232 = vunpack.c.l.b16 %v2942
        %v3233 = vunpack.c.h.b16 %v2942
        %v3234 = vunpack.c.l.b16 %v2943
        %v3235 = vunpack.c.h.b16 %v2943
        %v3236 = vunpack.c.l.b16 %v2944
        %v3237 = vunpack.c.h.b16 %v2944
        %v3238 = vunpack.c.l.b16 %v2945
        %v3239 = vunpack.c.h.b16 %v2945
        %v3240 = vunpack.c.l.b16 %v2946
        %v3241 = vunpack.c.h.b16 %v2946
        %v3242 = vunpack.c.l.b16 %v2947
        %v3243 = vunpack.c.h.b16 %v2947
        %v3244 = vunpack.c.l.b16 %v2948
        %v3245 = vunpack.c.h.b16 %v2948
        %v3246 = vunpack.c.l.b16 %v2949
        %v3247 = vunpack.c.h.b16 %v2949
        %v3248 = vunpack.c.l.b16 %v2950
        %v3249 = vunpack.c.h.b16 %v2950
        %v3250 = vunpack.c.l.b16 %v2951
        %v3251 = vunpack.c.h.b16 %v2951
        %v3252 = vunpack.c.l.b16 %v2952
        %v3253 = vunpack.c.h.b16 %v2952
        %v3254 = vunpack.c.l.b16 %v2953
        %v3255 = vunpack.c.h.b16 %v2953
        %v3256 = vunpack.c.l.b16 %v2954
        %v3257 = vunpack.c.h.b16 %v2954
        %v3258 = vunpack.c.l.b16 %v2955
        %v3259 = vunpack.c.h.b16 %v2955
        %v3260 = vunpack.c.l.b16 %v2956
        %v3261 = vunpack.c.h.b16 %v2956
        %v3262 = vunpack.c.l.b16 %v2957
        %v3263 = vunpack.c.h.b16 %v2957
        %v3264 = vunpack.c.l.b16 %v2958
        %v3265 = vunpack.c.h.b16 %v2958
        %v3266 = vunpack.c.l.b16 %v2959
        %v3267 = vunpack.c.h.b16 %v2959
        %v3268 = vunpack.c.l.b16 %v2960
        %v3269 = vunpack.c.h.b16 %v2960
        %v3270 = vunpack.c.l.b16 %v2961
        %v3271 = vunpack.c.h.b16 %v2961
        %v3272 = vunpack.c.l.b16 %v2962
        %v3273 = vunpack.c.h.b16 %v2962
        %v3274 = vunpack.c.l.b16 %v2963
        %v3275 = vunpack.c.h.b16 %v2963
        %v3276 = vunpack.c.l.b16 %v2964
        %v3277 = vunpack.c.h.b16 %v2964
        %v3278 = vunpack.c.l.b16 %v2965
        %v3279 = vunpack.c.h.b16 %v2965
        %v3280 = vunpack.c.l.b16 %v2966
        %v3281 = vunpack.c.h.b16 %v2966
        %v3282 = vunpack.c.l.b16 %v2967
        %v3283 = vunpack.c.h.b16 %v2967
        %v3284 = vunpack.c.l.b16 %v2968
        %v3285 = vunpack.c.h.b16 %v2968
        %v3286 = vunpack.c.l.b16 %v2969
        %v3287 = vunpack.c.h.b16 %v2969
        %v3288 = vunpack.c.l.b16 %v2970
        %v3289 = vunpack.c.h.b16 %v2970
        %v3290 = vunpack.c.l.b16 %v2971
        %v3291 = vunpack.c.h.b16 %v2971
        %v3292 = vunpack.c.l.b16 %v2972
        %v3293 = vunpack.c.h.b16 %v2972
        %v3294 = vunpack.c.l.b16 %v2973
        %v3295 = vunpack.c.h.b16 %v2973
        %v3296 = vunpack.c.l.b16 %v2974
        %v3297 = vunpack.c.h.b16 %v2974
        %v3298 = vunpack.c.l.b16 %v2975
        %v3299 = vunpack.c.h.b16 %v2975
        %v3300 = vunpack.c.l.b16 %v2976
        %v3301 = vunpack.c.h.b16 %v2976
        %v3302 = vunpack.c.l.b16 %v2977
        %v3303 = vunpack.c.h.b16 %v2977
        %v3304 = vunpack.c.l.b16 %v2978
        %v3305 = vunpack.c.h.b16 %v2978
        %v3306 = vunpack.c.l.b16 %v2979
        %v3307 = vunpack.c.h.b16 %v2979
        %v3308 = vunpack.c.l.b16 %v2980
        %v3309 = vunpack.c.h.b16 %v2980
        %v3310 = vunpack.c.l.b16 %v2981
        %v3311 = vunpack.c.h.b16 %v2981
        %v3312 = vunpack.c.l.b16 %v2982
        %v3313 = vunpack.c.h.b16 %v2982
        %v3314 = vunpack.c.l.b16 %v2983
        %v3315 = vunpack.c.h.b16 %v2983
        %v3316 = vunpack.c.l.b16 %v2984
        %v3317 = vunpack.c.h.b16 %v2984
        %v3318 = vunpack.c.l.b16 %v2985
        %v3319 = vunpack.c.h.b16 %v2985
        %v3320 = vunpack.c.l.b16 %v2986
        %v3321 = vunpack.c.h.b16 %v2986
        %v3322 = vunpack.c.l.b16 %v2987
        %v3323 = vunpack.c.h.b16 %v2987
        %v3324 = vunpack.c.l.b16 %v2988
        %v3325 = vunpack.c.h.b16 %v2988
        %v3326 = vunpack.c.l.b16 %v2989
        %v3327 = vunpack.c.h.b16 %v2989
        %v3328 = vunpack.c.l.b16 %v2990
        %v3329 = vunpack.c.h.b16 %v2990
        %v3330 = vunpack.c.l.b16 %v2991
        %v3331 = vunpack.c.h.b16 %v2991
        %v3332 = vunpack.c.l.b16 %v2992
        %v3333 = vunpack.c.h.b16 %v2992
        %v3334 = vunpack.c.l.b16 %v2993
        %v3335 = vunpack.c.h.b16 %v2993
        %v3336 = vunpack.c.l.b16 %v2994
        %v3337 = vunpack.c.h.b16 %v2994
        %v3338 = vunpack.c.l.b16 %v2995
        %v3339 = vunpack.c.h.b16 %v2995
        %v3340 = vunpack.c.l.b16 %v2996
        %v3341 = vunpack.c.h.b16 %v2996
        %v3342 = vunpack.c.l.b16 %v2997
        %v3343 = vunpack.c.h.b16 %v2997
        %v3344 = vunpack.c.l.b16 %v2998
        %v3345 = vunpack.c.h.b16 %v2998
        %v3346 = vunpack.c.l.b16 %v2999
        %v3347 = vunpack.c.h.b16 %v2999
        %v3348 = vunpack.c.l.b16 %v3000
        %v3349 = vunpack.c.h.b16 %v3000
        %v3350 = vunpack.c.l.b16 %v3001
        %v3351 = vunpack.c.h.b16 %v3001
        %v3352 = vunpack.c.l.b16 %v3002
        %v3353 = vunpack.c.h.b16 %v3002
        %v3354 = vunpack.c.l.b16 %v3003
        %v3355 = vunpack.c.h.b16 %v3003
        %v3356 = vunpack.c.l.b16 %v3004
        %v3357 = vunpack.c.h.b16 %v3004
        %v3358 = vunpack.c.l.b16 %v3005
        %v3359 = vunpack.c.h.b16 %v3005
        %v3360 = vunpack.c.l.b16 %v3006
        %v3361 = vunpack.c.h.b16 %v3006
        %v3362 = vunpack.c.l.b16 %v3007
        %v3363 = vunpack.c.h.b16 %v3007
        %v3364 = vunpack.c.l.b16 %v3008
        %v3365 = vunpack.c.h.b16 %v3008
        %v3366 = vunpack.c.l.b16 %v3009
        %v3367 = vunpack.c.h.b16 %v3009
        %v3368 = vunpack.c.l.b16 %v3010
        %v3369 = vunpack.c.h.b16 %v3010
        %v3370 = vunpack.c.l.b16 %v3011
        %v3371 = vunpack.c.h.b16 %v3011
        %v3372 = vunpack.c.l.b16 %v3012
        %v3373 = vunpack.c.h.b16 %v3012
        %v3374 = vunpack.c.l.b16 %v3013
        %v3375 = vunpack.c.h.b16 %v3013
        %v3376 = vunpack.c.l.b16 %v3014
        %v3377 = vunpack.c.h.b16 %v3014
        %v3378 = vunpack.c.l.b16 %v3015
        %v3379 = vunpack.c.h.b16 %v3015
        %v3380 = vunpack.c.l.b16 %v3016
        %v3381 = vunpack.c.h.b16 %v3016
        %v3382 = vunpack.c.l.b16 %v3017
        %v3383 = vunpack.c.h.b16 %v3017
        %v3384 = vunpack.c.l.b16 %v3018
        %v3385 = vunpack.c.h.b16 %v3018
        %v3386 = vunpack.c.l.b16 %v3019
        %v3387 = vunpack.c.h.b16 %v3019
        %v3388 = vunpack.c.l.b16 %v3020
        %v3389 = vunpack.c.h.b16 %v3020
        %v3390 = vunpack.c.l.b16 %v3021
        %v3391 = vunpack.c.h.b16 %v3021
        %v3392 = vunpack.c.l.b16 %v3022
        %v3393 = vunpack.c.h.b16 %v3022
        %v3394 = vunpack.c.l.b16 %v3023
        %v3395 = vunpack.c.h.b16 %v3023
        %v3396 = vunpack.c.l.b16 %v3024
        %v3397 = vunpack.c.h.b16 %v3024
        %v3398 = vunpack.c.l.b16 %v3025
        %v3399 = vunpack.c.h.b16 %v3025
        %v3400 = vunpack.c.l.b16 %v3026
        %v3401 = vunpack.c.h.b16 %v3026
        %v3402 = vunpack.c.l.b16 %v3027
        %v3403 = vunpack.c.h.b16 %v3027
        %v3404 = vunpack.c.l.b16 %v3028
        %v3405 = vunpack.c.h.b16 %v3028
        %v3406 = vunpack.c.l.b16 %v3029
        %v3407 = vunpack.c.h.b16 %v3029
        %v3408 = vunpack.c.l.b16 %v3030
        %v3409 = vunpack.c.h.b16 %v3030
        %v3410 = vunpack.c.l.b16 %v3031
        %v3411 = vunpack.c.h.b16 %v3031
        %v3412 = vunpack.c.l.b16 %v3032
        %v3413 = vunpack.c.h.b16 %v3032
        %v3414 = vunpack.c.l.b16 %v3033
        %v3415 = vunpack.c.h.b16 %v3033
        %v3416 = vunpack.c.l.b16 %v3034
        %v3417 = vunpack.c.h.b16 %v3034
        %v3418 = vunpack.c.l.b16 %v3035
        %v3419 = vunpack.c.h.b16 %v3035
        %v3420 = vunpack.c.l.b16 %v3036
        %v3421 = vunpack.c.h.b16 %v3036
        %v3422 = vunpack.c.l.b16 %v3037
        %v3423 = vunpack.c.h.b16 %v3037
        %v3424 = vunpack.c.l.b16 %v3038
        %v3425 = vunpack.c.h.b16 %v3038
        %v3426 = vunpack.c.l.b16 %v3039
        %v3427 = vunpack.c.h.b16 %v3039
        %v3428 = vunpack.c.l.b16 %v3040
        %v3429 = vunpack.c.h.b16 %v3040
        %v3430 = vunpack.c.l.b16 %v3041
        %v3431 = vunpack.c.h.b16 %v3041
        %v3432 = vunpack.c.l.b16 %v3042
        %v3433 = vunpack.c.h.b16 %v3042
        %v3434 = vunpack.c.l.b16 %v3043
        %v3435 = vunpack.c.h.b16 %v3043
        %v3436 = vunpack.c.l.b16 %v3044
        %v3437 = vunpack.c.h.b16 %v3044
        %v3438 = vunpack.c.l.b16 %v3045
        %v3439 = vunpack.c.h.b16 %v3045
        %v3440 = vunpack.c.l.b16 %v3046
        %v3441 = vunpack.c.h.b16 %v3046
        %v3442 = vunpack.c.l.b16 %v3047
        %v3443 = vunpack.c.h.b16 %v3047
        %v3444 = vpack.c.b16 %v3190, %v3188
        %v3445 = vpack.c.b16 %v3191, %v3189
        %v3446 = vpack.c.b16 %v3194, %v3192
        %v3447 = vpack.c.b16 %v3195, %v3193
        %v3448 = vpack.c.b16 %v3198, %v3196
        %v3449 = vpack.c.b16 %v3199, %v3197
        %v3450 = vpack.c.b16 %v3202, %v3200
        %v3451 = vpack.c.b16 %v3203, %v3201
        %v3452 = vpack.c.b16 %v3206, %v3204
        %v3453 = vpack.c.b16 %v3207, %v3205
        %v3454 = vpack.c.b16 %v3210, %v3208
        %v3455 = vpack.c.b16 %v3211, %v3209
        %v3456 = vpack.c.b16 %v3214, %v3212
        %v3457 = vpack.c.b16 %v3215, %v3213
        %v3458 = vpack.c.b16 %v3218, %v3216
        %v3459 = vpack.c.b16 %v3219, %v3217
        %v3460 = vpack.c.b16 %v3222, %v3220
        %v3461 = vpack.c.b16 %v3223, %v3221
        %v3462 = vpack.c.b16 %v3226, %v3224
        %v3463 = vpack.c.b16 %v3227, %v3225
        %v3464 = vpack.c.b16 %v3230, %v3228
        %v3465 = vpack.c.b16 %v3231, %v3229
        %v3466 = vpack.c.b16 %v3234, %v3232
        %v3467 = vpack.c.b16 %v3235, %v3233
        %v3468 = vpack.c.b16 %v3238, %v3236
        %v3469 = vpack.c.b16 %v3239, %v3237
        %v3470 = vpack.c.b16 %v3242, %v3240
        %v3471 = vpack.c.b16 %v3243, %v3241
        %v3472 = vpack.c.b16 %v3246, %v3244
        %v3473 = vpack.c.b16 %v3247, %v3245
        %v3474 = vpack.c.b16 %v3250, %v3248
        %v3475 = vpack.c.b16 %v3251, %v3249
        %v3476 = vpack.c.b16 %v3254, %v3252
        %v3477 = vpack.c.b16 %v3255, %v3253
        %v3478 = vpack.c.b16 %v3258, %v3256
        %v3479 = vpack.c.b16 %v3259, %v3257
        %v3480 = vpack.c.b16 %v3262, %v3260
        %v3481 = vpack.c.b16 %v3263, %v3261
        %v3482 = vpack.c.b16 %v3266, %v3264
        %v3483 = vpack.c.b16 %v3267, %v3265
        %v3484 = vpack.c.b16 %v3270, %v3268
        %v3485 = vpack.c.b16 %v3271, %v3269
        %v3486 = vpack.c.b16 %v3274, %v3272
        %v3487 = vpack.c.b16 %v3275, %v3273
        %v3488 = vpack.c.b16 %v3278, %v3276
        %v3489 = vpack.c.b16 %v3279, %v3277
        %v3490 = vpack.c.b16 %v3282, %v3280
        %v3491 = vpack.c.b16 %v3283, %v3281
        %v3492 = vpack.c.b16 %v3286, %v3284
        %v3493 = vpack.c.b16 %v3287, %v3285
        %v3494 = vpack.c.b16 %v3290, %v3288
        %v3495 = vpack.c.b16 %v3291, %v3289
        %v3496 = vpack.c.b16 %v3294, %v3292
        %v3497 = vpack.c.b16 %v3295, %v3293
        %v3498 = vpack.c.b16 %v3298, %v3296
        %v3499 = vpack.c.b16 %v3299, %v3297
        %v3500 = vpack.c.b16 %v3302, %v3300
        %v3501 = vpack.c.b16 %v3303, %v3301
        %v3502 = vpack.c.b16 %v3306, %v3304
        %v3503 = vpack.c.b16 %v3307, %v3305
        %v3504 = vpack.c.b16 %v3310, %v3308
        %v3505 = vpack.c.b16 %v3311, %v3309
        %v3506 = vpack.c.b16 %v3314, %v3312
        %v3507 = vpack.c.b16 %v3315, %v3313
        %v3508 = vpack.c.b16 %v3318, %v3316
        %v3509 = vpack.c.b16 %v3319, %v3317
        %v3510 = vpack.c.b16 %v3322, %v3320
        %v3511 = vpack.c.b16 %v3323, %v3321
        %v3512 = vpack.c.b16 %v3326, %v3324
        %v3513 = vpack.c.b16 %v3327, %v3325
        %v3514 = vpack.c.b16 %v3330, %v3328
        %v3515 = vpack.c.b16 %v3331, %v3329
        %v3516 = vpack.c.b16 %v3334, %v3332
        %v3517 = vpack.c.b16 %v3335, %v3333
        %v3518 = vpack.c.b16 %v3338, %v3336
        %v3519 = vpack.c.b16 %v3339, %v3337
        %v3520 = vpack.c.b16 %v3342, %v3340
        %v3521 = vpack.c.b16 %v3343, %v3341
        %v3522 = vpack.c.b16 %v3346, %v3344
        %v3523 = vpack.c.b16 %v3347, %v3345
        %v3524 = vpack.c.b16 %v3350, %v3348
        %v3525 = vpack.c.b16 %v3351, %v3349
        %v3526 = vpack.c.b16 %v3354, %v3352
        %v3527 = vpack.c.b16 %v3355, %v3353
        %v3528 = vpack.c.b16 %v3358, %v3356
        %v3529 = vpack.c.b16 %v3359, %v3357
        %v3530 = vpack.c.b16 %v3362, %v3360
        %v3531 = vpack.c.b16 %v3363, %v3361
        %v3532 = vpack.c.b16 %v3366, %v3364
        %v3533 = vpack.c.b16 %v3367, %v3365
        %v3534 = vpack.c.b16 %v3370, %v3368
        %v3535 = vpack.c.b16 %v3371, %v3369
        %v3536 = vpack.c.b16 %v3374, %v3372
        %v3537 = vpack.c.b16 %v3375, %v3373
        %v3538 = vpack.c.b16 %v3378, %v3376
        %v3539 = vpack.c.b16 %v3379, %v3377
        %v3540 = vpack.c.b16 %v3382, %v3380
        %v3541 = vpack.c.b16 %v3383, %v3381
        %v3542 = vpack.c.b16 %v3386, %v3384
        %v3543 = vpack.c.b16 %v3387, %v3385
        %v3544 = vpack.c.b16 %v3390, %v3388
        %v3545 = vpack.c.b16 %v3391, %v3389
        %v3546 = vpack.c.b16 %v3394, %v3392
        %v3547 = vpack.c.b16 %v3395, %v3393
        %v3548 = vpack.c.b16 %v3398, %v3396
        %v3549 = vpack.c.b16 %v3399, %v3397
        %v3550 = vpack.c.b16 %v3402, %v3400
        %v3551 = vpack.c.b16 %v3403, %v3401
        %v3552 = vpack.c.b16 %v3406, %v3404
        %v3553 = vpack.c.b16 %v3407, %v3405
        %v3554 = vpack.c.b16 %v3410, %v3408
        %v3555 = vpack.c.b16 %v3411, %v3409
        %v3556 = vpack.c.b16 %v3414, %v3412
        %v3557 = vpack.c.b16 %v3415, %v3413
        %v3558 = vpack.c.b16 %v3418, %v3416
        %v3559 = vpack.c.b16 %v3419, %v3417
        %v3560 = vpack.c.b16 %v3422, %v3420
        %v3561 = vpack.c.b16 %v3423, %v3421
        %v3562 = vpack.c.b16 %v3426, %v3424
        %v3563 = vpack.c.b16 %v3427, %v3425
        %v3564 = vpack.c.b16 %v3430, %v3428
        %v3565 = vpack.c.b16 %v3431, %v3429
        %v3566 = vpack.c.b16 %v3434, %v3432
        %v3567 = vpack.c.b16 %v3435, %v3433
        %v3568 = vpack.c.b16 %v3438, %v3436
        %v3569 = vpack.c.b16 %v3439, %v3437
        %v3570 = vpack.c.b16 %v3442, %v3440
        %v3571 = vpack.c.b16 %v3443, %v3441
        %3700 = vmatprep.subr.bf16.mxu0 %v3445
        %3701 = vmatpush1.bf16.msra.mxu0 %v3444
        %3702 = vmatprep.subr.bf16.mxu0 %v3447
        %3703 = vmatpush1.bf16.msra.mxu0 %v3446
        %3704 = vmatprep.subr.bf16.mxu0 %v3449
        %3705 = vmatpush1.bf16.msra.mxu0 %v3448
        %3706 = vmatprep.subr.bf16.mxu0 %v3451
        %3707 = vmatpush1.bf16.msra.mxu0 %v3450
        %3708 = vmatprep.subr.bf16.mxu0 %v3453
        %3709 = vmatpush1.bf16.msra.mxu0 %v3452
        %3710 = vmatprep.subr.bf16.mxu0 %v3455
        %3711 = vmatpush1.bf16.msra.mxu0 %v3454
        %3712 = vmatprep.subr.bf16.mxu0 %v3457
        %3713 = vmatpush1.bf16.msra.mxu0 %v3456
        %3714 = vmatprep.subr.bf16.mxu0 %v3459
        %3715 = vmatpush1.bf16.msra.mxu0 %v3458
        %3716 = vmatprep.subr.bf16.mxu0 %v3461
        %3717 = vmatpush1.bf16.msra.mxu0 %v3460
        %3718 = vmatprep.subr.bf16.mxu0 %v3463
        %3719 = vmatpush1.bf16.msra.mxu0 %v3462
        %3720 = vmatprep.subr.bf16.mxu0 %v3465
        %3721 = vmatpush1.bf16.msra.mxu0 %v3464
        %3722 = vmatprep.subr.bf16.mxu0 %v3467
        %3723 = vmatpush1.bf16.msra.mxu0 %v3466
        %3724 = vmatprep.subr.bf16.mxu0 %v3469
        %3725 = vmatpush1.bf16.msra.mxu0 %v3468
        %3726 = vmatprep.subr.bf16.mxu0 %v3471
        %3727 = vmatpush1.bf16.msra.mxu0 %v3470
        %3728 = vmatprep.subr.bf16.mxu0 %v3473
        %3729 = vmatpush1.bf16.msra.mxu0 %v3472
        %3730 = vmatprep.subr.bf16.mxu0 %v3475
        %3731 = vmatpush1.bf16.msra.mxu0 %v3474
        %3732 = vmatprep.mubr.bf16.mxu0 %v2665
        %3733 = vmatmul.mubr.bf16.gmra.mrb[0].mxu0 %v2664
        %v3734 = vpop.f32.mrb[0].mxu0
        %v3735 = vadd.f32 %v3053, %v3734
        %v3736 = vpop.f32.mrb[0].mxu0
        %v3737 = vadd.f32 %v3057, %v3736
        %v3738 = vpop.f32.mrb[0].mxu0
        %v3739 = vadd.f32 %v3053, %v3738
        %v3740 = vpop.f32.mrb[0].mxu0
        %v3741 = vadd.f32 %v3057, %v3740
        %3742 = vmatprep.mubr.bf16.mxu0 %v2673
        %3743 = vmatmul.mubr.bf16.gmra.mrb[0].mxu0 %v2672
        %v3744 = vpop.f32.mrb[0].mxu0
        %v3745 = vadd.f32 %v3053, %v3744
        %v3746 = vpop.f32.mrb[0].mxu0
        %v3747 = vadd.f32 %v3057, %v3746
        %v3748 = vpop.f32.mrb[0].mxu0
        %v3749 = vadd.f32 %v3053, %v3748
        %v3750 = vpop.f32.mrb[0].mxu0
        %v3751 = vadd.f32 %v3057, %v3750
        %3752 = vmatprep.mubr.bf16.mxu0 %v2681
        %3753 = vmatmul.mubr.bf16.gmra.mrb[0].mxu0 %v2680
        %v3754 = vpop.f32.mrb[0].mxu0
        %v3755 = vadd.f32 %v3053, %v3754
        %v3756 = vpop.f32.mrb[0].mxu0
        %v3757 = vadd.f32 %v3057, %v3756
        %v3758 = vpop.f32.mrb[0].mxu0
        %v3759 = vadd.f32 %v3053, %v3758
        %v3760 = vpop.f32.mrb[0].mxu0
        %v3761 = vadd.f32 %v3057, %v3760
        %3762 = vmatprep.mubr.bf16.mxu0 %v2689
        %3763 = vmatmul.mubr.bf16.gmra.mrb[0].mxu0 %v2688
        %v3764 = vpop.f32.mrb[0].mxu0
        %v3765 = vadd.f32 %v3053, %v3764
        %v3766 = vpop.f32.mrb[0].mxu0
        %v3767 = vadd.f32 %v3057, %v3766
        %v3768 = vpop.f32.mrb[0].mxu0
        %v3769 = vadd.f32 %v3053, %v3768
        %v3770 = vpop.f32.mrb[0].mxu0
        %v3771 = vadd.f32 %v3057, %v3770
        %3772 = vmatprep.mubr.bf16.mxu0 %v2697
        %3773 = vmatmul.mubr.bf16.gmra.mrb[0].mxu0 %v2696
        %v3774 = vpop.f32.mrb[0].mxu0
        %v3775 = vadd.f32 %v3053, %v3774
        %v3776 = vpop.f32.mrb[0].mxu0
        %v3777 = vadd.f32 %v3057, %v3776
        %v3778 = vpop.f32.mrb[0].mxu0
        %v3779 = vadd.f32 %v3053, %v3778
        %v3780 = vpop.f32.mrb[0].mxu0
        %v3781 = vadd.f32 %v3057, %v3780
        %3782 = vmatprep.mubr.bf16.mxu0 %v2705
        %3783 = vmatmul.mubr.bf16.gmra.mrb[0].mxu0 %v2704
        %v3784 = vpop.f32.mrb[0].mxu0
        %v3785 = vadd.f32 %v3053, %v3784
        %v3786 = vpop.f32.mrb[0].mxu0
        %v3787 = vadd.f32 %v3057, %v3786
        %v3788 = vpop.f32.mrb[0].mxu0
        %v3789 = vadd.f32 %v3053, %v3788
        %v3790 = vpop.f32.mrb[0].mxu0
        %v3791 = vadd.f32 %v3057, %v3790
        %3792 = vmatprep.mubr.bf16.mxu0 %v2713
        %3793 = vmatmul.mubr.bf16.gmra.mrb[0].mxu0 %v2712
        %v3794 = vpop.f32.mrb[0].mxu0
        %v3795 = vadd.f32 %v3053, %v3794
        %v3796 = vpop.f32.mrb[0].mxu0
        %v3797 = vadd.f32 %v3057, %v3796
        %v3798 = vpop.f32.mrb[0].mxu0
        %v3799 = vadd.f32 %v3053, %v3798
        %v3800 = vpop.f32.mrb[0].mxu0
        %v3801 = vadd.f32 %v3057, %v3800
        %3802 = vmatprep.mubr.bf16.mxu0 %v2721
        %3803 = vmatmul.mubr.bf16.gmra.mrb[0].mxu0 %v2720
        %v3804 = vpop.f32.mrb[0].mxu0
        %v3805 = vadd.f32 %v3053, %v3804
        %v3806 = vpop.f32.mrb[0].mxu0
        %v3807 = vadd.f32 %v3057, %v3806
        %v3808 = vpop.f32.mrb[0].mxu0
        %v3809 = vadd.f32 %v3053, %v3808
        %v3810 = vpop.f32.mrb[0].mxu0
        %v3811 = vadd.f32 %v3057, %v3810
        %3812 = vmatprep.mubr.bf16.mxu0 %v2729
        %3813 = vmatmul.mubr.bf16.gmra.mrb[0].mxu0 %v2728
        %v3814 = vpop.f32.mrb[0].mxu0
        %v3815 = vadd.f32 %v3053, %v3814
        %v3816 = vpop.f32.mrb[0].mxu0
        %v3817 = vadd.f32 %v3057, %v3816
        %v3818 = vpop.f32.mrb[0].mxu0
        %v3819 = vadd.f32 %v3053, %v3818
        %v3820 = vpop.f32.mrb[0].mxu0
        %v3821 = vadd.f32 %v3057, %v3820
        %3822 = vmatprep.mubr.bf16.mxu0 %v2737
        %3823 = vmatmul.mubr.bf16.gmra.mrb[0].mxu0 %v2736
        %v3824 = vpop.f32.mrb[0].mxu0
        %v3825 = vadd.f32 %v3053, %v3824
        %v3826 = vpop.f32.mrb[0].mxu0
        %v3827 = vadd.f32 %v3057, %v3826
        %v3828 = vpop.f32.mrb[0].mxu0
        %v3829 = vadd.f32 %v3053, %v3828
        %v3830 = vpop.f32.mrb[0].mxu0
        %v3831 = vadd.f32 %v3057, %v3830
        %3832 = vmatprep.mubr.bf16.mxu0 %v2745
        %3833 = vmatmul.mubr.bf16.gmra.mrb[0].mxu0 %v2744
        %v3834 = vpop.f32.mrb[0].mxu0
        %v3835 = vadd.f32 %v3053, %v3834
        %v3836 = vpop.f32.mrb[0].mxu0
        %v3837 = vadd.f32 %v3057, %v3836
        %v3838 = vpop.f32.mrb[0].mxu0
        %v3839 = vadd.f32 %v3053, %v3838
        %v3840 = vpop.f32.mrb[0].mxu0
        %v3841 = vadd.f32 %v3057, %v3840
        %3842 = vmatprep.mubr.bf16.mxu0 %v2753
        %3843 = vmatmul.mubr.bf16.gmra.mrb[0].mxu0 %v2752
        %v3844 = vpop.f32.mrb[0].mxu0
        %v3845 = vadd.f32 %v3053, %v3844
        %v3846 = vpop.f32.mrb[0].mxu0
        %v3847 = vadd.f32 %v3057, %v3846
        %v3848 = vpop.f32.mrb[0].mxu0
        %v3849 = vadd.f32 %v3053, %v3848
        %v3850 = vpop.f32.mrb[0].mxu0
        %v3851 = vadd.f32 %v3057, %v3850
        %3852 = vmatprep.mubr.bf16.mxu0 %v2761
        %3853 = vmatmul.mubr.bf16.gmra.mrb[0].mxu0 %v2760
        %v3854 = vpop.f32.mrb[0].mxu0
        %v3855 = vadd.f32 %v3053, %v3854
        %v3856 = vpop.f32.mrb[0].mxu0
        %v3857 = vadd.f32 %v3057, %v3856
        %v3858 = vpop.f32.mrb[0].mxu0
        %v3859 = vadd.f32 %v3053, %v3858
        %v3860 = vpop.f32.mrb[0].mxu0
        %v3861 = vadd.f32 %v3057, %v3860
        %3862 = vmatprep.mubr.bf16.mxu0 %v2769
        %3863 = vmatmul.mubr.bf16.gmra.mrb[0].mxu0 %v2768
        %v3864 = vpop.f32.mrb[0].mxu0
        %v3865 = vadd.f32 %v3053, %v3864
        %v3866 = vpop.f32.mrb[0].mxu0
        %v3867 = vadd.f32 %v3057, %v3866
        %v3868 = vpop.f32.mrb[0].mxu0
        %v3869 = vadd.f32 %v3053, %v3868
        %v3870 = vpop.f32.mrb[0].mxu0
        %v3871 = vadd.f32 %v3057, %v3870
        %3872 = vmatprep.mubr.bf16.mxu0 %v2777
        %3873 = vmatmul.mubr.bf16.gmra.mrb[0].mxu0 %v2776
        %v3874 = vpop.f32.mrb[0].mxu0
        %v3875 = vadd.f32 %v3053, %v3874
        %v3876 = vpop.f32.mrb[0].mxu0
        %v3877 = vadd.f32 %v3057, %v3876
        %v3878 = vpop.f32.mrb[0].mxu0
        %v3879 = vadd.f32 %v3053, %v3878
        %v3880 = vpop.f32.mrb[0].mxu0
        %v3881 = vadd.f32 %v3057, %v3880
        %3882 = vmatprep.mubr.bf16.mxu0 %v2785
        %3883 = vmatmul.mubr.bf16.gmra.mrb[0].mxu0 %v2784
        %v3884 = vpop.f32.mrb[0].mxu0
        %v3885 = vadd.f32 %v3053, %v3884
        %v3886 = vpop.f32.mrb[0].mxu0
        %v3887 = vadd.f32 %v3057, %v3886
        %v3888 = vpop.f32.mrb[0].mxu0
        %v3889 = vadd.f32 %v3053, %v3888
        %v3890 = vpop.f32.mrb[0].mxu0
        %v3891 = vadd.f32 %v3057, %v3890
        %3892 = vmatprep.mubr.bf16.mxu0 %v2793
        %3893 = vmatmul.mubr.bf16.gmra.mrb[0].mxu0 %v2792
        %v3894 = vpop.f32.mrb[0].mxu0
        %v3895 = vadd.f32 %v3053, %v3894
        %v3896 = vpop.f32.mrb[0].mxu0
        %v3897 = vadd.f32 %v3057, %v3896
        %v3898 = vpop.f32.mrb[0].mxu0
        %v3899 = vadd.f32 %v3053, %v3898
        %v3900 = vpop.f32.mrb[0].mxu0
        %v3901 = vadd.f32 %v3057, %v3900
        %3902 = vmatprep.mubr.bf16.mxu0 %v2801
        %3903 = vmatmul.mubr.bf16.gmra.mrb[0].mxu0 %v2800
        %v3904 = vpop.f32.mrb[0].mxu0
        %v3905 = vadd.f32 %v3053, %v3904
        %v3906 = vpop.f32.mrb[0].mxu0
        %v3907 = vadd.f32 %v3057, %v3906
        %v3908 = vpop.f32.mrb[0].mxu0
        %v3909 = vadd.f32 %v3053, %v3908
        %v3910 = vpop.f32.mrb[0].mxu0
        %v3911 = vadd.f32 %v3057, %v3910
        %3912 = vmatprep.mubr.bf16.mxu0 %v2809
        %3913 = vmatmul.mubr.bf16.gmra.mrb[0].mxu0 %v2808
        %v3914 = vpop.f32.mrb[0].mxu0
        %v3915 = vadd.f32 %v3053, %v3914
        %v3916 = vpop.f32.mrb[0].mxu0
        %v3917 = vadd.f32 %v3057, %v3916
        %v3918 = vpop.f32.mrb[0].mxu0
        %v3919 = vadd.f32 %v3053, %v3918
        %v3920 = vpop.f32.mrb[0].mxu0
        %v3921 = vadd.f32 %v3057, %v3920
        %3922 = vmatprep.mubr.bf16.mxu0 %v2817
        %3923 = vmatmul.mubr.bf16.gmra.mrb[0].mxu0 %v2816
        %v3924 = vpop.f32.mrb[0].mxu0
        %v3925 = vadd.f32 %v3053, %v3924
        %v3926 = vpop.f32.mrb[0].mxu0
        %v3927 = vadd.f32 %v3057, %v3926
        %v3928 = vpop.f32.mrb[0].mxu0
        %v3929 = vadd.f32 %v3053, %v3928
        %v3930 = vpop.f32.mrb[0].mxu0
        %v3931 = vadd.f32 %v3057, %v3930
        %3932 = vmatprep.mubr.bf16.mxu0 %v2825
        %3933 = vmatmul.mubr.bf16.gmra.mrb[0].mxu0 %v2824
        %v3934 = vpop.f32.mrb[0].mxu0
        %v3935 = vadd.f32 %v3053, %v3934
        %v3936 = vpop.f32.mrb[0].mxu0
        %v3937 = vadd.f32 %v3057, %v3936
        %v3938 = vpop.f32.mrb[0].mxu0
        %v3939 = vadd.f32 %v3053, %v3938
        %v3940 = vpop.f32.mrb[0].mxu0
        %v3941 = vadd.f32 %v3057, %v3940
        %3942 = vmatprep.mubr.bf16.mxu0 %v2833
        %3943 = vmatmul.mubr.bf16.gmra.mrb[0].mxu0 %v2832
        %v3944 = vpop.f32.mrb[0].mxu0
        %v3945 = vadd.f32 %v3053, %v3944
        %v3946 = vpop.f32.mrb[0].mxu0
        %v3947 = vadd.f32 %v3057, %v3946
        %v3948 = vpop.f32.mrb[0].mxu0
        %v3949 = vadd.f32 %v3053, %v3948
        %v3950 = vpop.f32.mrb[0].mxu0
        %v3951 = vadd.f32 %v3057, %v3950
        %3952 = vmatprep.mubr.bf16.mxu0 %v2841
        %3953 = vmatmul.mubr.bf16.gmra.mrb[0].mxu0 %v2840
        %v3954 = vpop.f32.mrb[0].mxu0
        %v3955 = vadd.f32 %v3053, %v3954
        %v3956 = vpop.f32.mrb[0].mxu0
        %v3957 = vadd.f32 %v3057, %v3956
        %v3958 = vpop.f32.mrb[0].mxu0
        %v3959 = vadd.f32 %v3053, %v3958
        %v3960 = vpop.f32.mrb[0].mxu0
        %v3961 = vadd.f32 %v3057, %v3960
        %3962 = vmatprep.mubr.bf16.mxu0 %v2849
        %3963 = vmatmul.mubr.bf16.gmra.mrb[0].mxu0 %v2848
        %v3964 = vpop.f32.mrb[0].mxu0
        %v3965 = vadd.f32 %v3053, %v3964
        %v3966 = vpop.f32.mrb[0].mxu0
        %v3967 = vadd.f32 %v3057, %v3966
        %v3968 = vpop.f32.mrb[0].mxu0
        %v3969 = vadd.f32 %v3053, %v3968
        %v3970 = vpop.f32.mrb[0].mxu0
        %v3971 = vadd.f32 %v3057, %v3970
        %3972 = vmatprep.mubr.bf16.mxu0 %v2857
        %3973 = vmatmul.mubr.bf16.gmra.mrb[0].mxu0 %v2856
        %v3974 = vpop.f32.mrb[0].mxu0
        %v3975 = vadd.f32 %v3053, %v3974
        %v3976 = vpop.f32.mrb[0].mxu0
        %v3977 = vadd.f32 %v3057, %v3976
        %v3978 = vpop.f32.mrb[0].mxu0
        %v3979 = vadd.f32 %v3053, %v3978
        %v3980 = vpop.f32.mrb[0].mxu0
        %v3981 = vadd.f32 %v3057, %v3980
        %3982 = vmatprep.mubr.bf16.mxu0 %v2865
        %3983 = vmatmul.mubr.bf16.gmra.mrb[0].mxu0 %v2864
        %v3984 = vpop.f32.mrb[0].mxu0
        %v3985 = vadd.f32 %v3053, %v3984
        %v3986 = vpop.f32.mrb[0].mxu0
        %v3987 = vadd.f32 %v3057, %v3986
        %v3988 = vpop.f32.mrb[0].mxu0
        %v3989 = vadd.f32 %v3053, %v3988
        %v3990 = vpop.f32.mrb[0].mxu0
        %v3991 = vadd.f32 %v3057, %v3990
        %3992 = vmatprep.mubr.bf16.mxu0 %v2873
        %3993 = vmatmul.mubr.bf16.gmra.mrb[0].mxu0 %v2872
        %v3994 = vpop.f32.mrb[0].mxu0
        %v3995 = vadd.f32 %v3053, %v3994
        %v3996 = vpop.f32.mrb[0].mxu0
        %v3997 = vadd.f32 %v3057, %v3996
        %v3998 = vpop.f32.mrb[0].mxu0
        %v3999 = vadd.f32 %v3053, %v3998
        %v4000 = vpop.f32.mrb[0].mxu0
        %v4001 = vadd.f32 %v3057, %v4000
        %4002 = vmatprep.mubr.bf16.mxu0 %v2881
        %4003 = vmatmul.mubr.bf16.gmra.mrb[0].mxu0 %v2880
        %v4004 = vpop.f32.mrb[0].mxu0
        %v4005 = vadd.f32 %v3053, %v4004
        %v4006 = vpop.f32.mrb[0].mxu0
        %v4007 = vadd.f32 %v3057, %v4006
        %v4008 = vpop.f32.mrb[0].mxu0
        %v4009 = vadd.f32 %v3053, %v4008
        %v4010 = vpop.f32.mrb[0].mxu0
        %v4011 = vadd.f32 %v3057, %v4010
        %4012 = vmatprep.mubr.bf16.mxu0 %v2889
        %4013 = vmatmul.mubr.bf16.gmra.mrb[0].mxu0 %v2888
        %v4014 = vpop.f32.mrb[0].mxu0
        %v4015 = vadd.f32 %v3053, %v4014
        %v4016 = vpop.f32.mrb[0].mxu0
        %v4017 = vadd.f32 %v3057, %v4016
        %v4018 = vpop.f32.mrb[0].mxu0
        %v4019 = vadd.f32 %v3053, %v4018
        %v4020 = vpop.f32.mrb[0].mxu0
        %v4021 = vadd.f32 %v3057, %v4020
        %4022 = vmatprep.mubr.bf16.mxu0 %v2897
        %4023 = vmatmul.mubr.bf16.gmra.mrb[0].mxu0 %v2896
        %v4024 = vpop.f32.mrb[0].mxu0
        %v4025 = vadd.f32 %v3053, %v4024
        %v4026 = vpop.f32.mrb[0].mxu0
        %v4027 = vadd.f32 %v3057, %v4026
        %v4028 = vpop.f32.mrb[0].mxu0
        %v4029 = vadd.f32 %v3053, %v4028
        %v4030 = vpop.f32.mrb[0].mxu0
        %v4031 = vadd.f32 %v3057, %v4030
        %4032 = vmatprep.mubr.bf16.mxu0 %v2905
        %4033 = vmatmul.mubr.bf16.gmra.mrb[0].mxu0 %v2904
        %v4034 = vpop.f32.mrb[0].mxu0
        %v4035 = vadd.f32 %v3053, %v4034
        %v4036 = vpop.f32.mrb[0].mxu0
        %v4037 = vadd.f32 %v3057, %v4036
        %v4038 = vpop.f32.mrb[0].mxu0
        %v4039 = vadd.f32 %v3053, %v4038
        %v4040 = vpop.f32.mrb[0].mxu0
        %v4041 = vadd.f32 %v3057, %v4040
        %4042 = vmatprep.mubr.bf16.mxu0 %v2913
        %4043 = vmatmul.mubr.bf16.gmra.mrb[0].mxu0 %v2912
        %v4044 = vpop.f32.mrb[0].mxu0
        %v4045 = vadd.f32 %v3053, %v4044
        %v4046 = vpop.f32.mrb[0].mxu0
        %v4047 = vadd.f32 %v3057, %v4046
        %v4048 = vpop.f32.mrb[0].mxu0
        %v4049 = vadd.f32 %v3053, %v4048
        %v4050 = vpop.f32.mrb[0].mxu0
        %v4051 = vadd.f32 %v3057, %v4050
        %4052 = vdwg.mxu0
        %4053 = vmatprep.subr.bf16.mxu0 %v3477
        %4054 = vmatpush1.bf16.msra.mxu0 %v3476
        %4055 = vmatprep.subr.bf16.mxu0 %v3479
        %4056 = vmatpush1.bf16.msra.mxu0 %v3478
        %4057 = vmatprep.subr.bf16.mxu0 %v3481
        %4058 = vmatpush1.bf16.msra.mxu0 %v3480
        %4059 = vmatprep.subr.bf16.mxu0 %v3483
        %4060 = vmatpush1.bf16.msra.mxu0 %v3482
        %4061 = vmatprep.subr.bf16.mxu0 %v3485
        %4062 = vmatpush1.bf16.msra.mxu0 %v3484
        %4063 = vmatprep.subr.bf16.mxu0 %v3487
        %4064 = vmatpush1.bf16.msra.mxu0 %v3486
        %4065 = vmatprep.subr.bf16.mxu0 %v3489
        %4066 = vmatpush1.bf16.msra.mxu0 %v3488
        %4067 = vmatprep.subr.bf16.mxu0 %v3491
        %4068 = vmatpush1.bf16.msra.mxu0 %v3490
        %4069 = vmatprep.subr.bf16.mxu0 %v3493
        %4070 = vmatpush1.bf16.msra.mxu0 %v3492
        %4071 = vmatprep.subr.bf16.mxu0 %v3495
        %4072 = vmatpush1.bf16.msra.mxu0 %v3494
        %4073 = vmatprep.subr.bf16.mxu0 %v3497
        %4074 = vmatpush1.bf16.msra.mxu0 %v3496
        %4075 = vmatprep.subr.bf16.mxu0 %v3499
        %4076 = vmatpush1.bf16.msra.mxu0 %v3498
        %4077 = vmatprep.subr.bf16.mxu0 %v3501
        %4078 = vmatpush1.bf16.msra.mxu0 %v3500
        %4079 = vmatprep.subr.bf16.mxu0 %v3503
        %4080 = vmatpush1.bf16.msra.mxu0 %v3502
        %4081 = vmatprep.subr.bf16.mxu0 %v3505
        %4082 = vmatpush1.bf16.msra.mxu0 %v3504
        %4083 = vmatprep.subr.bf16.mxu0 %v3507
        %4084 = vmatpush1.bf16.msra.mxu0 %v3506
        %4085 = vmatprep.mubr.bf16.mxu0 %v2667
        %4086 = vmatmul.mubr.bf16.gmra.mrb[0].mxu0 %v2666
        %v4087 = vpop.f32.mrb[0].mxu0
        %v4088 = vadd.f32 %v3735, %v4087
        %v4089 = vpop.f32.mrb[0].mxu0
        %v4090 = vadd.f32 %v3737, %v4089
        %v4091 = vpop.f32.mrb[0].mxu0
        %v4092 = vadd.f32 %v3739, %v4091
        %v4093 = vpop.f32.mrb[0].mxu0
        %v4094 = vadd.f32 %v3741, %v4093
        %4095 = vmatprep.mubr.bf16.mxu0 %v2675
        %4096 = vmatmul.mubr.bf16.gmra.mrb[0].mxu0 %v2674
        %v4097 = vpop.f32.mrb[0].mxu0
        %v4098 = vadd.f32 %v3745, %v4097
        %v4099 = vpop.f32.mrb[0].mxu0
        %v4100 = vadd.f32 %v3747, %v4099
        %v4101 = vpop.f32.mrb[0].mxu0
        %v4102 = vadd.f32 %v3749, %v4101
        %v4103 = vpop.f32.mrb[0].mxu0
        %v4104 = vadd.f32 %v3751, %v4103
        %4105 = vmatprep.mubr.bf16.mxu0 %v2683
        %4106 = vmatmul.mubr.bf16.gmra.mrb[0].mxu0 %v2682
        %v4107 = vpop.f32.mrb[0].mxu0
        %v4108 = vadd.f32 %v3755, %v4107
        %v4109 = vpop.f32.mrb[0].mxu0
        %v4110 = vadd.f32 %v3757, %v4109
        %v4111 = vpop.f32.mrb[0].mxu0
        %v4112 = vadd.f32 %v3759, %v4111
        %v4113 = vpop.f32.mrb[0].mxu0
        %v4114 = vadd.f32 %v3761, %v4113
        %4115 = vmatprep.mubr.bf16.mxu0 %v2691
        %4116 = vmatmul.mubr.bf16.gmra.mrb[0].mxu0 %v2690
        %v4117 = vpop.f32.mrb[0].mxu0
        %v4118 = vadd.f32 %v3765, %v4117
        %v4119 = vpop.f32.mrb[0].mxu0
        %v4120 = vadd.f32 %v3767, %v4119
        %v4121 = vpop.f32.mrb[0].mxu0
        %v4122 = vadd.f32 %v3769, %v4121
        %v4123 = vpop.f32.mrb[0].mxu0
        %v4124 = vadd.f32 %v3771, %v4123
        %4125 = vmatprep.mubr.bf16.mxu0 %v2699
        %4126 = vmatmul.mubr.bf16.gmra.mrb[0].mxu0 %v2698
        %v4127 = vpop.f32.mrb[0].mxu0
        %v4128 = vadd.f32 %v3775, %v4127
        %v4129 = vpop.f32.mrb[0].mxu0
        %v4130 = vadd.f32 %v3777, %v4129
        %v4131 = vpop.f32.mrb[0].mxu0
        %v4132 = vadd.f32 %v3779, %v4131
        %v4133 = vpop.f32.mrb[0].mxu0
        %v4134 = vadd.f32 %v3781, %v4133
        %4135 = vmatprep.mubr.bf16.mxu0 %v2707
        %4136 = vmatmul.mubr.bf16.gmra.mrb[0].mxu0 %v2706
        %v4137 = vpop.f32.mrb[0].mxu0
        %v4138 = vadd.f32 %v3785, %v4137
        %v4139 = vpop.f32.mrb[0].mxu0
        %v4140 = vadd.f32 %v3787, %v4139
        %v4141 = vpop.f32.mrb[0].mxu0
        %v4142 = vadd.f32 %v3789, %v4141
        %v4143 = vpop.f32.mrb[0].mxu0
        %v4144 = vadd.f32 %v3791, %v4143
        %4145 = vmatprep.mubr.bf16.mxu0 %v2715
        %4146 = vmatmul.mubr.bf16.gmra.mrb[0].mxu0 %v2714
        %v4147 = vpop.f32.mrb[0].mxu0
        %v4148 = vadd.f32 %v3795, %v4147
        %v4149 = vpop.f32.mrb[0].mxu0
        %v4150 = vadd.f32 %v3797, %v4149
        %v4151 = vpop.f32.mrb[0].mxu0
        %v4152 = vadd.f32 %v3799, %v4151
        %v4153 = vpop.f32.mrb[0].mxu0
        %v4154 = vadd.f32 %v3801, %v4153
        %4155 = vmatprep.mubr.bf16.mxu0 %v2723
        %4156 = vmatmul.mubr.bf16.gmra.mrb[0].mxu0 %v2722
        %v4157 = vpop.f32.mrb[0].mxu0
        %v4158 = vadd.f32 %v3805, %v4157
        %v4159 = vpop.f32.mrb[0].mxu0
        %v4160 = vadd.f32 %v3807, %v4159
        %v4161 = vpop.f32.mrb[0].mxu0
        %v4162 = vadd.f32 %v3809, %v4161
        %v4163 = vpop.f32.mrb[0].mxu0
        %v4164 = vadd.f32 %v3811, %v4163
        %4165 = vmatprep.mubr.bf16.mxu0 %v2731
        %4166 = vmatmul.mubr.bf16.gmra.mrb[0].mxu0 %v2730
        %v4167 = vpop.f32.mrb[0].mxu0
        %v4168 = vadd.f32 %v3815, %v4167
        %v4169 = vpop.f32.mrb[0].mxu0
        %v4170 = vadd.f32 %v3817, %v4169
        %v4171 = vpop.f32.mrb[0].mxu0
        %v4172 = vadd.f32 %v3819, %v4171
        %v4173 = vpop.f32.mrb[0].mxu0
        %v4174 = vadd.f32 %v3821, %v4173
        %4175 = vmatprep.mubr.bf16.mxu0 %v2739
        %4176 = vmatmul.mubr.bf16.gmra.mrb[0].mxu0 %v2738
        %v4177 = vpop.f32.mrb[0].mxu0
        %v4178 = vadd.f32 %v3825, %v4177
        %v4179 = vpop.f32.mrb[0].mxu0
        %v4180 = vadd.f32 %v3827, %v4179
        %v4181 = vpop.f32.mrb[0].mxu0
        %v4182 = vadd.f32 %v3829, %v4181
        %v4183 = vpop.f32.mrb[0].mxu0
        %v4184 = vadd.f32 %v3831, %v4183
        %4185 = vmatprep.mubr.bf16.mxu0 %v2747
        %4186 = vmatmul.mubr.bf16.gmra.mrb[0].mxu0 %v2746
        %v4187 = vpop.f32.mrb[0].mxu0
        %v4188 = vadd.f32 %v3835, %v4187
        %v4189 = vpop.f32.mrb[0].mxu0
        %v4190 = vadd.f32 %v3837, %v4189
        %v4191 = vpop.f32.mrb[0].mxu0
        %v4192 = vadd.f32 %v3839, %v4191
        %v4193 = vpop.f32.mrb[0].mxu0
        %v4194 = vadd.f32 %v3841, %v4193
        %4195 = vmatprep.mubr.bf16.mxu0 %v2755
        %4196 = vmatmul.mubr.bf16.gmra.mrb[0].mxu0 %v2754
        %v4197 = vpop.f32.mrb[0].mxu0
        %v4198 = vadd.f32 %v3845, %v4197
        %v4199 = vpop.f32.mrb[0].mxu0
        %v4200 = vadd.f32 %v3847, %v4199
        %v4201 = vpop.f32.mrb[0].mxu0
        %v4202 = vadd.f32 %v3849, %v4201
        %v4203 = vpop.f32.mrb[0].mxu0
        %v4204 = vadd.f32 %v3851, %v4203
        %4205 = vmatprep.mubr.bf16.mxu0 %v2763
        %4206 = vmatmul.mubr.bf16.gmra.mrb[0].mxu0 %v2762
        %v4207 = vpop.f32.mrb[0].mxu0
        %v4208 = vadd.f32 %v3855, %v4207
        %v4209 = vpop.f32.mrb[0].mxu0
        %v4210 = vadd.f32 %v3857, %v4209
        %v4211 = vpop.f32.mrb[0].mxu0
        %v4212 = vadd.f32 %v3859, %v4211
        %v4213 = vpop.f32.mrb[0].mxu0
        %v4214 = vadd.f32 %v3861, %v4213
        %4215 = vmatprep.mubr.bf16.mxu0 %v2771
        %4216 = vmatmul.mubr.bf16.gmra.mrb[0].mxu0 %v2770
        %v4217 = vpop.f32.mrb[0].mxu0
        %v4218 = vadd.f32 %v3865, %v4217
        %v4219 = vpop.f32.mrb[0].mxu0
        %v4220 = vadd.f32 %v3867, %v4219
        %v4221 = vpop.f32.mrb[0].mxu0
        %v4222 = vadd.f32 %v3869, %v4221
        %v4223 = vpop.f32.mrb[0].mxu0
        %v4224 = vadd.f32 %v3871, %v4223
        %4225 = vmatprep.mubr.bf16.mxu0 %v2779
        %4226 = vmatmul.mubr.bf16.gmra.mrb[0].mxu0 %v2778
        %v4227 = vpop.f32.mrb[0].mxu0
        %v4228 = vadd.f32 %v3875, %v4227
        %v4229 = vpop.f32.mrb[0].mxu0
        %v4230 = vadd.f32 %v3877, %v4229
        %v4231 = vpop.f32.mrb[0].mxu0
        %v4232 = vadd.f32 %v3879, %v4231
        %v4233 = vpop.f32.mrb[0].mxu0
        %v4234 = vadd.f32 %v3881, %v4233
        %4235 = vmatprep.mubr.bf16.mxu0 %v2787
        %4236 = vmatmul.mubr.bf16.gmra.mrb[0].mxu0 %v2786
        %v4237 = vpop.f32.mrb[0].mxu0
        %v4238 = vadd.f32 %v3885, %v4237
        %v4239 = vpop.f32.mrb[0].mxu0
        %v4240 = vadd.f32 %v3887, %v4239
        %v4241 = vpop.f32.mrb[0].mxu0
        %v4242 = vadd.f32 %v3889, %v4241
        %v4243 = vpop.f32.mrb[0].mxu0
        %v4244 = vadd.f32 %v3891, %v4243
        %4245 = vmatprep.mubr.bf16.mxu0 %v2795
        %4246 = vmatmul.mubr.bf16.gmra.mrb[0].mxu0 %v2794
        %v4247 = vpop.f32.mrb[0].mxu0
        %v4248 = vadd.f32 %v3895, %v4247
        %v4249 = vpop.f32.mrb[0].mxu0
        %v4250 = vadd.f32 %v3897, %v4249
        %v4251 = vpop.f32.mrb[0].mxu0
        %v4252 = vadd.f32 %v3899, %v4251
        %v4253 = vpop.f32.mrb[0].mxu0
        %v4254 = vadd.f32 %v3901, %v4253
        %4255 = vmatprep.mubr.bf16.mxu0 %v2803
        %4256 = vmatmul.mubr.bf16.gmra.mrb[0].mxu0 %v2802
        %v4257 = vpop.f32.mrb[0].mxu0
        %v4258 = vadd.f32 %v3905, %v4257
        %v4259 = vpop.f32.mrb[0].mxu0
        %v4260 = vadd.f32 %v3907, %v4259
        %v4261 = vpop.f32.mrb[0].mxu0
        %v4262 = vadd.f32 %v3909, %v4261
        %v4263 = vpop.f32.mrb[0].mxu0
        %v4264 = vadd.f32 %v3911, %v4263
        %4265 = vmatprep.mubr.bf16.mxu0 %v2811
        %4266 = vmatmul.mubr.bf16.gmra.mrb[0].mxu0 %v2810
        %v4267 = vpop.f32.mrb[0].mxu0
        %v4268 = vadd.f32 %v3915, %v4267
        %v4269 = vpop.f32.mrb[0].mxu0
        %v4270 = vadd.f32 %v3917, %v4269
        %v4271 = vpop.f32.mrb[0].mxu0
        %v4272 = vadd.f32 %v3919, %v4271
        %v4273 = vpop.f32.mrb[0].mxu0
        %v4274 = vadd.f32 %v3921, %v4273
        %4275 = vmatprep.mubr.bf16.mxu0 %v2819
        %4276 = vmatmul.mubr.bf16.gmra.mrb[0].mxu0 %v2818
        %v4277 = vpop.f32.mrb[0].mxu0
        %v4278 = vadd.f32 %v3925, %v4277
        %v4279 = vpop.f32.mrb[0].mxu0
        %v4280 = vadd.f32 %v3927, %v4279
        %v4281 = vpop.f32.mrb[0].mxu0
        %v4282 = vadd.f32 %v3929, %v4281
        %v4283 = vpop.f32.mrb[0].mxu0
        %v4284 = vadd.f32 %v3931, %v4283
        %4285 = vmatprep.mubr.bf16.mxu0 %v2827
        %4286 = vmatmul.mubr.bf16.gmra.mrb[0].mxu0 %v2826
        %v4287 = vpop.f32.mrb[0].mxu0
        %v4288 = vadd.f32 %v3935, %v4287
        %v4289 = vpop.f32.mrb[0].mxu0
        %v4290 = vadd.f32 %v3937, %v4289
        %v4291 = vpop.f32.mrb[0].mxu0
        %v4292 = vadd.f32 %v3939, %v4291
        %v4293 = vpop.f32.mrb[0].mxu0
        %v4294 = vadd.f32 %v3941, %v4293
        %4295 = vmatprep.mubr.bf16.mxu0 %v2835
        %4296 = vmatmul.mubr.bf16.gmra.mrb[0].mxu0 %v2834
        %v4297 = vpop.f32.mrb[0].mxu0
        %v4298 = vadd.f32 %v3945, %v4297
        %v4299 = vpop.f32.mrb[0].mxu0
        %v4300 = vadd.f32 %v3947, %v4299
        %v4301 = vpop.f32.mrb[0].mxu0
        %v4302 = vadd.f32 %v3949, %v4301
        %v4303 = vpop.f32.mrb[0].mxu0
        %v4304 = vadd.f32 %v3951, %v4303
        %4305 = vmatprep.mubr.bf16.mxu0 %v2843
        %4306 = vmatmul.mubr.bf16.gmra.mrb[0].mxu0 %v2842
        %v4307 = vpop.f32.mrb[0].mxu0
        %v4308 = vadd.f32 %v3955, %v4307
        %v4309 = vpop.f32.mrb[0].mxu0
        %v4310 = vadd.f32 %v3957, %v4309
        %v4311 = vpop.f32.mrb[0].mxu0
        %v4312 = vadd.f32 %v3959, %v4311
        %v4313 = vpop.f32.mrb[0].mxu0
        %v4314 = vadd.f32 %v3961, %v4313
        %4315 = vmatprep.mubr.bf16.mxu0 %v2851
        %4316 = vmatmul.mubr.bf16.gmra.mrb[0].mxu0 %v2850
        %v4317 = vpop.f32.mrb[0].mxu0
        %v4318 = vadd.f32 %v3965, %v4317
        %v4319 = vpop.f32.mrb[0].mxu0
        %v4320 = vadd.f32 %v3967, %v4319
        %v4321 = vpop.f32.mrb[0].mxu0
        %v4322 = vadd.f32 %v3969, %v4321
        %v4323 = vpop.f32.mrb[0].mxu0
        %v4324 = vadd.f32 %v3971, %v4323
        %4325 = vmatprep.mubr.bf16.mxu0 %v2859
        %4326 = vmatmul.mubr.bf16.gmra.mrb[0].mxu0 %v2858
        %v4327 = vpop.f32.mrb[0].mxu0
        %v4328 = vadd.f32 %v3975, %v4327
        %v4329 = vpop.f32.mrb[0].mxu0
        %v4330 = vadd.f32 %v3977, %v4329
        %v4331 = vpop.f32.mrb[0].mxu0
        %v4332 = vadd.f32 %v3979, %v4331
        %v4333 = vpop.f32.mrb[0].mxu0
        %v4334 = vadd.f32 %v3981, %v4333
        %4335 = vmatprep.mubr.bf16.mxu0 %v2867
        %4336 = vmatmul.mubr.bf16.gmra.mrb[0].mxu0 %v2866
        %v4337 = vpop.f32.mrb[0].mxu0
        %v4338 = vadd.f32 %v3985, %v4337
        %v4339 = vpop.f32.mrb[0].mxu0
        %v4340 = vadd.f32 %v3987, %v4339
        %v4341 = vpop.f32.mrb[0].mxu0
        %v4342 = vadd.f32 %v3989, %v4341
        %v4343 = vpop.f32.mrb[0].mxu0
        %v4344 = vadd.f32 %v3991, %v4343
        %4345 = vmatprep.mubr.bf16.mxu0 %v2875
        %4346 = vmatmul.mubr.bf16.gmra.mrb[0].mxu0 %v2874
        %v4347 = vpop.f32.mrb[0].mxu0
        %v4348 = vadd.f32 %v3995, %v4347
        %v4349 = vpop.f32.mrb[0].mxu0
        %v4350 = vadd.f32 %v3997, %v4349
        %v4351 = vpop.f32.mrb[0].mxu0
        %v4352 = vadd.f32 %v3999, %v4351
        %v4353 = vpop.f32.mrb[0].mxu0
        %v4354 = vadd.f32 %v4001, %v4353
        %4355 = vmatprep.mubr.bf16.mxu0 %v2883
        %4356 = vmatmul.mubr.bf16.gmra.mrb[0].mxu0 %v2882
        %v4357 = vpop.f32.mrb[0].mxu0
        %v4358 = vadd.f32 %v4005, %v4357
        %v4359 = vpop.f32.mrb[0].mxu0
        %v4360 = vadd.f32 %v4007, %v4359
        %v4361 = vpop.f32.mrb[0].mxu0
        %v4362 = vadd.f32 %v4009, %v4361
        %v4363 = vpop.f32.mrb[0].mxu0
        %v4364 = vadd.f32 %v4011, %v4363
        %4365 = vmatprep.mubr.bf16.mxu0 %v2891
        %4366 = vmatmul.mubr.bf16.gmra.mrb[0].mxu0 %v2890
        %v4367 = vpop.f32.mrb[0].mxu0
        %v4368 = vadd.f32 %v4015, %v4367
        %v4369 = vpop.f32.mrb[0].mxu0
        %v4370 = vadd.f32 %v4017, %v4369
        %v4371 = vpop.f32.mrb[0].mxu0
        %v4372 = vadd.f32 %v4019, %v4371
        %v4373 = vpop.f32.mrb[0].mxu0
        %v4374 = vadd.f32 %v4021, %v4373
        %4375 = vmatprep.mubr.bf16.mxu0 %v2899
        %4376 = vmatmul.mubr.bf16.gmra.mrb[0].mxu0 %v2898
        %v4377 = vpop.f32.mrb[0].mxu0
        %v4378 = vadd.f32 %v4025, %v4377
        %v4379 = vpop.f32.mrb[0].mxu0
        %v4380 = vadd.f32 %v4027, %v4379
        %v4381 = vpop.f32.mrb[0].mxu0
        %v4382 = vadd.f32 %v4029, %v4381
        %v4383 = vpop.f32.mrb[0].mxu0
        %v4384 = vadd.f32 %v4031, %v4383
        %4385 = vmatprep.mubr.bf16.mxu0 %v2907
        %4386 = vmatmul.mubr.bf16.gmra.mrb[0].mxu0 %v2906
        %v4387 = vpop.f32.mrb[0].mxu0
        %v4388 = vadd.f32 %v4035, %v4387
        %v4389 = vpop.f32.mrb[0].mxu0
        %v4390 = vadd.f32 %v4037, %v4389
        %v4391 = vpop.f32.mrb[0].mxu0
        %v4392 = vadd.f32 %v4039, %v4391
        %v4393 = vpop.f32.mrb[0].mxu0
        %v4394 = vadd.f32 %v4041, %v4393
        %4395 = vmatprep.mubr.bf16.mxu0 %v2915
        %4396 = vmatmul.mubr.bf16.gmra.mrb[0].mxu0 %v2914
        %v4397 = vpop.f32.mrb[0].mxu0
        %v4398 = vadd.f32 %v4045, %v4397
        %v4399 = vpop.f32.mrb[0].mxu0
        %v4400 = vadd.f32 %v4047, %v4399
        %v4401 = vpop.f32.mrb[0].mxu0
        %v4402 = vadd.f32 %v4049, %v4401
        %v4403 = vpop.f32.mrb[0].mxu0
        %v4404 = vadd.f32 %v4051, %v4403
        %4405 = vdwg.mxu0
        %4406 = vmatprep.subr.bf16.mxu0 %v3509
        %4407 = vmatpush1.bf16.msra.mxu0 %v3508
        %4408 = vmatprep.subr.bf16.mxu0 %v3511
        %4409 = vmatpush1.bf16.msra.mxu0 %v3510
        %4410 = vmatprep.subr.bf16.mxu0 %v3513
        %4411 = vmatpush1.bf16.msra.mxu0 %v3512
        %4412 = vmatprep.subr.bf16.mxu0 %v3515
        %4413 = vmatpush1.bf16.msra.mxu0 %v3514
        %4414 = vmatprep.subr.bf16.mxu0 %v3517
        %4415 = vmatpush1.bf16.msra.mxu0 %v3516
        %4416 = vmatprep.subr.bf16.mxu0 %v3519
        %4417 = vmatpush1.bf16.msra.mxu0 %v3518
        %4418 = vmatprep.subr.bf16.mxu0 %v3521
        %4419 = vmatpush1.bf16.msra.mxu0 %v3520
        %4420 = vmatprep.subr.bf16.mxu0 %v3523
        %4421 = vmatpush1.bf16.msra.mxu0 %v3522
        %4422 = vmatprep.subr.bf16.mxu0 %v3525
        %4423 = vmatpush1.bf16.msra.mxu0 %v3524
        %4424 = vmatprep.subr.bf16.mxu0 %v3527
        %4425 = vmatpush1.bf16.msra.mxu0 %v3526
        %4426 = vmatprep.subr.bf16.mxu0 %v3529
        %4427 = vmatpush1.bf16.msra.mxu0 %v3528
        %4428 = vmatprep.subr.bf16.mxu0 %v3531
        %4429 = vmatpush1.bf16.msra.mxu0 %v3530
        %4430 = vmatprep.subr.bf16.mxu0 %v3533
        %4431 = vmatpush1.bf16.msra.mxu0 %v3532
        %4432 = vmatprep.subr.bf16.mxu0 %v3535
        %4433 = vmatpush1.bf16.msra.mxu0 %v3534
        %4434 = vmatprep.subr.bf16.mxu0 %v3537
        %4435 = vmatpush1.bf16.msra.mxu0 %v3536
        %4436 = vmatprep.subr.bf16.mxu0 %v3539
        %4437 = vmatpush1.bf16.msra.mxu0 %v3538
        %4438 = vmatprep.mubr.bf16.mxu0 %v2669
        %4439 = vmatmul.mubr.bf16.gmra.mrb[0].mxu0 %v2668
        %v4440 = vpop.f32.mrb[0].mxu0
        %v4441 = vadd.f32 %v4088, %v4440
        %v4442 = vpop.f32.mrb[0].mxu0
        %v4443 = vadd.f32 %v4090, %v4442
        %v4444 = vpop.f32.mrb[0].mxu0
        %v4445 = vadd.f32 %v4092, %v4444
        %v4446 = vpop.f32.mrb[0].mxu0
        %v4447 = vadd.f32 %v4094, %v4446
        %4448 = vmatprep.mubr.bf16.mxu0 %v2677
        %4449 = vmatmul.mubr.bf16.gmra.mrb[0].mxu0 %v2676
        %v4450 = vpop.f32.mrb[0].mxu0
        %v4451 = vadd.f32 %v4098, %v4450
        %v4452 = vpop.f32.mrb[0].mxu0
        %v4453 = vadd.f32 %v4100, %v4452
        %v4454 = vpop.f32.mrb[0].mxu0
        %v4455 = vadd.f32 %v4102, %v4454
        %v4456 = vpop.f32.mrb[0].mxu0
        %v4457 = vadd.f32 %v4104, %v4456
        %4458 = vmatprep.mubr.bf16.mxu0 %v2685
        %4459 = vmatmul.mubr.bf16.gmra.mrb[0].mxu0 %v2684
        %v4460 = vpop.f32.mrb[0].mxu0
        %v4461 = vadd.f32 %v4108, %v4460
        %v4462 = vpop.f32.mrb[0].mxu0
        %v4463 = vadd.f32 %v4110, %v4462
        %v4464 = vpop.f32.mrb[0].mxu0
        %v4465 = vadd.f32 %v4112, %v4464
        %v4466 = vpop.f32.mrb[0].mxu0
        %v4467 = vadd.f32 %v4114, %v4466
        %4468 = vmatprep.mubr.bf16.mxu0 %v2693
        %4469 = vmatmul.mubr.bf16.gmra.mrb[0].mxu0 %v2692
        %v4470 = vpop.f32.mrb[0].mxu0
        %v4471 = vadd.f32 %v4118, %v4470
        %v4472 = vpop.f32.mrb[0].mxu0
        %v4473 = vadd.f32 %v4120, %v4472
        %v4474 = vpop.f32.mrb[0].mxu0
        %v4475 = vadd.f32 %v4122, %v4474
        %v4476 = vpop.f32.mrb[0].mxu0
        %v4477 = vadd.f32 %v4124, %v4476
        %4478 = vmatprep.mubr.bf16.mxu0 %v2701
        %4479 = vmatmul.mubr.bf16.gmra.mrb[0].mxu0 %v2700
        %v4480 = vpop.f32.mrb[0].mxu0
        %v4481 = vadd.f32 %v4128, %v4480
        %v4482 = vpop.f32.mrb[0].mxu0
        %v4483 = vadd.f32 %v4130, %v4482
        %v4484 = vpop.f32.mrb[0].mxu0
        %v4485 = vadd.f32 %v4132, %v4484
        %v4486 = vpop.f32.mrb[0].mxu0
        %v4487 = vadd.f32 %v4134, %v4486
        %4488 = vmatprep.mubr.bf16.mxu0 %v2709
        %4489 = vmatmul.mubr.bf16.gmra.mrb[0].mxu0 %v2708
        %v4490 = vpop.f32.mrb[0].mxu0
        %v4491 = vadd.f32 %v4138, %v4490
        %v4492 = vpop.f32.mrb[0].mxu0
        %v4493 = vadd.f32 %v4140, %v4492
        %v4494 = vpop.f32.mrb[0].mxu0
        %v4495 = vadd.f32 %v4142, %v4494
        %v4496 = vpop.f32.mrb[0].mxu0
        %v4497 = vadd.f32 %v4144, %v4496
        %4498 = vmatprep.mubr.bf16.mxu0 %v2717
        %4499 = vmatmul.mubr.bf16.gmra.mrb[0].mxu0 %v2716
        %v4500 = vpop.f32.mrb[0].mxu0
        %v4501 = vadd.f32 %v4148, %v4500
        %v4502 = vpop.f32.mrb[0].mxu0
        %v4503 = vadd.f32 %v4150, %v4502
        %v4504 = vpop.f32.mrb[0].mxu0
        %v4505 = vadd.f32 %v4152, %v4504
        %v4506 = vpop.f32.mrb[0].mxu0
        %v4507 = vadd.f32 %v4154, %v4506
        %4508 = vmatprep.mubr.bf16.mxu0 %v2725
        %4509 = vmatmul.mubr.bf16.gmra.mrb[0].mxu0 %v2724
        %v4510 = vpop.f32.mrb[0].mxu0
        %v4511 = vadd.f32 %v4158, %v4510
        %v4512 = vpop.f32.mrb[0].mxu0
        %v4513 = vadd.f32 %v4160, %v4512
        %v4514 = vpop.f32.mrb[0].mxu0
        %v4515 = vadd.f32 %v4162, %v4514
        %v4516 = vpop.f32.mrb[0].mxu0
        %v4517 = vadd.f32 %v4164, %v4516
        %4518 = vmatprep.mubr.bf16.mxu0 %v2733
        %4519 = vmatmul.mubr.bf16.gmra.mrb[0].mxu0 %v2732
        %v4520 = vpop.f32.mrb[0].mxu0
        %v4521 = vadd.f32 %v4168, %v4520
        %v4522 = vpop.f32.mrb[0].mxu0
        %v4523 = vadd.f32 %v4170, %v4522
        %v4524 = vpop.f32.mrb[0].mxu0
        %v4525 = vadd.f32 %v4172, %v4524
        %v4526 = vpop.f32.mrb[0].mxu0
        %v4527 = vadd.f32 %v4174, %v4526
        %4528 = vmatprep.mubr.bf16.mxu0 %v2741
        %4529 = vmatmul.mubr.bf16.gmra.mrb[0].mxu0 %v2740
        %v4530 = vpop.f32.mrb[0].mxu0
        %v4531 = vadd.f32 %v4178, %v4530
        %v4532 = vpop.f32.mrb[0].mxu0
        %v4533 = vadd.f32 %v4180, %v4532
        %v4534 = vpop.f32.mrb[0].mxu0
        %v4535 = vadd.f32 %v4182, %v4534
        %v4536 = vpop.f32.mrb[0].mxu0
        %v4537 = vadd.f32 %v4184, %v4536
        %4538 = vmatprep.mubr.bf16.mxu0 %v2749
        %4539 = vmatmul.mubr.bf16.gmra.mrb[0].mxu0 %v2748
        %v4540 = vpop.f32.mrb[0].mxu0
        %v4541 = vadd.f32 %v4188, %v4540
        %v4542 = vpop.f32.mrb[0].mxu0
        %v4543 = vadd.f32 %v4190, %v4542
        %v4544 = vpop.f32.mrb[0].mxu0
        %v4545 = vadd.f32 %v4192, %v4544
        %v4546 = vpop.f32.mrb[0].mxu0
        %v4547 = vadd.f32 %v4194, %v4546
        %4548 = vmatprep.mubr.bf16.mxu0 %v2757
        %4549 = vmatmul.mubr.bf16.gmra.mrb[0].mxu0 %v2756
        %v4550 = vpop.f32.mrb[0].mxu0
        %v4551 = vadd.f32 %v4198, %v4550
        %v4552 = vpop.f32.mrb[0].mxu0
        %v4553 = vadd.f32 %v4200, %v4552
        %v4554 = vpop.f32.mrb[0].mxu0
        %v4555 = vadd.f32 %v4202, %v4554
        %v4556 = vpop.f32.mrb[0].mxu0
        %v4557 = vadd.f32 %v4204, %v4556
        %4558 = vmatprep.mubr.bf16.mxu0 %v2765
        %4559 = vmatmul.mubr.bf16.gmra.mrb[0].mxu0 %v2764
        %v4560 = vpop.f32.mrb[0].mxu0
        %v4561 = vadd.f32 %v4208, %v4560
        %v4562 = vpop.f32.mrb[0].mxu0
        %v4563 = vadd.f32 %v4210, %v4562
        %v4564 = vpop.f32.mrb[0].mxu0
        %v4565 = vadd.f32 %v4212, %v4564
        %v4566 = vpop.f32.mrb[0].mxu0
        %v4567 = vadd.f32 %v4214, %v4566
        %4568 = vmatprep.mubr.bf16.mxu0 %v2773
        %4569 = vmatmul.mubr.bf16.gmra.mrb[0].mxu0 %v2772
        %v4570 = vpop.f32.mrb[0].mxu0
        %v4571 = vadd.f32 %v4218, %v4570
        %v4572 = vpop.f32.mrb[0].mxu0
        %v4573 = vadd.f32 %v4220, %v4572
        %v4574 = vpop.f32.mrb[0].mxu0
        %v4575 = vadd.f32 %v4222, %v4574
        %v4576 = vpop.f32.mrb[0].mxu0
        %v4577 = vadd.f32 %v4224, %v4576
        %4578 = vmatprep.mubr.bf16.mxu0 %v2781
        %4579 = vmatmul.mubr.bf16.gmra.mrb[0].mxu0 %v2780
        %v4580 = vpop.f32.mrb[0].mxu0
        %v4581 = vadd.f32 %v4228, %v4580
        %v4582 = vpop.f32.mrb[0].mxu0
        %v4583 = vadd.f32 %v4230, %v4582
        %v4584 = vpop.f32.mrb[0].mxu0
        %v4585 = vadd.f32 %v4232, %v4584
        %v4586 = vpop.f32.mrb[0].mxu0
        %v4587 = vadd.f32 %v4234, %v4586
        %4588 = vmatprep.mubr.bf16.mxu0 %v2789
        %4589 = vmatmul.mubr.bf16.gmra.mrb[0].mxu0 %v2788
        %v4590 = vpop.f32.mrb[0].mxu0
        %v4591 = vadd.f32 %v4238, %v4590
        %v4592 = vpop.f32.mrb[0].mxu0
        %v4593 = vadd.f32 %v4240, %v4592
        %v4594 = vpop.f32.mrb[0].mxu0
        %v4595 = vadd.f32 %v4242, %v4594
        %v4596 = vpop.f32.mrb[0].mxu0
        %v4597 = vadd.f32 %v4244, %v4596
        %4598 = vmatprep.mubr.bf16.mxu0 %v2797
        %4599 = vmatmul.mubr.bf16.gmra.mrb[0].mxu0 %v2796
        %v4600 = vpop.f32.mrb[0].mxu0
        %v4601 = vadd.f32 %v4248, %v4600
        %v4602 = vpop.f32.mrb[0].mxu0
        %v4603 = vadd.f32 %v4250, %v4602
        %v4604 = vpop.f32.mrb[0].mxu0
        %v4605 = vadd.f32 %v4252, %v4604
        %v4606 = vpop.f32.mrb[0].mxu0
        %v4607 = vadd.f32 %v4254, %v4606
        %4608 = vmatprep.mubr.bf16.mxu0 %v2805
        %4609 = vmatmul.mubr.bf16.gmra.mrb[0].mxu0 %v2804
        %v4610 = vpop.f32.mrb[0].mxu0
        %v4611 = vadd.f32 %v4258, %v4610
        %v4612 = vpop.f32.mrb[0].mxu0
        %v4613 = vadd.f32 %v4260, %v4612
        %v4614 = vpop.f32.mrb[0].mxu0
        %v4615 = vadd.f32 %v4262, %v4614
        %v4616 = vpop.f32.mrb[0].mxu0
        %v4617 = vadd.f32 %v4264, %v4616
        %4618 = vmatprep.mubr.bf16.mxu0 %v2813
        %4619 = vmatmul.mubr.bf16.gmra.mrb[0].mxu0 %v2812
        %v4620 = vpop.f32.mrb[0].mxu0
        %v4621 = vadd.f32 %v4268, %v4620
        %v4622 = vpop.f32.mrb[0].mxu0
        %v4623 = vadd.f32 %v4270, %v4622
        %v4624 = vpop.f32.mrb[0].mxu0
        %v4625 = vadd.f32 %v4272, %v4624
        %v4626 = vpop.f32.mrb[0].mxu0
        %v4627 = vadd.f32 %v4274, %v4626
        %4628 = vmatprep.mubr.bf16.mxu0 %v2821
        %4629 = vmatmul.mubr.bf16.gmra.mrb[0].mxu0 %v2820
        %v4630 = vpop.f32.mrb[0].mxu0
        %v4631 = vadd.f32 %v4278, %v4630
        %v4632 = vpop.f32.mrb[0].mxu0
        %v4633 = vadd.f32 %v4280, %v4632
        %v4634 = vpop.f32.mrb[0].mxu0
        %v4635 = vadd.f32 %v4282, %v4634
        %v4636 = vpop.f32.mrb[0].mxu0
        %v4637 = vadd.f32 %v4284, %v4636
        %4638 = vmatprep.mubr.bf16.mxu0 %v2829
        %4639 = vmatmul.mubr.bf16.gmra.mrb[0].mxu0 %v2828
        %v4640 = vpop.f32.mrb[0].mxu0
        %v4641 = vadd.f32 %v4288, %v4640
        %v4642 = vpop.f32.mrb[0].mxu0
        %v4643 = vadd.f32 %v4290, %v4642
        %v4644 = vpop.f32.mrb[0].mxu0
        %v4645 = vadd.f32 %v4292, %v4644
        %v4646 = vpop.f32.mrb[0].mxu0
        %v4647 = vadd.f32 %v4294, %v4646
        %4648 = vmatprep.mubr.bf16.mxu0 %v2837
        %4649 = vmatmul.mubr.bf16.gmra.mrb[0].mxu0 %v2836
        %v4650 = vpop.f32.mrb[0].mxu0
        %v4651 = vadd.f32 %v4298, %v4650
        %v4652 = vpop.f32.mrb[0].mxu0
        %v4653 = vadd.f32 %v4300, %v4652
        %v4654 = vpop.f32.mrb[0].mxu0
        %v4655 = vadd.f32 %v4302, %v4654
        %v4656 = vpop.f32.mrb[0].mxu0
        %v4657 = vadd.f32 %v4304, %v4656
        %4658 = vmatprep.mubr.bf16.mxu0 %v2845
        %4659 = vmatmul.mubr.bf16.gmra.mrb[0].mxu0 %v2844
        %v4660 = vpop.f32.mrb[0].mxu0
        %v4661 = vadd.f32 %v4308, %v4660
        %v4662 = vpop.f32.mrb[0].mxu0
        %v4663 = vadd.f32 %v4310, %v4662
        %v4664 = vpop.f32.mrb[0].mxu0
        %v4665 = vadd.f32 %v4312, %v4664
        %v4666 = vpop.f32.mrb[0].mxu0
        %v4667 = vadd.f32 %v4314, %v4666
        %4668 = vmatprep.mubr.bf16.mxu0 %v2853
        %4669 = vmatmul.mubr.bf16.gmra.mrb[0].mxu0 %v2852
        %v4670 = vpop.f32.mrb[0].mxu0
        %v4671 = vadd.f32 %v4318, %v4670
        %v4672 = vpop.f32.mrb[0].mxu0
        %v4673 = vadd.f32 %v4320, %v4672
        %v4674 = vpop.f32.mrb[0].mxu0
        %v4675 = vadd.f32 %v4322, %v4674
        %v4676 = vpop.f32.mrb[0].mxu0
        %v4677 = vadd.f32 %v4324, %v4676
        %4678 = vmatprep.mubr.bf16.mxu0 %v2861
        %4679 = vmatmul.mubr.bf16.gmra.mrb[0].mxu0 %v2860
        %v4680 = vpop.f32.mrb[0].mxu0
        %v4681 = vadd.f32 %v4328, %v4680
        %v4682 = vpop.f32.mrb[0].mxu0
        %v4683 = vadd.f32 %v4330, %v4682
        %v4684 = vpop.f32.mrb[0].mxu0
        %v4685 = vadd.f32 %v4332, %v4684
        %v4686 = vpop.f32.mrb[0].mxu0
        %v4687 = vadd.f32 %v4334, %v4686
        %4688 = vmatprep.mubr.bf16.mxu0 %v2869
        %4689 = vmatmul.mubr.bf16.gmra.mrb[0].mxu0 %v2868
        %v4690 = vpop.f32.mrb[0].mxu0
        %v4691 = vadd.f32 %v4338, %v4690
        %v4692 = vpop.f32.mrb[0].mxu0
        %v4693 = vadd.f32 %v4340, %v4692
        %v4694 = vpop.f32.mrb[0].mxu0
        %v4695 = vadd.f32 %v4342, %v4694
        %v4696 = vpop.f32.mrb[0].mxu0
        %v4697 = vadd.f32 %v4344, %v4696
        %4698 = vmatprep.mubr.bf16.mxu0 %v2877
        %4699 = vmatmul.mubr.bf16.gmra.mrb[0].mxu0 %v2876
        %v4700 = vpop.f32.mrb[0].mxu0
        %v4701 = vadd.f32 %v4348, %v4700
        %v4702 = vpop.f32.mrb[0].mxu0
        %v4703 = vadd.f32 %v4350, %v4702
        %v4704 = vpop.f32.mrb[0].mxu0
        %v4705 = vadd.f32 %v4352, %v4704
        %v4706 = vpop.f32.mrb[0].mxu0
        %v4707 = vadd.f32 %v4354, %v4706
        %4708 = vmatprep.mubr.bf16.mxu0 %v2885
        %4709 = vmatmul.mubr.bf16.gmra.mrb[0].mxu0 %v2884
        %v4710 = vpop.f32.mrb[0].mxu0
        %v4711 = vadd.f32 %v4358, %v4710
        %v4712 = vpop.f32.mrb[0].mxu0
        %v4713 = vadd.f32 %v4360, %v4712
        %v4714 = vpop.f32.mrb[0].mxu0
        %v4715 = vadd.f32 %v4362, %v4714
        %v4716 = vpop.f32.mrb[0].mxu0
        %v4717 = vadd.f32 %v4364, %v4716
        %4718 = vmatprep.mubr.bf16.mxu0 %v2893
        %4719 = vmatmul.mubr.bf16.gmra.mrb[0].mxu0 %v2892
        %v4720 = vpop.f32.mrb[0].mxu0
        %v4721 = vadd.f32 %v4368, %v4720
        %v4722 = vpop.f32.mrb[0].mxu0
        %v4723 = vadd.f32 %v4370, %v4722
        %v4724 = vpop.f32.mrb[0].mxu0
        %v4725 = vadd.f32 %v4372, %v4724
        %v4726 = vpop.f32.mrb[0].mxu0
        %v4727 = vadd.f32 %v4374, %v4726
        %4728 = vmatprep.mubr.bf16.mxu0 %v2901
        %4729 = vmatmul.mubr.bf16.gmra.mrb[0].mxu0 %v2900
        %v4730 = vpop.f32.mrb[0].mxu0
        %v4731 = vadd.f32 %v4378, %v4730
        %v4732 = vpop.f32.mrb[0].mxu0
        %v4733 = vadd.f32 %v4380, %v4732
        %v4734 = vpop.f32.mrb[0].mxu0
        %v4735 = vadd.f32 %v4382, %v4734
        %v4736 = vpop.f32.mrb[0].mxu0
        %v4737 = vadd.f32 %v4384, %v4736
        %4738 = vmatprep.mubr.bf16.mxu0 %v2909
        %4739 = vmatmul.mubr.bf16.gmra.mrb[0].mxu0 %v2908
        %v4740 = vpop.f32.mrb[0].mxu0
        %v4741 = vadd.f32 %v4388, %v4740
        %v4742 = vpop.f32.mrb[0].mxu0
        %v4743 = vadd.f32 %v4390, %v4742
        %v4744 = vpop.f32.mrb[0].mxu0
        %v4745 = vadd.f32 %v4392, %v4744
        %v4746 = vpop.f32.mrb[0].mxu0
        %v4747 = vadd.f32 %v4394, %v4746
        %4748 = vmatprep.mubr.bf16.mxu0 %v2917
        %4749 = vmatmul.mubr.bf16.gmra.mrb[0].mxu0 %v2916
        %v4750 = vpop.f32.mrb[0].mxu0
        %v4751 = vadd.f32 %v4398, %v4750
        %v4752 = vpop.f32.mrb[0].mxu0
        %v4753 = vadd.f32 %v4400, %v4752
        %v4754 = vpop.f32.mrb[0].mxu0
        %v4755 = vadd.f32 %v4402, %v4754
        %v4756 = vpop.f32.mrb[0].mxu0
        %v4757 = vadd.f32 %v4404, %v4756
        %4758 = vdwg.mxu0
        %4759 = vmatprep.subr.bf16.mxu0 %v3541
        %4760 = vmatpush1.bf16.msra.mxu0 %v3540
        %4761 = vmatprep.subr.bf16.mxu0 %v3543
        %4762 = vmatpush1.bf16.msra.mxu0 %v3542
        %4763 = vmatprep.subr.bf16.mxu0 %v3545
        %4764 = vmatpush1.bf16.msra.mxu0 %v3544
        %4765 = vmatprep.subr.bf16.mxu0 %v3547
        %4766 = vmatpush1.bf16.msra.mxu0 %v3546
        %4767 = vmatprep.subr.bf16.mxu0 %v3549
        %4768 = vmatpush1.bf16.msra.mxu0 %v3548
        %4769 = vmatprep.subr.bf16.mxu0 %v3551
        %4770 = vmatpush1.bf16.msra.mxu0 %v3550
        %4771 = vmatprep.subr.bf16.mxu0 %v3553
        %4772 = vmatpush1.bf16.msra.mxu0 %v3552
        %4773 = vmatprep.subr.bf16.mxu0 %v3555
        %4774 = vmatpush1.bf16.msra.mxu0 %v3554
        %4775 = vmatprep.subr.bf16.mxu0 %v3557
        %4776 = vmatpush1.bf16.msra.mxu0 %v3556
        %4777 = vmatprep.subr.bf16.mxu0 %v3559
        %4778 = vmatpush1.bf16.msra.mxu0 %v3558
        %4779 = vmatprep.subr.bf16.mxu0 %v3561
        %4780 = vmatpush1.bf16.msra.mxu0 %v3560
        %4781 = vmatprep.subr.bf16.mxu0 %v3563
        %4782 = vmatpush1.bf16.msra.mxu0 %v3562
        %4783 = vmatprep.subr.bf16.mxu0 %v3565
        %4784 = vmatpush1.bf16.msra.mxu0 %v3564
        %4785 = vmatprep.subr.bf16.mxu0 %v3567
        %4786 = vmatpush1.bf16.msra.mxu0 %v3566
        %4787 = vmatprep.subr.bf16.mxu0 %v3569
        %4788 = vmatpush1.bf16.msra.mxu0 %v3568
        %4789 = vmatprep.subr.bf16.mxu0 %v3571
        %4790 = vmatpush1.bf16.msra.mxu0 %v3570
        %4791 = vmatprep.mubr.bf16.mxu0 %v2671
        %4792 = vmatmul.mubr.bf16.gmra.mrb[0].mxu0 %v2670
        %v4793 = vpop.f32.mrb[0].mxu0
        %v4794 = vadd.f32 %v4441, %v4793
        %v4795 = vpop.f32.mrb[0].mxu0
        %v4796 = vadd.f32 %v4443, %v4795
        %v4797 = vpop.f32.mrb[0].mxu0
        %v4798 = vadd.f32 %v4445, %v4797
        %v4799 = vpop.f32.mrb[0].mxu0
        %v4800 = vadd.f32 %v4447, %v4799
        %4801 = vmatprep.mubr.bf16.mxu0 %v2679
        %4802 = vmatmul.mubr.bf16.gmra.mrb[0].mxu0 %v2678
        %v4803 = vpop.f32.mrb[0].mxu0
        %v4804 = vadd.f32 %v4451, %v4803
        %v4805 = vpop.f32.mrb[0].mxu0
        %v4806 = vadd.f32 %v4453, %v4805
        %v4807 = vpop.f32.mrb[0].mxu0
        %v4808 = vadd.f32 %v4455, %v4807
        %v4809 = vpop.f32.mrb[0].mxu0
        %v4810 = vadd.f32 %v4457, %v4809
        %4811 = vmatprep.mubr.bf16.mxu0 %v2687
        %4812 = vmatmul.mubr.bf16.gmra.mrb[0].mxu0 %v2686
        %v4813 = vpop.f32.mrb[0].mxu0
        %v4814 = vadd.f32 %v4461, %v4813
        %v4815 = vpop.f32.mrb[0].mxu0
        %v4816 = vadd.f32 %v4463, %v4815
        %v4817 = vpop.f32.mrb[0].mxu0
        %v4818 = vadd.f32 %v4465, %v4817
        %v4819 = vpop.f32.mrb[0].mxu0
        %v4820 = vadd.f32 %v4467, %v4819
        %4821 = vmatprep.mubr.bf16.mxu0 %v2695
        %4822 = vmatmul.mubr.bf16.gmra.mrb[0].mxu0 %v2694
        %v4823 = vpop.f32.mrb[0].mxu0
        %v4824 = vadd.f32 %v4471, %v4823
        %v4825 = vpop.f32.mrb[0].mxu0
        %v4826 = vadd.f32 %v4473, %v4825
        %v4827 = vpop.f32.mrb[0].mxu0
        %v4828 = vadd.f32 %v4475, %v4827
        %v4829 = vpop.f32.mrb[0].mxu0
        %v4830 = vadd.f32 %v4477, %v4829
        %4831 = vmatprep.mubr.bf16.mxu0 %v2703
        %4832 = vmatmul.mubr.bf16.gmra.mrb[0].mxu0 %v2702
        %v4833 = vpop.f32.mrb[0].mxu0
        %v4834 = vadd.f32 %v4481, %v4833
        %v4835 = vpop.f32.mrb[0].mxu0
        %v4836 = vadd.f32 %v4483, %v4835
        %v4837 = vpop.f32.mrb[0].mxu0
        %v4838 = vadd.f32 %v4485, %v4837
        %v4839 = vpop.f32.mrb[0].mxu0
        %v4840 = vadd.f32 %v4487, %v4839
        %4841 = vmatprep.mubr.bf16.mxu0 %v2711
        %4842 = vmatmul.mubr.bf16.gmra.mrb[0].mxu0 %v2710
        %v4843 = vpop.f32.mrb[0].mxu0
        %v4844 = vadd.f32 %v4491, %v4843
        %v4845 = vpop.f32.mrb[0].mxu0
        %v4846 = vadd.f32 %v4493, %v4845
        %v4847 = vpop.f32.mrb[0].mxu0
        %v4848 = vadd.f32 %v4495, %v4847
        %v4849 = vpop.f32.mrb[0].mxu0
        %v4850 = vadd.f32 %v4497, %v4849
        %4851 = vmatprep.mubr.bf16.mxu0 %v2719
        %4852 = vmatmul.mubr.bf16.gmra.mrb[0].mxu0 %v2718
        %v4853 = vpop.f32.mrb[0].mxu0
        %v4854 = vadd.f32 %v4501, %v4853
        %v4855 = vpop.f32.mrb[0].mxu0
        %v4856 = vadd.f32 %v4503, %v4855
        %v4857 = vpop.f32.mrb[0].mxu0
        %v4858 = vadd.f32 %v4505, %v4857
        %v4859 = vpop.f32.mrb[0].mxu0
        %v4860 = vadd.f32 %v4507, %v4859
        %4861 = vmatprep.mubr.bf16.mxu0 %v2727
        %4862 = vmatmul.mubr.bf16.gmra.mrb[0].mxu0 %v2726
        %v4863 = vpop.f32.mrb[0].mxu0
        %v4864 = vadd.f32 %v4511, %v4863
        %v4865 = vpop.f32.mrb[0].mxu0
        %v4866 = vadd.f32 %v4513, %v4865
        %v4867 = vpop.f32.mrb[0].mxu0
        %v4868 = vadd.f32 %v4515, %v4867
        %v4869 = vpop.f32.mrb[0].mxu0
        %v4870 = vadd.f32 %v4517, %v4869
        %4871 = vmatprep.mubr.bf16.mxu0 %v2735
        %4872 = vmatmul.mubr.bf16.gmra.mrb[0].mxu0 %v2734
        %v4873 = vpop.f32.mrb[0].mxu0
        %v4874 = vadd.f32 %v4521, %v4873
        %v4875 = vpop.f32.mrb[0].mxu0
        %v4876 = vadd.f32 %v4523, %v4875
        %v4877 = vpop.f32.mrb[0].mxu0
        %v4878 = vadd.f32 %v4525, %v4877
        %v4879 = vpop.f32.mrb[0].mxu0
        %v4880 = vadd.f32 %v4527, %v4879
        %4881 = vmatprep.mubr.bf16.mxu0 %v2743
        %4882 = vmatmul.mubr.bf16.gmra.mrb[0].mxu0 %v2742
        %v4883 = vpop.f32.mrb[0].mxu0
        %v4884 = vadd.f32 %v4531, %v4883
        %v4885 = vpop.f32.mrb[0].mxu0
        %v4886 = vadd.f32 %v4533, %v4885
        %v4887 = vpop.f32.mrb[0].mxu0
        %v4888 = vadd.f32 %v4535, %v4887
        %v4889 = vpop.f32.mrb[0].mxu0
        %v4890 = vadd.f32 %v4537, %v4889
        %4891 = vmatprep.mubr.bf16.mxu0 %v2751
        %4892 = vmatmul.mubr.bf16.gmra.mrb[0].mxu0 %v2750
        %v4893 = vpop.f32.mrb[0].mxu0
        %v4894 = vadd.f32 %v4541, %v4893
        %v4895 = vpop.f32.mrb[0].mxu0
        %v4896 = vadd.f32 %v4543, %v4895
        %v4897 = vpop.f32.mrb[0].mxu0
        %v4898 = vadd.f32 %v4545, %v4897
        %v4899 = vpop.f32.mrb[0].mxu0
        %v4900 = vadd.f32 %v4547, %v4899
        %4901 = vmatprep.mubr.bf16.mxu0 %v2759
        %4902 = vmatmul.mubr.bf16.gmra.mrb[0].mxu0 %v2758
        %v4903 = vpop.f32.mrb[0].mxu0
        %v4904 = vadd.f32 %v4551, %v4903
        %v4905 = vpop.f32.mrb[0].mxu0
        %v4906 = vadd.f32 %v4553, %v4905
        %v4907 = vpop.f32.mrb[0].mxu0
        %v4908 = vadd.f32 %v4555, %v4907
        %v4909 = vpop.f32.mrb[0].mxu0
        %v4910 = vadd.f32 %v4557, %v4909
        %4911 = vmatprep.mubr.bf16.mxu0 %v2767
        %4912 = vmatmul.mubr.bf16.gmra.mrb[0].mxu0 %v2766
        %v4913 = vpop.f32.mrb[0].mxu0
        %v4914 = vadd.f32 %v4561, %v4913
        %v4915 = vpop.f32.mrb[0].mxu0
        %v4916 = vadd.f32 %v4563, %v4915
        %v4917 = vpop.f32.mrb[0].mxu0
        %v4918 = vadd.f32 %v4565, %v4917
        %v4919 = vpop.f32.mrb[0].mxu0
        %v4920 = vadd.f32 %v4567, %v4919
        %4921 = vmatprep.mubr.bf16.mxu0 %v2775
        %4922 = vmatmul.mubr.bf16.gmra.mrb[0].mxu0 %v2774
        %v4923 = vpop.f32.mrb[0].mxu0
        %v4924 = vadd.f32 %v4571, %v4923
        %v4925 = vpop.f32.mrb[0].mxu0
        %v4926 = vadd.f32 %v4573, %v4925
        %v4927 = vpop.f32.mrb[0].mxu0
        %v4928 = vadd.f32 %v4575, %v4927
        %v4929 = vpop.f32.mrb[0].mxu0
        %v4930 = vadd.f32 %v4577, %v4929
        %4931 = vmatprep.mubr.bf16.mxu0 %v2783
        %4932 = vmatmul.mubr.bf16.gmra.mrb[0].mxu0 %v2782
        %v4933 = vpop.f32.mrb[0].mxu0
        %v4934 = vadd.f32 %v4581, %v4933
        %v4935 = vpop.f32.mrb[0].mxu0
        %v4936 = vadd.f32 %v4583, %v4935
        %v4937 = vpop.f32.mrb[0].mxu0
        %v4938 = vadd.f32 %v4585, %v4937
        %v4939 = vpop.f32.mrb[0].mxu0
        %v4940 = vadd.f32 %v4587, %v4939
        %4941 = vmatprep.mubr.bf16.mxu0 %v2791
        %4942 = vmatmul.mubr.bf16.gmra.mrb[0].mxu0 %v2790
        %v4943 = vpop.f32.mrb[0].mxu0
        %v4944 = vadd.f32 %v4591, %v4943
        %v4945 = vpop.f32.mrb[0].mxu0
        %v4946 = vadd.f32 %v4593, %v4945
        %v4947 = vpop.f32.mrb[0].mxu0
        %v4948 = vadd.f32 %v4595, %v4947
        %v4949 = vpop.f32.mrb[0].mxu0
        %v4950 = vadd.f32 %v4597, %v4949
        %4951 = vmatprep.mubr.bf16.mxu0 %v2799
        %4952 = vmatmul.mubr.bf16.gmra.mrb[0].mxu0 %v2798
        %v4953 = vpop.f32.mrb[0].mxu0
        %v4954 = vadd.f32 %v4601, %v4953
        %v4955 = vpop.f32.mrb[0].mxu0
        %v4956 = vadd.f32 %v4603, %v4955
        %v4957 = vpop.f32.mrb[0].mxu0
        %v4958 = vadd.f32 %v4605, %v4957
        %v4959 = vpop.f32.mrb[0].mxu0
        %v4960 = vadd.f32 %v4607, %v4959
        %4961 = vmatprep.mubr.bf16.mxu0 %v2807
        %4962 = vmatmul.mubr.bf16.gmra.mrb[0].mxu0 %v2806
        %v4963 = vpop.f32.mrb[0].mxu0
        %v4964 = vadd.f32 %v4611, %v4963
        %v4965 = vpop.f32.mrb[0].mxu0
        %v4966 = vadd.f32 %v4613, %v4965
        %v4967 = vpop.f32.mrb[0].mxu0
        %v4968 = vadd.f32 %v4615, %v4967
        %v4969 = vpop.f32.mrb[0].mxu0
        %v4970 = vadd.f32 %v4617, %v4969
        %4971 = vmatprep.mubr.bf16.mxu0 %v2815
        %4972 = vmatmul.mubr.bf16.gmra.mrb[0].mxu0 %v2814
        %v4973 = vpop.f32.mrb[0].mxu0
        %v4974 = vadd.f32 %v4621, %v4973
        %v4975 = vpop.f32.mrb[0].mxu0
        %v4976 = vadd.f32 %v4623, %v4975
        %v4977 = vpop.f32.mrb[0].mxu0
        %v4978 = vadd.f32 %v4625, %v4977
        %v4979 = vpop.f32.mrb[0].mxu0
        %v4980 = vadd.f32 %v4627, %v4979
        %4981 = vmatprep.mubr.bf16.mxu0 %v2823
        %4982 = vmatmul.mubr.bf16.gmra.mrb[0].mxu0 %v2822
        %v4983 = vpop.f32.mrb[0].mxu0
        %v4984 = vadd.f32 %v4631, %v4983
        %v4985 = vpop.f32.mrb[0].mxu0
        %v4986 = vadd.f32 %v4633, %v4985
        %v4987 = vpop.f32.mrb[0].mxu0
        %v4988 = vadd.f32 %v4635, %v4987
        %v4989 = vpop.f32.mrb[0].mxu0
        %v4990 = vadd.f32 %v4637, %v4989
        %4991 = vmatprep.mubr.bf16.mxu0 %v2831
        %4992 = vmatmul.mubr.bf16.gmra.mrb[0].mxu0 %v2830
        %v4993 = vpop.f32.mrb[0].mxu0
        %v4994 = vadd.f32 %v4641, %v4993
        %v4995 = vpop.f32.mrb[0].mxu0
        %v4996 = vadd.f32 %v4643, %v4995
        %v4997 = vpop.f32.mrb[0].mxu0
        %v4998 = vadd.f32 %v4645, %v4997
        %v4999 = vpop.f32.mrb[0].mxu0
        %v5000 = vadd.f32 %v4647, %v4999
        %5001 = vmatprep.mubr.bf16.mxu0 %v2839
        %5002 = vmatmul.mubr.bf16.gmra.mrb[0].mxu0 %v2838
        %v5003 = vpop.f32.mrb[0].mxu0
        %v5004 = vadd.f32 %v4651, %v5003
        %v5005 = vpop.f32.mrb[0].mxu0
        %v5006 = vadd.f32 %v4653, %v5005
        %v5007 = vpop.f32.mrb[0].mxu0
        %v5008 = vadd.f32 %v4655, %v5007
        %v5009 = vpop.f32.mrb[0].mxu0
        %v5010 = vadd.f32 %v4657, %v5009
        %5011 = vmatprep.mubr.bf16.mxu0 %v2847
        %5012 = vmatmul.mubr.bf16.gmra.mrb[0].mxu0 %v2846
        %v5013 = vpop.f32.mrb[0].mxu0
        %v5014 = vadd.f32 %v4661, %v5013
        %v5015 = vpop.f32.mrb[0].mxu0
        %v5016 = vadd.f32 %v4663, %v5015
        %v5017 = vpop.f32.mrb[0].mxu0
        %v5018 = vadd.f32 %v4665, %v5017
        %v5019 = vpop.f32.mrb[0].mxu0
        %v5020 = vadd.f32 %v4667, %v5019
        %5021 = vmatprep.mubr.bf16.mxu0 %v2855
        %5022 = vmatmul.mubr.bf16.gmra.mrb[0].mxu0 %v2854
        %v5023 = vpop.f32.mrb[0].mxu0
        %v5024 = vadd.f32 %v4671, %v5023
        %v5025 = vpop.f32.mrb[0].mxu0
        %v5026 = vadd.f32 %v4673, %v5025
        %v5027 = vpop.f32.mrb[0].mxu0
        %v5028 = vadd.f32 %v4675, %v5027
        %v5029 = vpop.f32.mrb[0].mxu0
        %v5030 = vadd.f32 %v4677, %v5029
        %5031 = vmatprep.mubr.bf16.mxu0 %v2863
        %5032 = vmatmul.mubr.bf16.gmra.mrb[0].mxu0 %v2862
        %v5033 = vpop.f32.mrb[0].mxu0
        %v5034 = vadd.f32 %v4681, %v5033
        %v5035 = vpop.f32.mrb[0].mxu0
        %v5036 = vadd.f32 %v4683, %v5035
        %v5037 = vpop.f32.mrb[0].mxu0
        %v5038 = vadd.f32 %v4685, %v5037
        %v5039 = vpop.f32.mrb[0].mxu0
        %v5040 = vadd.f32 %v4687, %v5039
        %5041 = vmatprep.mubr.bf16.mxu0 %v2871
        %5042 = vmatmul.mubr.bf16.gmra.mrb[0].mxu0 %v2870
        %v5043 = vpop.f32.mrb[0].mxu0
        %v5044 = vadd.f32 %v4691, %v5043
        %v5045 = vpop.f32.mrb[0].mxu0
        %v5046 = vadd.f32 %v4693, %v5045
        %v5047 = vpop.f32.mrb[0].mxu0
        %v5048 = vadd.f32 %v4695, %v5047
        %v5049 = vpop.f32.mrb[0].mxu0
        %v5050 = vadd.f32 %v4697, %v5049
        %5051 = vmatprep.mubr.bf16.mxu0 %v2879
        %5052 = vmatmul.mubr.bf16.gmra.mrb[0].mxu0 %v2878
        %v5053 = vpop.f32.mrb[0].mxu0
        %v5054 = vadd.f32 %v4701, %v5053
        %v5055 = vpop.f32.mrb[0].mxu0
        %v5056 = vadd.f32 %v4703, %v5055
        %v5057 = vpop.f32.mrb[0].mxu0
        %v5058 = vadd.f32 %v4705, %v5057
        %v5059 = vpop.f32.mrb[0].mxu0
        %v5060 = vadd.f32 %v4707, %v5059
        %5061 = vmatprep.mubr.bf16.mxu0 %v2887
        %5062 = vmatmul.mubr.bf16.gmra.mrb[0].mxu0 %v2886
        %v5063 = vpop.f32.mrb[0].mxu0
        %v5064 = vadd.f32 %v4711, %v5063
        %v5065 = vpop.f32.mrb[0].mxu0
        %v5066 = vadd.f32 %v4713, %v5065
        %v5067 = vpop.f32.mrb[0].mxu0
        %v5068 = vadd.f32 %v4715, %v5067
        %v5069 = vpop.f32.mrb[0].mxu0
        %v5070 = vadd.f32 %v4717, %v5069
        %5071 = vmatprep.mubr.bf16.mxu0 %v2895
        %5072 = vmatmul.mubr.bf16.gmra.mrb[0].mxu0 %v2894
        %v5073 = vpop.f32.mrb[0].mxu0
        %v5074 = vadd.f32 %v4721, %v5073
        %v5075 = vpop.f32.mrb[0].mxu0
        %v5076 = vadd.f32 %v4723, %v5075
        %v5077 = vpop.f32.mrb[0].mxu0
        %v5078 = vadd.f32 %v4725, %v5077
        %v5079 = vpop.f32.mrb[0].mxu0
        %v5080 = vadd.f32 %v4727, %v5079
        %5081 = vmatprep.mubr.bf16.mxu0 %v2903
        %5082 = vmatmul.mubr.bf16.gmra.mrb[0].mxu0 %v2902
        %v5083 = vpop.f32.mrb[0].mxu0
        %v5084 = vadd.f32 %v4731, %v5083
        %v5085 = vpop.f32.mrb[0].mxu0
        %v5086 = vadd.f32 %v4733, %v5085
        %v5087 = vpop.f32.mrb[0].mxu0
        %v5088 = vadd.f32 %v4735, %v5087
        %v5089 = vpop.f32.mrb[0].mxu0
        %v5090 = vadd.f32 %v4737, %v5089
        %5091 = vmatprep.mubr.bf16.mxu0 %v2911
        %5092 = vmatmul.mubr.bf16.gmra.mrb[0].mxu0 %v2910
        %v5093 = vpop.f32.mrb[0].mxu0
        %v5094 = vadd.f32 %v4741, %v5093
        %v5095 = vpop.f32.mrb[0].mxu0
        %v5096 = vadd.f32 %v4743, %v5095
        %v5097 = vpop.f32.mrb[0].mxu0
        %v5098 = vadd.f32 %v4745, %v5097
        %v5099 = vpop.f32.mrb[0].mxu0
        %v5100 = vadd.f32 %v4747, %v5099
        %5101 = vmatprep.mubr.bf16.mxu0 %v2919
        %5102 = vmatmul.mubr.bf16.gmra.mrb[0].mxu0 %v2918
        %v5103 = vpop.f32.mrb[0].mxu0
        %v5104 = vadd.f32 %v4751, %v5103
        %v5105 = vpop.f32.mrb[0].mxu0
        %v5106 = vadd.f32 %v4753, %v5105
        %v5107 = vpop.f32.mrb[0].mxu0
        %v5108 = vadd.f32 %v4755, %v5107
        %v5109 = vpop.f32.mrb[0].mxu0
        %v5110 = vadd.f32 %v4757, %v5109
        %5111 = vdwg.mxu0
        %v5112 = vmax.f32 %v4794, 0.0
        %v5113 = vmax.f32 %v4796, 0.0
        %v5114 = vmax.f32 %v4798, 0.0
        %v5115 = vmax.f32 %v4800, 0.0
        %v5116 = vmax.f32 %v4804, 0.0
        %v5117 = vmax.f32 %v4806, 0.0
        %v5118 = vmax.f32 %v4808, 0.0
        %v5119 = vmax.f32 %v4810, 0.0
        %v5120 = vmax.f32 %v4814, 0.0
        %v5121 = vmax.f32 %v4816, 0.0
        %v5122 = vmax.f32 %v4818, 0.0
        %v5123 = vmax.f32 %v4820, 0.0
        %v5124 = vmax.f32 %v4824, 0.0
        %v5125 = vmax.f32 %v4826, 0.0
        %v5126 = vmax.f32 %v4828, 0.0
        %v5127 = vmax.f32 %v4830, 0.0
        %v5128 = vmax.f32 %v4834, 0.0
        %v5129 = vmax.f32 %v4836, 0.0
        %v5130 = vmax.f32 %v4838, 0.0
        %v5131 = vmax.f32 %v4840, 0.0
        %v5132 = vmax.f32 %v4844, 0.0
        %v5133 = vmax.f32 %v4846, 0.0
        %v5134 = vmax.f32 %v4848, 0.0
        %v5135 = vmax.f32 %v4850, 0.0
        %v5136 = vmax.f32 %v4854, 0.0
        %v5137 = vmax.f32 %v4856, 0.0
        %v5138 = vmax.f32 %v4858, 0.0
        %v5139 = vmax.f32 %v4860, 0.0
        %v5140 = vmax.f32 %v4864, 0.0
        %v5141 = vmax.f32 %v4866, 0.0
        %v5142 = vmax.f32 %v4868, 0.0
        %v5143 = vmax.f32 %v4870, 0.0
        %v5144 = vmax.f32 %v4874, 0.0
        %v5145 = vmax.f32 %v4876, 0.0
        %v5146 = vmax.f32 %v4878, 0.0
        %v5147 = vmax.f32 %v4880, 0.0
        %v5148 = vmax.f32 %v4884, 0.0
        %v5149 = vmax.f32 %v4886, 0.0
        %v5150 = vmax.f32 %v4888, 0.0
        %v5151 = vmax.f32 %v4890, 0.0
        %v5152 = vmax.f32 %v4894, 0.0
        %v5153 = vmax.f32 %v4896, 0.0
        %v5154 = vmax.f32 %v4898, 0.0
        %v5155 = vmax.f32 %v4900, 0.0
        %v5156 = vmax.f32 %v4904, 0.0
        %v5157 = vmax.f32 %v4906, 0.0
        %v5158 = vmax.f32 %v4908, 0.0
        %v5159 = vmax.f32 %v4910, 0.0
        %v5160 = vmax.f32 %v4914, 0.0
        %v5161 = vmax.f32 %v4916, 0.0
        %v5162 = vmax.f32 %v4918, 0.0
        %v5163 = vmax.f32 %v4920, 0.0
        %v5164 = vmax.f32 %v4924, 0.0
        %v5165 = vmax.f32 %v4926, 0.0
        %v5166 = vmax.f32 %v4928, 0.0
        %v5167 = vmax.f32 %v4930, 0.0
        %v5168 = vmax.f32 %v4934, 0.0
        %v5169 = vmax.f32 %v4936, 0.0
        %v5170 = vmax.f32 %v4938, 0.0
        %v5171 = vmax.f32 %v4940, 0.0
        %v5172 = vmax.f32 %v4944, 0.0
        %v5173 = vmax.f32 %v4946, 0.0
        %v5174 = vmax.f32 %v4948, 0.0
        %v5175 = vmax.f32 %v4950, 0.0
        %v5176 = vmax.f32 %v4954, 0.0
        %v5177 = vmax.f32 %v4956, 0.0
        %v5178 = vmax.f32 %v4958, 0.0
        %v5179 = vmax.f32 %v4960, 0.0
        %v5180 = vmax.f32 %v4964, 0.0
        %v5181 = vmax.f32 %v4966, 0.0
        %v5182 = vmax.f32 %v4968, 0.0
        %v5183 = vmax.f32 %v4970, 0.0
        %v5184 = vmax.f32 %v4974, 0.0
        %v5185 = vmax.f32 %v4976, 0.0
        %v5186 = vmax.f32 %v4978, 0.0
        %v5187 = vmax.f32 %v4980, 0.0
        %v5188 = vmax.f32 %v4984, 0.0
        %v5189 = vmax.f32 %v4986, 0.0
        %v5190 = vmax.f32 %v4988, 0.0
        %v5191 = vmax.f32 %v4990, 0.0
        %v5192 = vmax.f32 %v4994, 0.0
        %v5193 = vmax.f32 %v4996, 0.0
        %v5194 = vmax.f32 %v4998, 0.0
        %v5195 = vmax.f32 %v5000, 0.0
        %v5196 = vmax.f32 %v5004, 0.0
        %v5197 = vmax.f32 %v5006, 0.0
        %v5198 = vmax.f32 %v5008, 0.0
        %v5199 = vmax.f32 %v5010, 0.0
        %v5200 = vmax.f32 %v5014, 0.0
        %v5201 = vmax.f32 %v5016, 0.0
        %v5202 = vmax.f32 %v5018, 0.0
        %v5203 = vmax.f32 %v5020, 0.0
        %v5204 = vmax.f32 %v5024, 0.0
        %v5205 = vmax.f32 %v5026, 0.0
        %v5206 = vmax.f32 %v5028, 0.0
        %v5207 = vmax.f32 %v5030, 0.0
        %v5208 = vmax.f32 %v5034, 0.0
        %v5209 = vmax.f32 %v5036, 0.0
        %v5210 = vmax.f32 %v5038, 0.0
        %v5211 = vmax.f32 %v5040, 0.0
        %v5212 = vmax.f32 %v5044, 0.0
        %v5213 = vmax.f32 %v5046, 0.0
        %v5214 = vmax.f32 %v5048, 0.0
        %v5215 = vmax.f32 %v5050, 0.0
        %v5216 = vmax.f32 %v5054, 0.0
        %v5217 = vmax.f32 %v5056, 0.0
        %v5218 = vmax.f32 %v5058, 0.0
        %v5219 = vmax.f32 %v5060, 0.0
        %v5220 = vmax.f32 %v5064, 0.0
        %v5221 = vmax.f32 %v5066, 0.0
        %v5222 = vmax.f32 %v5068, 0.0
        %v5223 = vmax.f32 %v5070, 0.0
        %v5224 = vmax.f32 %v5074, 0.0
        %v5225 = vmax.f32 %v5076, 0.0
        %v5226 = vmax.f32 %v5078, 0.0
        %v5227 = vmax.f32 %v5080, 0.0
        %v5228 = vmax.f32 %v5084, 0.0
        %v5229 = vmax.f32 %v5086, 0.0
        %v5230 = vmax.f32 %v5088, 0.0
        %v5231 = vmax.f32 %v5090, 0.0
        %v5232 = vmax.f32 %v5094, 0.0
        %v5233 = vmax.f32 %v5096, 0.0
        %v5234 = vmax.f32 %v5098, 0.0
        %v5235 = vmax.f32 %v5100, 0.0
        %v5236 = vmax.f32 %v5104, 0.0
        %v5237 = vmax.f32 %v5106, 0.0
        %v5238 = vmax.f32 %v5108, 0.0
        %v5239 = vmax.f32 %v5110, 0.0
        %v5240 = vmax.f32 %v5112, %v5116
        %v5241 = vmax.f32 %v5114, %v5118
        %v5242 = vmax.f32 %v5240, %v5120
        %v5243 = vmax.f32 %v5241, %v5122
        %v5244 = vmax.f32 %v5242, %v5124
        %v5245 = vmax.f32 %v5243, %v5126
        %v5246 = vmax.f32 %v5244, %v5128
        %v5247 = vmax.f32 %v5245, %v5130
        %v5248 = vmax.f32 %v5246, %v5132
        %v5249 = vmax.f32 %v5247, %v5134
        %v5250 = vmax.f32 %v5248, %v5136
        %v5251 = vmax.f32 %v5249, %v5138
        %v5252 = vmax.f32 %v5250, %v5140
        %v5253 = vmax.f32 %v5251, %v5142
        %v5254 = vmax.f32 %v5252, %v5144
        %v5255 = vmax.f32 %v5253, %v5146
        %v5256 = vmax.f32 %v5254, %v5148
        %v5257 = vmax.f32 %v5255, %v5150
        %v5258 = vmax.f32 %v5256, %v5152
        %v5259 = vmax.f32 %v5257, %v5154
        %v5260 = vmax.f32 %v5258, %v5156
        %v5261 = vmax.f32 %v5259, %v5158
        %v5262 = vmax.f32 %v5260, %v5160
        %v5263 = vmax.f32 %v5261, %v5162
        %v5264 = vmax.f32 %v5262, %v5164
        %v5265 = vmax.f32 %v5263, %v5166
        %v5266 = vmax.f32 %v5264, %v5168
        %v5267 = vmax.f32 %v5265, %v5170
        %v5268 = vmax.f32 %v5266, %v5172
        %v5269 = vmax.f32 %v5267, %v5174
        %v5270 = vmax.f32 %v5268, %v5176
        %v5271 = vmax.f32 %v5269, %v5178
        %v5272 = vmax.f32 %v5270, %v5180
        %v5273 = vmax.f32 %v5271, %v5182
        %v5274 = vmax.f32 %v5272, %v5184
        %v5275 = vmax.f32 %v5273, %v5186
        %v5276 = vmax.f32 %v5274, %v5188
        %v5277 = vmax.f32 %v5275, %v5190
        %v5278 = vmax.f32 %v5276, %v5192
        %v5279 = vmax.f32 %v5277, %v5194
        %v5280 = vmax.f32 %v5278, %v5196
        %v5281 = vmax.f32 %v5279, %v5198
        %v5282 = vmax.f32 %v5280, %v5200
        %v5283 = vmax.f32 %v5281, %v5202
        %v5284 = vmax.f32 %v5282, %v5204
        %v5285 = vmax.f32 %v5283, %v5206
        %v5286 = vmax.f32 %v5284, %v5208
        %v5287 = vmax.f32 %v5285, %v5210
        %v5288 = vmax.f32 %v5286, %v5212
        %v5289 = vmax.f32 %v5287, %v5214
        %v5290 = vmax.f32 %v5288, %v5216
        %v5291 = vmax.f32 %v5289, %v5218
        %v5292 = vmax.f32 %v5290, %v5220
        %v5293 = vmax.f32 %v5291, %v5222
        %v5294 = vmax.f32 %v5292, %v5224
        %v5295 = vmax.f32 %v5293, %v5226
        %v5296 = vmax.f32 %v5294, %v5228
        %v5297 = vmax.f32 %v5295, %v5230
        %v5298 = vmax.f32 %v5296, %v5232
        %v5299 = vmax.f32 %v5297, %v5234
        %v5300 = vmax.f32 %v5298, %v5236
        %v5301 = vmax.f32 %v5299, %v5238
        %v5302 = vmax.f32 %v5300, %v5301
        %v5303 = vmax.f32 %v5113, %v5117
        %v5304 = vmax.f32 %v5115, %v5119
        %v5305 = vmax.f32 %v5303, %v5121
        %v5306 = vmax.f32 %v5304, %v5123
        %v5307 = vmax.f32 %v5305, %v5125
        %v5308 = vmax.f32 %v5306, %v5127
        %v5309 = vmax.f32 %v5307, %v5129
        %v5310 = vmax.f32 %v5308, %v5131
        %v5311 = vmax.f32 %v5309, %v5133
        %v5312 = vmax.f32 %v5310, %v5135
        %v5313 = vmax.f32 %v5311, %v5137
        %v5314 = vmax.f32 %v5312, %v5139
        %v5315 = vmax.f32 %v5313, %v5141
        %v5316 = vmax.f32 %v5314, %v5143
        %v5317 = vmax.f32 %v5315, %v5145
        %v5318 = vmax.f32 %v5316, %v5147
        %v5319 = vmax.f32 %v5317, %v5149
        %v5320 = vmax.f32 %v5318, %v5151
        %v5321 = vmax.f32 %v5319, %v5153
        %v5322 = vmax.f32 %v5320, %v5155
        %v5323 = vmax.f32 %v5321, %v5157
        %v5324 = vmax.f32 %v5322, %v5159
        %v5325 = vmax.f32 %v5323, %v5161
        %v5326 = vmax.f32 %v5324, %v5163
        %v5327 = vmax.f32 %v5325, %v5165
        %v5328 = vmax.f32 %v5326, %v5167
        %v5329 = vmax.f32 %v5327, %v5169
        %v5330 = vmax.f32 %v5328, %v5171
        %v5331 = vmax.f32 %v5329, %v5173
        %v5332 = vmax.f32 %v5330, %v5175
        %v5333 = vmax.f32 %v5331, %v5177
        %v5334 = vmax.f32 %v5332, %v5179
        %v5335 = vmax.f32 %v5333, %v5181
        %v5336 = vmax.f32 %v5334, %v5183
        %v5337 = vmax.f32 %v5335, %v5185
        %v5338 = vmax.f32 %v5336, %v5187
        %v5339 = vmax.f32 %v5337, %v5189
        %v5340 = vmax.f32 %v5338, %v5191
        %v5341 = vmax.f32 %v5339, %v5193
        %v5342 = vmax.f32 %v5340, %v5195
        %v5343 = vmax.f32 %v5341, %v5197
        %v5344 = vmax.f32 %v5342, %v5199
        %v5345 = vmax.f32 %v5343, %v5201
        %v5346 = vmax.f32 %v5344, %v5203
        %v5347 = vmax.f32 %v5345, %v5205
        %v5348 = vmax.f32 %v5346, %v5207
        %v5349 = vmax.f32 %v5347, %v5209
        %v5350 = vmax.f32 %v5348, %v5211
        %v5351 = vmax.f32 %v5349, %v5213
        %v5352 = vmax.f32 %v5350, %v5215
        %v5353 = vmax.f32 %v5351, %v5217
        %v5354 = vmax.f32 %v5352, %v5219
        %v5355 = vmax.f32 %v5353, %v5221
        %v5356 = vmax.f32 %v5354, %v5223
        %v5357 = vmax.f32 %v5355, %v5225
        %v5358 = vmax.f32 %v5356, %v5227
        %v5359 = vmax.f32 %v5357, %v5229
        %v5360 = vmax.f32 %v5358, %v5231
        %v5361 = vmax.f32 %v5359, %v5233
        %v5362 = vmax.f32 %v5360, %v5235
        %v5363 = vmax.f32 %v5361, %v5237
        %v5364 = vmax.f32 %v5362, %v5239
        %v5365 = vmax.f32 %v5363, %v5364
        %v5366 = vld [vmem:[#allocation2] sm:$0xff]
        %v5367 = vld [vmem:[#allocation2 + $0x8] sm:$0xff]
        %v5368 = vmax.f32 %v5366, %v5302
        %v5369 = vmax.f32 %v5367, %v5365
        %5370 = vst [vmem:[#allocation2] sm:$0xff] %v5368
        %5371 = vst [vmem:[#allocation2 + $0x8] sm:$0xff] %v5369
        // Predicated region
        $region65: #{tpu_custom_call.1} parent=51 // pred_check
          %p5372 = pneg %p362
        $region66: #{tpu_custom_call.1} parent=51 // pred_check_branch
          %5374 = sbr.rel (%p5372) target = $region68
        $region67: #{tpu_custom_call.1} parent=51 // pred_region
          %v5375 = vld [vmem:[#allocation2] sm:$0xff]
          %v5376 = vld [vmem:[#allocation2 + $0x8] sm:$0xff]
          %v5377 = vrot.slane %v5375, 4
          %v5378 = vmax.f32 %v5375, %v5377
          %v5379 = vrot.slane %v5378, 2
          %v5380 = vmax.f32 %v5378, %v5379
          %v5381 = vrot.slane %v5380, 1
          %v5382 = vmax.f32 %v5380, %v5381
          %v5383 = vrot.slane %v5376, 4
          %v5384 = vmax.f32 %v5376, %v5383
          %v5385 = vrot.slane %v5384, 2
          %v5386 = vmax.f32 %v5384, %v5385
          %v5387 = vrot.slane %v5386, 1
          %v5388 = vmax.f32 %v5386, %v5387
          %v5389 = vld [vmem:[%s4] sm:$0xff]
          %v5390 = vld [vmem:[%s4 + $0x8] sm:$0xff]
          %v5391 = vld [vmem:[%s4 + $0x10] sm:$0xff]
          %v5392 = vld [vmem:[%s4 + $0x18] sm:$0xff]
          %v5393 = vld [vmem:[%s4 + $0x20] sm:$0xff]
          %v5394 = vld [vmem:[%s4 + $0x28] sm:$0xff]
          %v5395 = vld [vmem:[%s4 + $0x30] sm:$0xff]
          %v5396 = vld [vmem:[%s4 + $0x38] sm:$0xff]
          %v5397 = vld [vmem:[%s4 + $0x40] sm:$0xff]
          %v5398 = vld [vmem:[%s4 + $0x48] sm:$0xff]
          %v5399 = vld [vmem:[%s4 + $0x50] sm:$0xff]
          %v5400 = vld [vmem:[%s4 + $0x58] sm:$0xff]
          %v5401 = vld [vmem:[%s4 + $0x60] sm:$0xff]
          %v5402 = vld [vmem:[%s4 + $0x68] sm:$0xff]
          %v5403 = vld [vmem:[%s4 + $0x70] sm:$0xff]
          %v5404 = vld [vmem:[%s4 + $0x78] sm:$0xff]
          %v5405 = vld [vmem:[%s4 + $0x80] sm:$0xff]
          %v5406 = vld [vmem:[%s4 + $0x88] sm:$0xff]
          %v5407 = vld [vmem:[%s4 + $0x90] sm:$0xff]
          %v5408 = vld [vmem:[%s4 + $0x98] sm:$0xff]
          %v5409 = vld [vmem:[%s4 + $0xa0] sm:$0xff]
          %v5410 = vld [vmem:[%s4 + $0xa8] sm:$0xff]
          %v5411 = vld [vmem:[%s4 + $0xb0] sm:$0xff]
          %v5412 = vld [vmem:[%s4 + $0xb8] sm:$0xff]
          %v5413 = vld [vmem:[%s4 + $0xc0] sm:$0xff]
          %v5414 = vld [vmem:[%s4 + $0xc8] sm:$0xff]
          %v5415 = vld [vmem:[%s4 + $0xd0] sm:$0xff]
          %v5416 = vld [vmem:[%s4 + $0xd8] sm:$0xff]
          %v5417 = vld [vmem:[%s4 + $0xe0] sm:$0xff]
          %v5418 = vld [vmem:[%s4 + $0xe8] sm:$0xff]
          %v5419 = vld [vmem:[%s4 + $0xf0] sm:$0xff]
          %v5420 = vld [vmem:[%s4 + $0xf8] sm:$0xff]
          %v5421 = vld [vmem:[%s4 + $0x100] sm:$0xff]
          %v5422 = vld [vmem:[%s4 + $0x108] sm:$0xff]
          %v5423 = vld [vmem:[%s4 + $0x110] sm:$0xff]
          %v5424 = vld [vmem:[%s4 + $0x118] sm:$0xff]
          %v5425 = vld [vmem:[%s4 + $0x120] sm:$0xff]
          %v5426 = vld [vmem:[%s4 + $0x128] sm:$0xff]
          %v5427 = vld [vmem:[%s4 + $0x130] sm:$0xff]
          %v5428 = vld [vmem:[%s4 + $0x138] sm:$0xff]
          %v5429 = vld [vmem:[%s4 + $0x140] sm:$0xff]
          %v5430 = vld [vmem:[%s4 + $0x148] sm:$0xff]
          %v5431 = vld [vmem:[%s4 + $0x150] sm:$0xff]
          %v5432 = vld [vmem:[%s4 + $0x158] sm:$0xff]
          %v5433 = vld [vmem:[%s4 + $0x160] sm:$0xff]
          %v5434 = vld [vmem:[%s4 + $0x168] sm:$0xff]
          %v5435 = vld [vmem:[%s4 + $0x170] sm:$0xff]
          %v5436 = vld [vmem:[%s4 + $0x178] sm:$0xff]
          %v5437 = vld [vmem:[%s4 + $0x180] sm:$0xff]
          %v5438 = vld [vmem:[%s4 + $0x188] sm:$0xff]
          %v5439 = vld [vmem:[%s4 + $0x190] sm:$0xff]
          %v5440 = vld [vmem:[%s4 + $0x198] sm:$0xff]
          %v5441 = vld [vmem:[%s4 + $0x1a0] sm:$0xff]
          %v5442 = vld [vmem:[%s4 + $0x1a8] sm:$0xff]
          %v5443 = vld [vmem:[%s4 + $0x1b0] sm:$0xff]
          %v5444 = vld [vmem:[%s4 + $0x1b8] sm:$0xff]
          %v5445 = vld [vmem:[%s4 + $0x1c0] sm:$0xff]
          %v5446 = vld [vmem:[%s4 + $0x1c8] sm:$0xff]
          %v5447 = vld [vmem:[%s4 + $0x1d0] sm:$0xff]
          %v5448 = vld [vmem:[%s4 + $0x1d8] sm:$0xff]
          %v5449 = vld [vmem:[%s4 + $0x1e0] sm:$0xff]
          %v5450 = vld [vmem:[%s4 + $0x1e8] sm:$0xff]
          %v5451 = vld [vmem:[%s4 + $0x1f0] sm:$0xff]
          %v5452 = vld [vmem:[%s4 + $0x1f8] sm:$0xff]
          %v5453 = vld [vmem:[%s5] sm:$0x3]
          %v5455 = vlaneseq
          %v5456 = vshrl.u32 %v5455, 7
          %v5457 = vsub.s32 0, %v5456
          %v5458 = vrot.slane %v5453, %v5457
          %v5459 = vlaneseq
          %v5460 = vshrl.u32 %v5459, 7
          %v5461 = vsub.s32 1, %v5460
          %v5462 = vrot.slane %v5453, %v5461
          %5465 = vmatprep.subr.mxu0 %v5390
          %5466 = vmatpush1.msra.mxu0 %v5389
          %5467 = vmatprep.subr.mxu0 %v5392
          %5468 = vmatpush1.msra.mxu0 %v5391
          %5469 = vmatprep.subr.mxu0 %v5394
          %5470 = vmatpush1.msra.mxu0 %v5393
          %5471 = vmatprep.subr.mxu0 %v5396
          %5472 = vmatpush1.msra.mxu0 %v5395
          %5473 = vmatprep.subr.mxu0 %v5398
          %5474 = vmatpush1.msra.mxu0 %v5397
          %5475 = vmatprep.subr.mxu0 %v5400
          %5476 = vmatpush1.msra.mxu0 %v5399
          %5477 = vmatprep.subr.mxu0 %v5402
          %5478 = vmatpush1.msra.mxu0 %v5401
          %5479 = vmatprep.subr.mxu0 %v5404
          %5480 = vmatpush1.msra.mxu0 %v5403
          %5481 = vmatprep.subr.mxu0 %v5406
          %5482 = vmatpush1.msra.mxu0 %v5405
          %5483 = vmatprep.subr.mxu0 %v5408
          %5484 = vmatpush1.msra.mxu0 %v5407
          %5485 = vmatprep.subr.mxu0 %v5410
          %5486 = vmatpush1.msra.mxu0 %v5409
          %5487 = vmatprep.subr.mxu0 %v5412
          %5488 = vmatpush1.msra.mxu0 %v5411
          %5489 = vmatprep.subr.mxu0 %v5414
          %5490 = vmatpush1.msra.mxu0 %v5413
          %5491 = vmatprep.subr.mxu0 %v5416
          %5492 = vmatpush1.msra.mxu0 %v5415
          %5493 = vmatprep.subr.mxu0 %v5418
          %5494 = vmatpush1.msra.mxu0 %v5417
          %5495 = vmatprep.subr.mxu0 %v5420
          %5496 = vmatpush1.msra.mxu0 %v5419
          %5497 = vmatprep.subr.mxu0 %v5422
          %5498 = vmatpush1.msra.mxu0 %v5421
          %5499 = vmatprep.subr.mxu0 %v5424
          %5500 = vmatpush1.msra.mxu0 %v5423
          %5501 = vmatprep.subr.mxu0 %v5426
          %5502 = vmatpush1.msra.mxu0 %v5425
          %5503 = vmatprep.subr.mxu0 %v5428
          %5504 = vmatpush1.msra.mxu0 %v5427
          %5505 = vmatprep.subr.mxu0 %v5430
          %5506 = vmatpush1.msra.mxu0 %v5429
          %5507 = vmatprep.subr.mxu0 %v5432
          %5508 = vmatpush1.msra.mxu0 %v5431
          %5509 = vmatprep.subr.mxu0 %v5434
          %5510 = vmatpush1.msra.mxu0 %v5433
          %5511 = vmatprep.subr.mxu0 %v5436
          %5512 = vmatpush1.msra.mxu0 %v5435
          %5513 = vmatprep.subr.mxu0 %v5438
          %5514 = vmatpush1.msra.mxu0 %v5437
          %5515 = vmatprep.subr.mxu0 %v5440
          %5516 = vmatpush1.msra.mxu0 %v5439
          %5517 = vmatprep.subr.mxu0 %v5442
          %5518 = vmatpush1.msra.mxu0 %v5441
          %5519 = vmatprep.subr.mxu0 %v5444
          %5520 = vmatpush1.msra.mxu0 %v5443
          %5521 = vmatprep.subr.mxu0 %v5446
          %5522 = vmatpush1.msra.mxu0 %v5445
          %5523 = vmatprep.subr.mxu0 %v5448
          %5524 = vmatpush1.msra.mxu0 %v5447
          %5525 = vmatprep.subr.mxu0 %v5450
          %5526 = vmatpush1.msra.mxu0 %v5449
          %5527 = vmatprep.subr.mxu0 %v5452
          %5528 = vmatpush1.msra.mxu0 %v5451
          %5529 = vmatprep.mubr.f32.mxu0 %v5388
          %5530 = vmatmul.mubr.f32.gmra.mrb[0].mxu0 %v5382
          %v5531 = vpop.f32.mrb[0].mxu0
          %v5532 = vadd.f32 %v5458, %v5531
          %v5533 = vpop.f32.mrb[0].mxu0
          %v5534 = vadd.f32 %v5462, %v5533
          %5535 = vdwg.mxu0
          %v5536 = vmax.f32 %v5532, 0.0
          %v5537 = vmax.f32 %v5534, 0.0
          %v5538 = vld [vmem:[%s6] sm:$0xff]
          %v5539 = vld [vmem:[%s6 + $0x8] sm:$0xff]
          %v5540 = vld [vmem:[%s6 + $0x10] sm:$0xff]
          %v5541 = vld [vmem:[%s6 + $0x18] sm:$0xff]
          %v5542 = vld [vmem:[%s6 + $0x20] sm:$0xff]
          %v5543 = vld [vmem:[%s6 + $0x28] sm:$0xff]
          %v5544 = vld [vmem:[%s6 + $0x30] sm:$0xff]
          %v5545 = vld [vmem:[%s6 + $0x38] sm:$0xff]
          %v5546 = vld [vmem:[%s6 + $0x40] sm:$0xff]
          %v5547 = vld [vmem:[%s6 + $0x48] sm:$0xff]
          %v5548 = vld [vmem:[%s6 + $0x50] sm:$0xff]
          %v5549 = vld [vmem:[%s6 + $0x58] sm:$0xff]
          %v5550 = vld [vmem:[%s6 + $0x60] sm:$0xff]
          %v5551 = vld [vmem:[%s6 + $0x68] sm:$0xff]
          %v5552 = vld [vmem:[%s6 + $0x70] sm:$0xff]
          %v5553 = vld [vmem:[%s6 + $0x78] sm:$0xff]
          %v5554 = vld [vmem:[%s6 + $0x80] sm:$0xff]
          %v5555 = vld [vmem:[%s6 + $0x88] sm:$0xff]
          %v5556 = vld [vmem:[%s6 + $0x90] sm:$0xff]
          %v5557 = vld [vmem:[%s6 + $0x98] sm:$0xff]
          %v5558 = vld [vmem:[%s6 + $0xa0] sm:$0xff]
          %v5559 = vld [vmem:[%s6 + $0xa8] sm:$0xff]
          %v5560 = vld [vmem:[%s6 + $0xb0] sm:$0xff]
          %v5561 = vld [vmem:[%s6 + $0xb8] sm:$0xff]
          %v5562 = vld [vmem:[%s6 + $0xc0] sm:$0xff]
          %v5563 = vld [vmem:[%s6 + $0xc8] sm:$0xff]
          %v5564 = vld [vmem:[%s6 + $0xd0] sm:$0xff]
          %v5565 = vld [vmem:[%s6 + $0xd8] sm:$0xff]
          %v5566 = vld [vmem:[%s6 + $0xe0] sm:$0xff]
          %v5567 = vld [vmem:[%s6 + $0xe8] sm:$0xff]
          %v5568 = vld [vmem:[%s6 + $0xf0] sm:$0xff]
          %v5569 = vld [vmem:[%s6 + $0xf8] sm:$0xff]
          %v5570 = vld [vmem:[%s7] sm:$0x1]
          %5571 = vmatprep.subr.mxu0 0.0
          %5572 = vmatpush1.msra.mxu0 %v5538
          %5573 = vmatprep.subr.mxu0 0.0
          %5574 = vmatpush1.msra.mxu0 %v5539
          %5575 = vmatprep.subr.mxu0 0.0
          %5576 = vmatpush1.msra.mxu0 %v5540
          %5577 = vmatprep.subr.mxu0 0.0
          %5578 = vmatpush1.msra.mxu0 %v5541
          %5579 = vmatprep.subr.mxu0 0.0
          %5580 = vmatpush1.msra.mxu0 %v5542
          %5581 = vmatprep.subr.mxu0 0.0
          %5582 = vmatpush1.msra.mxu0 %v5543
          %5583 = vmatprep.subr.mxu0 0.0
          %5584 = vmatpush1.msra.mxu0 %v5544
          %5585 = vmatprep.subr.mxu0 0.0
          %5586 = vmatpush1.msra.mxu0 %v5545
          %5587 = vmatprep.subr.mxu0 0.0
          %5588 = vmatpush1.msra.mxu0 %v5546
          %5589 = vmatprep.subr.mxu0 0.0
          %5590 = vmatpush1.msra.mxu0 %v5547
          %5591 = vmatprep.subr.mxu0 0.0
          %5592 = vmatpush1.msra.mxu0 %v5548
          %5593 = vmatprep.subr.mxu0 0.0
          %5594 = vmatpush1.msra.mxu0 %v5549
          %5595 = vmatprep.subr.mxu0 0.0
          %5596 = vmatpush1.msra.mxu0 %v5550
          %5597 = vmatprep.subr.mxu0 0.0
          %5598 = vmatpush1.msra.mxu0 %v5551
          %5599 = vmatprep.subr.mxu0 0.0
          %5600 = vmatpush1.msra.mxu0 %v5552
          %5601 = vmatprep.subr.mxu0 0.0
          %5602 = vmatpush1.msra.mxu0 %v5553
          %5603 = vmatprep.subr.mxu0 0.0
          %5604 = vmatpush1.msra.mxu0 %v5554
          %5605 = vmatprep.subr.mxu0 0.0
          %5606 = vmatpush1.msra.mxu0 %v5555
          %5607 = vmatprep.subr.mxu0 0.0
          %5608 = vmatpush1.msra.mxu0 %v5556
          %5609 = vmatprep.subr.mxu0 0.0
          %5610 = vmatpush1.msra.mxu0 %v5557
          %5611 = vmatprep.subr.mxu0 0.0
          %5612 = vmatpush1.msra.mxu0 %v5558
          %5613 = vmatprep.subr.mxu0 0.0
          %5614 = vmatpush1.msra.mxu0 %v5559
          %5615 = vmatprep.subr.mxu0 0.0
          %5616 = vmatpush1.msra.mxu0 %v5560
          %5617 = vmatprep.subr.mxu0 0.0
          %5618 = vmatpush1.msra.mxu0 %v5561
          %5619 = vmatprep.subr.mxu0 0.0
          %5620 = vmatpush1.msra.mxu0 %v5562
          %5621 = vmatprep.subr.mxu0 0.0
          %5622 = vmatpush1.msra.mxu0 %v5563
          %5623 = vmatprep.subr.mxu0 0.0
          %5624 = vmatpush1.msra.mxu0 %v5564
          %5625 = vmatprep.subr.mxu0 0.0
          %5626 = vmatpush1.msra.mxu0 %v5565
          %5627 = vmatprep.subr.mxu0 0.0
          %5628 = vmatpush1.msra.mxu0 %v5566
          %5629 = vmatprep.subr.mxu0 0.0
          %5630 = vmatpush1.msra.mxu0 %v5567
          %5631 = vmatprep.subr.mxu0 0.0
          %5632 = vmatpush1.msra.mxu0 %v5568
          %5633 = vmatprep.subr.mxu0 0.0
          %5634 = vmatpush1.msra.mxu0 %v5569
          %5635 = vmatprep.mubr.f32.mxu0 %v5537
          %5636 = vmatmul.mubr.f32.gmra.mrb[0].mxu0 %v5536
          %v5637 = vpop.f32.mrb[0].mxu0
          %v5638 = vadd.f32 %v5570, %v5637
          %v5639 = vpop.f32.mrb[0].mxu0
          %5640 = vdwg.mxu0
          %vm5641 = vcmask 16384
          %5642 = vst.msk [vmem:[%s350] sm:$0x1] %vm5641, %v5638
        $region68: #{tpu_custom_call.1} parent=51 // pred_fallthru
          _
        %s5643 = sand.u32 %s219, 1
        %s5644 = scalar_lea.sflag [#allocation5], %s5643
        %s5645 = sand.u32 %s219, 1
        %s5646 = scalar_lea.vmem [#allocation8], %s5645
        // Predicated region
        $region69: #{tpu_custom_call.1} parent=51 // pred_check
          %p5647 = pneg %p229
        $region70: #{tpu_custom_call.1} parent=51 // pred_check_branch
          %5649 = sbr.rel (%p5647) target = $region72
        $region71: #{tpu_custom_call.1} parent=51 // pred_region
          %s5651 = ssub.s32 16, 16
          %5652 = vsyncadd %s5644, %s5651
          %s5653 = smul.addr %s28, 16
          %s5654 = scalar_lea.hbm %s8, %s5653
          %s5656 = sshll.u32 %s5646, 4
          %s5657 = int_to_ptr.vmem [resolvable:$true] %s5656
          %5659 = dma.vmem_to_hbm [thread:$0]  %s5657, 16, %s5654, %s5644
        $region72: #{tpu_custom_call.1} parent=51 // pred_fallthru
          _
      $region52: #{tpu_custom_call.1} parent=5 // pred_fallthru
        _
      %p5660 = scmp.le.s32.totalorder 2, %s19
      // Predicated region
      $region73: #{tpu_custom_call.1} parent=5 // pred_check
        %p5661 = pneg %p5660
      $region74: #{tpu_custom_call.1} parent=5 // pred_check_branch
        %5663 = sbr.rel (%p5661) target = $region76
      $region75: #{tpu_custom_call.1} parent=5 // pred_region
        %s5664 = ssub.s32 %s19, 2
        // Predicated region
        $region77: #{tpu_custom_call.1} parent=75 // pred_check
          %p5665 = pneg %p235
        $region78: #{tpu_custom_call.1} parent=75 // pred_check_branch
          %5667 = sbr.rel (%p5665) target = $region80
        $region79: #{tpu_custom_call.1} parent=75 // pred_region
          %s5668 = sand.u32 %s220, 1
          %s5669 = scalar_lea.sflag [#allocation5], %s5668
          %s5670 = sand.u32 %s220, 1
          %s5671 = scalar_lea.vmem [#allocation8], %s5670
          %5672 = dma.done %s5669, 16
        $region80: #{tpu_custom_call.1} parent=75 // pred_fallthru
          _
      $region76: #{tpu_custom_call.1} parent=5 // pred_fallthru
        _
    $region6: #{tpu_custom_call.1} parent=1 // loop_footer
      %s23 = sadd.s32 1, %s19
    $region7: #{tpu_custom_call.1} parent=1 // loop_footer_branch
      %18 = sbr.rel target = $region3
    $region8: #{tpu_custom_call.1} parent=1 // loop_exit
      _
    %5673 = vsyncpa [#allocation4], 1
    %s5674 = scalar_lea.sflag [#allocation4], 1
    %5675 = vsyncpa %s5674, 1
    %5676 = vsyncpa [#allocation7], 1
    %5677 = vsyncpa [#allocation5], 1
    %s5678 = scalar_lea.sflag [#allocation5], 1
    %5679 = vsyncpa %s5678, 1

</llo_original>
